<compile_context>
chip_gen: v6e
topology: v6e:2x2x1
jax: 0.10.0
libtpu: 0.0.40
codegen_flags: <defaults>
</compile_context>

<pallas_src>
import math

import jax
import jax.numpy as jnp
from jax.experimental import pallas as pl
from jax.experimental.pallas import tpu as pltpu


# Set to jnp.bfloat16 on v6e/v7x for large hidden sizes (MXU is bf16-native
# there); keep f32 on v5e and for bit-tight comparisons.  Accumulation and all
# elementwise gate math stay f32 either way.
MATMUL_DTYPE = jnp.float32


def _round_up(n, m):
    return ((n + m - 1) // m) * m


# ----------------------------------------------------------------------------
# Fused kernel: input projection + staging + bidirectional GRU recurrence.
#
#   x_ref     : (B, S, H)    input, native batch-major layout
#   wi_ref    : (H, 6K)      [Wi_f_r | Wi_f_z | Wi_f_n | Wi_b_r | Wi_b_z | Wi_b_n]
#   wrec_ref  : (K, 6K)      [Wh_f_r | Wh_f_z | Wh_f_n | Wh_b_r | Wh_b_z | Wh_b_n]
#   bx_ref    : (1, 6K)      input-side biases (b_ir+b_hr, b_iz+b_hz, b_in) x 2 dirs
#   bhn_ref   : (1, 6K)      [0 | 0 | b_hn_f | 0 | 0 | b_hn_b]   (stays inside r*(.))
#   h0_ref    : (2B, K)      initial hidden, rows [0:B]=fwd, [B:2B]=bwd (zero-padded)
#   out_ref   : (S, 2B, K)   per-step hidden slabs (bwd half is loop-step-major)
#   hn_ref    : (2B, K)      final hidden
#   gstack_ref: (S, 2B, 3K)  VMEM scratch: staged gate pre-activations from x
# ----------------------------------------------------------------------------
def _bigru_fused_kernel(x_ref, wi_ref, wrec_ref, bx_ref, bhn_ref, h0_ref,
                        out_ref, hn_ref, gstack_ref):
    B, S, _ = x_ref.shape
    TB, K = h0_ref.shape          # TB = 2*B, K = padded per-gate width (128-mult)
    K3 = 3 * K

    # ------------- hoisted input projection + staging (one-time, off the
    # serial chain): gstack[t, :B]  = Wi_f proj of x[:, t]      (+ biases)
    #                gstack[t, B:]  = Wi_b proj of x[:, S-1-t]  (+ biases)
    wi = wi_ref[...].astype(MATMUL_DTYPE)            # (H, 6K), loop-invariant
    bx = bx_ref[...]                                  # (1, 6K)
    for b in range(B):                                # B is small and static
        g = jnp.dot(x_ref[b].astype(MATMUL_DTYPE), wi,
                    preferred_element_type=jnp.float32) + bx       # (S, 6K) f32
        # forward half: already time-major.
        gstack_ref[:, b, :] = g[:, :K3]
        # backward half: reverse time with static slices (one-time relayout).
        g_rev = jnp.concatenate(
            [g[S - 1 - s:S - s, K3:] for s in range(S)], axis=0)   # (S, 3K)
        gstack_ref[:, B + b, :] = g_rev

    # ------------- serial recurrence: one step per time index, both directions
    # stacked along sublanes (rows [0:B] = fwd, rows [B:2B] = bwd).
    wrec = wrec_ref[...].astype(MATMUL_DTYPE)         # (K, 6K), loop-invariant
    bhn = bhn_ref[...]                                # (1, 6K)
    # loop-invariant row mask: which stacked rows belong to the forward direction
    row_is_fwd = jax.lax.broadcasted_iota(jnp.int32, (TB, K3), 0) < B

    def step(t, h):
        # single (2B, K) @ (K, 6K) recurrent matmul serves both directions; each
        # row then selects the half computed with its own direction's weights.
        gh_full = jnp.dot(h.astype(MATMUL_DTYPE), wrec,
                          preferred_element_type=jnp.float32) + bhn    # (2B, 6K)
        gh = jnp.where(row_is_fwd, gh_full[:, :K3], gh_full[:, K3:])   # (2B, 3K)

        gx = gstack_ref[t]                                             # (2B, 3K)

        # fused gate math for both directions, all slices 128-lane aligned.
        r = jax.nn.sigmoid(gx[:, :K] + gh[:, :K])
        z = jax.nn.sigmoid(gx[:, K:2 * K] + gh[:, K:2 * K])
        n = jnp.tanh(gx[:, 2 * K:] + r * gh[:, 2 * K:])
        h_new = (1.0 - z) * n + z * h                                  # (2B, K)

        # one full, unmasked, lane-dense store per step.
        out_ref[t] = h_new
        return h_new

    unroll = True if S <= 16 else 4     # full unroll only for short sequences
    h_fin = jax.lax.fori_loop(0, S, step, h0_ref[...], unroll=unroll)
    hn_ref[...] = h_fin


# ----------------------------------------------------------------------------
# Host wrapper: SentModel.forward(x, hidden) -> (output, h_n)
# ----------------------------------------------------------------------------
def sent_model_forward(params, x, hidden):
    """x: (B, S, H) batch-first; hidden: (2, B, H).  Mirrors SentModel.forward."""
    B, S, H = x.shape
    packed = params["packed"]
    K = packed["K"]
    TB = 2 * B

    # initial hidden, stacked along sublanes and zero-padded to K lanes
    h0_pad = jnp.zeros((TB, K), jnp.float32)
    h0_pad = h0_pad.at[:B, :H].set(hidden[0]).at[B:, :H].set(hidden[1])

    out_pad, hn_pad = pl.pallas_call(
        _bigru_fused_kernel,
        out_shape=(
            jax.ShapeDtypeStruct((S, TB, K), jnp.float32),
            jax.ShapeDtypeStruct((TB, K), jnp.float32),
        ),
        grid=(1,),
        in_specs=[
            pl.BlockSpec((B, S, H), lambda i: (0, 0, 0)),     # x (native layout)
            pl.BlockSpec((H, 6 * K), lambda i: (0, 0)),       # wi_cat
            pl.BlockSpec((K, 6 * K), lambda i: (0, 0)),       # wrec
            pl.BlockSpec((1, 6 * K), lambda i: (0, 0)),       # bx
            pl.BlockSpec((1, 6 * K), lambda i: (0, 0)),       # bhn
            pl.BlockSpec((TB, K), lambda i: (0, 0)),          # h0
        ],
        out_specs=(
            pl.BlockSpec((S, TB, K), lambda i: (0, 0, 0)),
            pl.BlockSpec((TB, K), lambda i: (0, 0)),
        ),
        scratch_shapes=[pltpu.VMEM((S, TB, 3 * K), jnp.float32)],
        compiler_params=pltpu.CompilerParams(
            dimension_semantics=("arbitrary",),
            vmem_limit_bytes=16 * 1024 * 1024,
        ),
    )(x, packed["wi"], packed["wrec"], packed["bx"], packed["bhn"], h0_pad)

    # fwd half is already time-major; bwd half is loop-step-major -> un-reverse.
    out = jnp.concatenate(
        [out_pad[:, :B, :H], out_pad[::-1, B:, :H]], axis=-1)   # (S, B, 2H)
    hn = jnp.stack([hn_pad[:B, :H], hn_pad[B:, :H]], axis=0)    # (2, B, H)
    return out, hn


# ----------------------------------------------------------------------------
# Parameter init (PyTorch-style uniform init, gate order r, z, n) and packing
# ----------------------------------------------------------------------------
def _uniform(key, shape, bound):
    return jax.random.uniform(key, shape, jnp.float32, -bound, bound)


def init_gru_dir_params(key, input_size, hidden_size):
    k = 1.0 / math.sqrt(hidden_size)
    k0, k1, k2, k3 = jax.random.split(key, 4)
    wi = _uniform(k0, (3, input_size, hidden_size), k)   # [r, z, n]
    wh = _uniform(k1, (3, hidden_size, hidden_size), k)
    bi = _uniform(k2, (3, hidden_size), k)
    bh = _uniform(k3, (3, hidden_size), k)
    return wi, wh, bi, bh


def _pack_bigru_params(pf, pb, hidden_dim):
    """Pack per-direction GRU params into 128-lane-padded fused blocks."""
    H = hidden_dim
    K = _round_up(H, 128)
    wi_f, wh_f, bi_f, bh_f = pf
    wi_b, wh_b, bi_b, bh_b = pb

    def pad_wi(w):    # (H, H) -> (H, K)
        return jnp.pad(w, ((0, 0), (0, K - H)))

    def pad_wh(w):    # (H, H) -> (K, K); zero pad rows keep pad lanes inert
        return jnp.pad(w, ((0, K - H), (0, K - H)))

    def pad_b(v):     # (H,) -> (K,)
        return jnp.pad(v, (0, K - H))

    wi_cat = jnp.concatenate(
        [pad_wi(wi_f[0]), pad_wi(wi_f[1]), pad_wi(wi_f[2]),
         pad_wi(wi_b[0]), pad_wi(wi_b[1]), pad_wi(wi_b[2])], axis=1)   # (H, 6K)

    wrec = jnp.concatenate(
        [pad_wh(wh_f[0]), pad_wh(wh_f[1]), pad_wh(wh_f[2]),
         pad_wh(wh_b[0]), pad_wh(wh_b[1]), pad_wh(wh_b[2])], axis=1)   # (K, 6K)

    # b_ir+b_hr and b_iz+b_hz fold into the x-side; b_in stays on the x-side,
    # b_hn stays on the h-side (it sits inside r * (.)).
    bx = jnp.concatenate(
        [pad_b(bi_f[0] + bh_f[0]), pad_b(bi_f[1] + bh_f[1]), pad_b(bi_f[2]),
         pad_b(bi_b[0] + bh_b[0]), pad_b(bi_b[1] + bh_b[1]), pad_b(bi_b[2])]
    )[None, :]                                                          # (1, 6K)

    zk = jnp.zeros((K,), jnp.float32)
    bhn = jnp.concatenate(
        [zk, zk, pad_b(bh_f[2]), zk, zk, pad_b(bh_b[2])])[None, :]      # (1, 6K)

    return {"wi": wi_cat, "wrec": wrec, "bx": bx, "bhn": bhn, "K": K}


def init_sent_model_params(key, hidden_dim):
    kf, kb = jax.random.split(key)
    pf = init_gru_dir_params(kf, hidden_dim, hidden_dim)
    pb = init_gru_dir_params(kb, hidden_dim, hidden_dim)
    return {"fwd": pf, "bwd": pb, "packed": _pack_bigru_params(pf, pb, hidden_dim)}


# ----------------------------------------------------------------------------
# Pure-JAX reference (matches torch.nn.GRU bidirectional semantics)
# ----------------------------------------------------------------------------
def _gru_uni_ref(x_seq, h0, wi, wh, bi, bh):
    def step(h, x_t):
        r = jax.nn.sigmoid(x_t @ wi[0] + bi[0] + h @ wh[0] + bh[0])
        z = jax.nn.sigmoid(x_t @ wi[1] + bi[1] + h @ wh[1] + bh[1])
        n = jnp.tanh(x_t @ wi[2] + bi[2] + r * (h @ wh[2] + bh[2]))
        h_new = (1.0 - z) * n + z * h
        return h_new, h_new
    h_T, outs = jax.lax.scan(step, h0, x_seq)
    return outs, h_T


def sent_model_forward_ref(params, x, hidden):
    xt = jnp.transpose(x, (1, 0, 2))
    of, hf = _gru_uni_ref(xt, hidden[0], *params["fwd"])
    ob, hb = _gru_uni_ref(xt[::-1], hidden[1], *params["bwd"])
    out = jnp.concatenate([of, ob[::-1]], axis=-1)
    hn = jnp.stack([hf, hb], axis=0)
    return out, hn


# ----------------------------------------------------------------------------
if __name__ == "__main__":
    # Shapes from the SentModel spec: batch_size=4, hidden_dim=100, seq=8 sentences.
    B, S, H = 4, 8, 100

    key = jax.random.PRNGKey(0)
    kp, kx = jax.random.split(key)
    params = init_sent_model_params(kp, H)

    x = jax.random.normal(kx, (B, S, H), jnp.float32)        # sentence reprs
    hidden = jnp.zeros((2, B, H), jnp.float32)               # SentModel.init_hidden()

    out, hn = sent_model_forward(params, x, hidden)
    out = jax.block_until_ready(out)
    hn = jax.block_until_ready(hn)
    assert out.shape == (S, B, 2 * H) and out.dtype == jnp.float32
    assert hn.shape == (2, B, H) and hn.dtype == jnp.float32

    out_ref, hn_ref = sent_model_forward_ref(params, x, hidden)
    out_ref = jax.block_until_ready(out_ref)
    hn_ref = jax.block_until_ready(hn_ref)
    assert jnp.allclose(out, out_ref, rtol=1e-2, atol=1e-3)
    assert jnp.allclose(hn, hn_ref, rtol=1e-2, atol=1e-3)

    print("KERNEL_OK")
</pallas_src>

<mosaic_0001>
module attributes {stable_mosaic.version = 11 : i64} {
  func.func @_bigru_fused_kernel(%arg0: i32, %arg1: memref<4x8x100xf32, #tpu.memory_space<vmem>>, %arg2: memref<100x768xf32, #tpu.memory_space<vmem>>, %arg3: memref<128x768xf32, #tpu.memory_space<vmem>>, %arg4: memref<1x768xf32, #tpu.memory_space<vmem>>, %arg5: memref<1x768xf32, #tpu.memory_space<vmem>>, %arg6: memref<8x128xf32, #tpu.memory_space<vmem>>, %arg7: memref<8x8x128xf32, #tpu.memory_space<vmem>>, %arg8: memref<8x128xf32, #tpu.memory_space<vmem>>, %arg9: memref<8x8x384xf32, #tpu.memory_space<vmem>>) attributes {dimension_semantics = [#tpu.dimension_semantics<arbitrary>], iteration_bounds = array<i64: 1>, scalar_prefetch = 0 : i64, scratch_operands = 1 : i64, tpu.core_type = #tpu.core_type<tc>, window_params = [{pipeline_mode = #tpu.pipeline_mode<synchronous>, transform_indices = @transform_0, window_bounds = array<i64: 4, 8, 100>}, {pipeline_mode = #tpu.pipeline_mode<synchronous>, transform_indices = @transform_1, window_bounds = array<i64: 100, 768>}, {pipeline_mode = #tpu.pipeline_mode<synchronous>, transform_indices = @transform_2, window_bounds = array<i64: 128, 768>}, {pipeline_mode = #tpu.pipeline_mode<synchronous>, transform_indices = @transform_3, window_bounds = array<i64: 1, 768>}, {pipeline_mode = #tpu.pipeline_mode<synchronous>, transform_indices = @transform_4, window_bounds = array<i64: 1, 768>}, {pipeline_mode = #tpu.pipeline_mode<synchronous>, transform_indices = @transform_5, window_bounds = array<i64: 8, 128>}, {pipeline_mode = #tpu.pipeline_mode<synchronous>, transform_indices = @transform_6, window_bounds = array<i64: 8, 8, 128>}, {pipeline_mode = #tpu.pipeline_mode<synchronous>, transform_indices = @transform_7, window_bounds = array<i64: 8, 128>}]} {
    %c0 = arith.constant 0 : index
    %c0_0 = arith.constant 0 : index
    %0 = vector.load %arg2[%c0, %c0_0] : memref<100x768xf32, #tpu.memory_space<vmem>>, vector<100x768xf32>
    %c0_1 = arith.constant 0 : index
    %c0_2 = arith.constant 0 : index
    %1 = vector.load %arg4[%c0_1, %c0_2] : memref<1x768xf32, #tpu.memory_space<vmem>>, vector<1x768xf32>
    %c0_3 = arith.constant 0 : index
    %c0_4 = arith.constant 0 : index
    %c0_5 = arith.constant 0 : index
    %2 = vector.load %arg1[%c0_3, %c0_4, %c0_5] : memref<4x8x100xf32, #tpu.memory_space<vmem>>, vector<1x8x100xf32>
    %3 = vector.shape_cast %2 : vector<1x8x100xf32> to vector<8x100xf32>
    %cst = arith.constant dense<0.000000e+00> : vector<8x768xf32>
    %4 = tpu.matmul %3, %0, %cst {dimension_numbers = #tpu.dot_dimension_numbers<[1], [0], [0], [1], [0, 0, 1, 1], [], []>} : vector<8x100xf32>, vector<100x768xf32>, vector<8x768xf32> -> vector<8x768xf32>
    %5 = vector.broadcast %1 : vector<1x768xf32> to vector<8x768xf32>
    %6 = arith.addf %4, %5 : vector<8x768xf32>
    %7 = vector.extract_strided_slice %6 {offsets = [0, 0], sizes = [8, 384], strides = [1, 1]} : vector<8x768xf32> to vector<8x384xf32>
    %c0_6 = arith.constant 0 : index
    %c0_7 = arith.constant 0 : index
    %c0_8 = arith.constant 0 : index
    %8 = vector.load %arg9[%c0_6, %c0_7, %c0_8] : memref<8x8x384xf32, #tpu.memory_space<vmem>>, vector<8x1x384xf32>
    %9 = vector.shape_cast %8 : vector<8x1x384xf32> to vector<8x384xf32>
    %10 = vector.shape_cast %7 : vector<8x384xf32> to vector<8x1x384xf32>
    tpu.vector_store %arg9[%c0_6, %c0_7, %c0_8], %10 {strides = array<i32>} : memref<8x8x384xf32, #tpu.memory_space<vmem>>, vector<8x1x384xf32>,
    %11 = vector.extract_strided_slice %6 {offsets = [7, 384], sizes = [1, 384], strides = [1, 1]} : vector<8x768xf32> to vector<1x384xf32>
    %12 = vector.extract_strided_slice %6 {offsets = [6, 384], sizes = [1, 384], strides = [1, 1]} : vector<8x768xf32> to vector<1x384xf32>
    %13 = vector.extract_strided_slice %6 {offsets = [5, 384], sizes = [1, 384], strides = [1, 1]} : vector<8x768xf32> to vector<1x384xf32>
    %14 = vector.extract_strided_slice %6 {offsets = [4, 384], sizes = [1, 384], strides = [1, 1]} : vector<8x768xf32> to vector<1x384xf32>
    %15 = vector.extract_strided_slice %6 {offsets = [3, 384], sizes = [1, 384], strides = [1, 1]} : vector<8x768xf32> to vector<1x384xf32>
    %16 = vector.extract_strided_slice %6 {offsets = [2, 384], sizes = [1, 384], strides = [1, 1]} : vector<8x768xf32> to vector<1x384xf32>
    %17 = vector.extract_strided_slice %6 {offsets = [1, 384], sizes = [1, 384], strides = [1, 1]} : vector<8x768xf32> to vector<1x384xf32>
    %18 = vector.extract_strided_slice %6 {offsets = [0, 384], sizes = [1, 384], strides = [1, 1]} : vector<8x768xf32> to vector<1x384xf32>
    %19 = tpu.concatenate %11, %12, %13, %14, %15, %16, %17, %18 in 0 : vector<1x384xf32>, vector<1x384xf32>, vector<1x384xf32>, vector<1x384xf32>, vector<1x384xf32>, vector<1x384xf32>, vector<1x384xf32>, vector<1x384xf32> -> vector<8x384xf32>
    %c0_9 = arith.constant 0 : index
    %c4 = arith.constant 4 : index
    %c0_10 = arith.constant 0 : index
    %20 = vector.load %arg9[%c0_9, %c4, %c0_10] : memref<8x8x384xf32, #tpu.memory_space<vmem>>, vector<8x1x384xf32>
    %21 = vector.shape_cast %20 : vector<8x1x384xf32> to vector<8x384xf32>
    %22 = vector.shape_cast %19 : vector<8x384xf32> to vector<8x1x384xf32>
    tpu.vector_store %arg9[%c0_9, %c4, %c0_10], %22 {strides = array<i32>} : memref<8x8x384xf32, #tpu.memory_space<vmem>>, vector<8x1x384xf32>,
    %c1 = arith.constant 1 : index
    %c0_11 = arith.constant 0 : index
    %c0_12 = arith.constant 0 : index
    %23 = vector.load %arg1[%c1, %c0_11, %c0_12] : memref<4x8x100xf32, #tpu.memory_space<vmem>>, vector<1x8x100xf32>
    %24 = vector.shape_cast %23 : vector<1x8x100xf32> to vector<8x100xf32>
    %cst_13 = arith.constant dense<0.000000e+00> : vector<8x768xf32>
    %25 = tpu.matmul %24, %0, %cst_13 {dimension_numbers = #tpu.dot_dimension_numbers<[1], [0], [0], [1], [0, 0, 1, 1], [], []>} : vector<8x100xf32>, vector<100x768xf32>, vector<8x768xf32> -> vector<8x768xf32>
    %26 = vector.broadcast %1 : vector<1x768xf32> to vector<8x768xf32>
    %27 = arith.addf %25, %26 : vector<8x768xf32>
    %28 = vector.extract_strided_slice %27 {offsets = [0, 0], sizes = [8, 384], strides = [1, 1]} : vector<8x768xf32> to vector<8x384xf32>
    %c0_14 = arith.constant 0 : index
    %c1_15 = arith.constant 1 : index
    %c0_16 = arith.constant 0 : index
    %29 = vector.load %arg9[%c0_14, %c1_15, %c0_16] : memref<8x8x384xf32, #tpu.memory_space<vmem>>, vector<8x1x384xf32>
    %30 = vector.shape_cast %29 : vector<8x1x384xf32> to vector<8x384xf32>
    %31 = vector.shape_cast %28 : vector<8x384xf32> to vector<8x1x384xf32>
    tpu.vector_store %arg9[%c0_14, %c1_15, %c0_16], %31 {strides = array<i32>} : memref<8x8x384xf32, #tpu.memory_space<vmem>>, vector<8x1x384xf32>,
    %32 = vector.extract_strided_slice %27 {offsets = [7, 384], sizes = [1, 384], strides = [1, 1]} : vector<8x768xf32> to vector<1x384xf32>
    %33 = vector.extract_strided_slice %27 {offsets = [6, 384], sizes = [1, 384], strides = [1, 1]} : vector<8x768xf32> to vector<1x384xf32>
    %34 = vector.extract_strided_slice %27 {offsets = [5, 384], sizes = [1, 384], strides = [1, 1]} : vector<8x768xf32> to vector<1x384xf32>
    %35 = vector.extract_strided_slice %27 {offsets = [4, 384], sizes = [1, 384], strides = [1, 1]} : vector<8x768xf32> to vector<1x384xf32>
    %36 = vector.extract_strided_slice %27 {offsets = [3, 384], sizes = [1, 384], strides = [1, 1]} : vector<8x768xf32> to vector<1x384xf32>
    %37 = vector.extract_strided_slice %27 {offsets = [2, 384], sizes = [1, 384], strides = [1, 1]} : vector<8x768xf32> to vector<1x384xf32>
    %38 = vector.extract_strided_slice %27 {offsets = [1, 384], sizes = [1, 384], strides = [1, 1]} : vector<8x768xf32> to vector<1x384xf32>
    %39 = vector.extract_strided_slice %27 {offsets = [0, 384], sizes = [1, 384], strides = [1, 1]} : vector<8x768xf32> to vector<1x384xf32>
    %40 = tpu.concatenate %32, %33, %34, %35, %36, %37, %38, %39 in 0 : vector<1x384xf32>, vector<1x384xf32>, vector<1x384xf32>, vector<1x384xf32>, vector<1x384xf32>, vector<1x384xf32>, vector<1x384xf32>, vector<1x384xf32> -> vector<8x384xf32>
    %c0_17 = arith.constant 0 : index
    %c5 = arith.constant 5 : index
    %c0_18 = arith.constant 0 : index
    %41 = vector.load %arg9[%c0_17, %c5, %c0_18] : memref<8x8x384xf32, #tpu.memory_space<vmem>>, vector<8x1x384xf32>
    %42 = vector.shape_cast %41 : vector<8x1x384xf32> to vector<8x384xf32>
    %43 = vector.shape_cast %40 : vector<8x384xf32> to vector<8x1x384xf32>
    tpu.vector_store %arg9[%c0_17, %c5, %c0_18], %43 {strides = array<i32>} : memref<8x8x384xf32, #tpu.memory_space<vmem>>, vector<8x1x384xf32>,
    %c2 = arith.constant 2 : index
    %c0_19 = arith.constant 0 : index
    %c0_20 = arith.constant 0 : index
    %44 = vector.load %arg1[%c2, %c0_19, %c0_20] : memref<4x8x100xf32, #tpu.memory_space<vmem>>, vector<1x8x100xf32>
    %45 = vector.shape_cast %44 : vector<1x8x100xf32> to vector<8x100xf32>
    %cst_21 = arith.constant dense<0.000000e+00> : vector<8x768xf32>
    %46 = tpu.matmul %45, %0, %cst_21 {dimension_numbers = #tpu.dot_dimension_numbers<[1], [0], [0], [1], [0, 0, 1, 1], [], []>} : vector<8x100xf32>, vector<100x768xf32>, vector<8x768xf32> -> vector<8x768xf32>
    %47 = vector.broadcast %1 : vector<1x768xf32> to vector<8x768xf32>
    %48 = arith.addf %46, %47 : vector<8x768xf32>
    %49 = vector.extract_strided_slice %48 {offsets = [0, 0], sizes = [8, 384], strides = [1, 1]} : vector<8x768xf32> to vector<8x384xf32>
    %c0_22 = arith.constant 0 : index
    %c2_23 = arith.constant 2 : index
    %c0_24 = arith.constant 0 : index
    %50 = vector.load %arg9[%c0_22, %c2_23, %c0_24] : memref<8x8x384xf32, #tpu.memory_space<vmem>>, vector<8x1x384xf32>
    %51 = vector.shape_cast %50 : vector<8x1x384xf32> to vector<8x384xf32>
    %52 = vector.shape_cast %49 : vector<8x384xf32> to vector<8x1x384xf32>
    tpu.vector_store %arg9[%c0_22, %c2_23, %c0_24], %52 {strides = array<i32>} : memref<8x8x384xf32, #tpu.memory_space<vmem>>, vector<8x1x384xf32>,
    %53 = vector.extract_strided_slice %48 {offsets = [7, 384], sizes = [1, 384], strides = [1, 1]} : vector<8x768xf32> to vector<1x384xf32>
    %54 = vector.extract_strided_slice %48 {offsets = [6, 384], sizes = [1, 384], strides = [1, 1]} : vector<8x768xf32> to vector<1x384xf32>
    %55 = vector.extract_strided_slice %48 {offsets = [5, 384], sizes = [1, 384], strides = [1, 1]} : vector<8x768xf32> to vector<1x384xf32>
    %56 = vector.extract_strided_slice %48 {offsets = [4, 384], sizes = [1, 384], strides = [1, 1]} : vector<8x768xf32> to vector<1x384xf32>
    %57 = vector.extract_strided_slice %48 {offsets = [3, 384], sizes = [1, 384], strides = [1, 1]} : vector<8x768xf32> to vector<1x384xf32>
    %58 = vector.extract_strided_slice %48 {offsets = [2, 384], sizes = [1, 384], strides = [1, 1]} : vector<8x768xf32> to vector<1x384xf32>
    %59 = vector.extract_strided_slice %48 {offsets = [1, 384], sizes = [1, 384], strides = [1, 1]} : vector<8x768xf32> to vector<1x384xf32>
    %60 = vector.extract_strided_slice %48 {offsets = [0, 384], sizes = [1, 384], strides = [1, 1]} : vector<8x768xf32> to vector<1x384xf32>
    %61 = tpu.concatenate %53, %54, %55, %56, %57, %58, %59, %60 in 0 : vector<1x384xf32>, vector<1x384xf32>, vector<1x384xf32>, vector<1x384xf32>, vector<1x384xf32>, vector<1x384xf32>, vector<1x384xf32>, vector<1x384xf32> -> vector<8x384xf32>
    %c0_25 = arith.constant 0 : index
    %c6 = arith.constant 6 : index
    %c0_26 = arith.constant 0 : index
    %62 = vector.load %arg9[%c0_25, %c6, %c0_26] : memref<8x8x384xf32, #tpu.memory_space<vmem>>, vector<8x1x384xf32>
    %63 = vector.shape_cast %62 : vector<8x1x384xf32> to vector<8x384xf32>
    %64 = vector.shape_cast %61 : vector<8x384xf32> to vector<8x1x384xf32>
    tpu.vector_store %arg9[%c0_25, %c6, %c0_26], %64 {strides = array<i32>} : memref<8x8x384xf32, #tpu.memory_space<vmem>>, vector<8x1x384xf32>,
    %c3 = arith.constant 3 : index
    %c0_27 = arith.constant 0 : index
    %c0_28 = arith.constant 0 : index
    %65 = vector.load %arg1[%c3, %c0_27, %c0_28] : memref<4x8x100xf32, #tpu.memory_space<vmem>>, vector<1x8x100xf32>
    %66 = vector.shape_cast %65 : vector<1x8x100xf32> to vector<8x100xf32>
    %cst_29 = arith.constant dense<0.000000e+00> : vector<8x768xf32>
    %67 = tpu.matmul %66, %0, %cst_29 {dimension_numbers = #tpu.dot_dimension_numbers<[1], [0], [0], [1], [0, 0, 1, 1], [], []>} : vector<8x100xf32>, vector<100x768xf32>, vector<8x768xf32> -> vector<8x768xf32>
    %68 = vector.broadcast %1 : vector<1x768xf32> to vector<8x768xf32>
    %69 = arith.addf %67, %68 : vector<8x768xf32>
    %70 = vector.extract_strided_slice %69 {offsets = [0, 0], sizes = [8, 384], strides = [1, 1]} : vector<8x768xf32> to vector<8x384xf32>
    %c0_30 = arith.constant 0 : index
    %c3_31 = arith.constant 3 : index
    %c0_32 = arith.constant 0 : index
    %71 = vector.load %arg9[%c0_30, %c3_31, %c0_32] : memref<8x8x384xf32, #tpu.memory_space<vmem>>, vector<8x1x384xf32>
    %72 = vector.shape_cast %71 : vector<8x1x384xf32> to vector<8x384xf32>
    %73 = vector.shape_cast %70 : vector<8x384xf32> to vector<8x1x384xf32>
    tpu.vector_store %arg9[%c0_30, %c3_31, %c0_32], %73 {strides = array<i32>} : memref<8x8x384xf32, #tpu.memory_space<vmem>>, vector<8x1x384xf32>,
    %74 = vector.extract_strided_slice %69 {offsets = [7, 384], sizes = [1, 384], strides = [1, 1]} : vector<8x768xf32> to vector<1x384xf32>
    %75 = vector.extract_strided_slice %69 {offsets = [6, 384], sizes = [1, 384], strides = [1, 1]} : vector<8x768xf32> to vector<1x384xf32>
    %76 = vector.extract_strided_slice %69 {offsets = [5, 384], sizes = [1, 384], strides = [1, 1]} : vector<8x768xf32> to vector<1x384xf32>
    %77 = vector.extract_strided_slice %69 {offsets = [4, 384], sizes = [1, 384], strides = [1, 1]} : vector<8x768xf32> to vector<1x384xf32>
    %78 = vector.extract_strided_slice %69 {offsets = [3, 384], sizes = [1, 384], strides = [1, 1]} : vector<8x768xf32> to vector<1x384xf32>
    %79 = vector.extract_strided_slice %69 {offsets = [2, 384], sizes = [1, 384], strides = [1, 1]} : vector<8x768xf32> to vector<1x384xf32>
    %80 = vector.extract_strided_slice %69 {offsets = [1, 384], sizes = [1, 384], strides = [1, 1]} : vector<8x768xf32> to vector<1x384xf32>
    %81 = vector.extract_strided_slice %69 {offsets = [0, 384], sizes = [1, 384], strides = [1, 1]} : vector<8x768xf32> to vector<1x384xf32>
    %82 = tpu.concatenate %74, %75, %76, %77, %78, %79, %80, %81 in 0 : vector<1x384xf32>, vector<1x384xf32>, vector<1x384xf32>, vector<1x384xf32>, vector<1x384xf32>, vector<1x384xf32>, vector<1x384xf32>, vector<1x384xf32> -> vector<8x384xf32>
    %c0_33 = arith.constant 0 : index
    %c7 = arith.constant 7 : index
    %c0_34 = arith.constant 0 : index
    %83 = vector.load %arg9[%c0_33, %c7, %c0_34] : memref<8x8x384xf32, #tpu.memory_space<vmem>>, vector<8x1x384xf32>
    %84 = vector.shape_cast %83 : vector<8x1x384xf32> to vector<8x384xf32>
    %85 = vector.shape_cast %82 : vector<8x384xf32> to vector<8x1x384xf32>
    tpu.vector_store %arg9[%c0_33, %c7, %c0_34], %85 {strides = array<i32>} : memref<8x8x384xf32, #tpu.memory_space<vmem>>, vector<8x1x384xf32>,
    %c0_35 = arith.constant 0 : index
    %c0_36 = arith.constant 0 : index
    %86 = vector.load %arg3[%c0_35, %c0_36] : memref<128x768xf32, #tpu.memory_space<vmem>>, vector<128x768xf32>
    %c0_37 = arith.constant 0 : index
    %c0_38 = arith.constant 0 : index
    %87 = vector.load %arg5[%c0_37, %c0_38] : memref<1x768xf32, #tpu.memory_space<vmem>>, vector<1x768xf32>
    %88 = tpu.iota {dimensions = array<i32: 0>} : vector<8x384xi32>
    %c4_i32 = arith.constant 4 : i32
    %89 = vector.broadcast %c4_i32 : i32 to vector<8x384xi32>
    %90 = arith.cmpi slt, %88, %89 : vector<8x384xi32>
    %c0_39 = arith.constant 0 : index
    %c0_40 = arith.constant 0 : index
    %91 = vector.load %arg6[%c0_39, %c0_40] : memref<8x128xf32, #tpu.memory_space<vmem>>, vector<8x128xf32>
    %c0_i32 = arith.constant 0 : i32
    %cst_41 = arith.constant dense<0.000000e+00> : vector<8x768xf32>
    %92 = tpu.matmul %91, %86, %cst_41 {dimension_numbers = #tpu.dot_dimension_numbers<[1], [0], [0], [1], [0, 0, 1, 1], [], []>} : vector<8x128xf32>, vector<128x768xf32>, vector<8x768xf32> -> vector<8x768xf32>
    %93 = vector.broadcast %87 : vector<1x768xf32> to vector<8x768xf32>
    %94 = arith.addf %92, %93 : vector<8x768xf32>
    %95 = vector.extract_strided_slice %94 {offsets = [0, 0], sizes = [8, 384], strides = [1, 1]} : vector<8x768xf32> to vector<8x384xf32>
    %96 = vector.extract_strided_slice %94 {offsets = [0, 384], sizes = [8, 384], strides = [1, 1]} : vector<8x768xf32> to vector<8x384xf32>
    %97 = arith.select %90, %95, %96 : vector<8x384xi1>, vector<8x384xf32>
    %98 = arith.index_cast %c0_i32 : i32 to index
    %c0_42 = arith.constant 0 : index
    %c0_43 = arith.constant 0 : index
    %99 = vector.load %arg9[%98, %c0_42, %c0_43] : memref<8x8x384xf32, #tpu.memory_space<vmem>>, vector<1x8x384xf32>
    %100 = vector.shape_cast %99 : vector<1x8x384xf32> to vector<8x384xf32>
    %101 = vector.extract_strided_slice %100 {offsets = [0, 0], sizes = [8, 128], strides = [1, 1]} : vector<8x384xf32> to vector<8x128xf32>
    %102 = vector.extract_strided_slice %97 {offsets = [0, 0], sizes = [8, 128], strides = [1, 1]} : vector<8x384xf32> to vector<8x128xf32>
    %103 = arith.addf %101, %102 : vector<8x128xf32>
    %104 = arith.negf %103 : vector<8x128xf32>
    %105 = math.exp %104 : vector<8x128xf32>
    %cst_44 = arith.constant 1.000000e+00 : f32
    %106 = vector.broadcast %cst_44 : f32 to vector<8x128xf32>
    %107 = arith.addf %106, %105 : vector<8x128xf32>
    %108 = arith.divf %106, %107 : vector<8x128xf32>
    %109 = vector.extract_strided_slice %100 {offsets = [0, 128], sizes = [8, 128], strides = [1, 1]} : vector<8x384xf32> to vector<8x128xf32>
    %110 = vector.extract_strided_slice %97 {offsets = [0, 128], sizes = [8, 128], strides = [1, 1]} : vector<8x384xf32> to vector<8x128xf32>
    %111 = arith.addf %109, %110 : vector<8x128xf32>
    %112 = arith.negf %111 : vector<8x128xf32>
    %113 = math.exp %112 : vector<8x128xf32>
    %cst_45 = arith.constant 1.000000e+00 : f32
    %114 = vector.broadcast %cst_45 : f32 to vector<8x128xf32>
    %115 = arith.addf %114, %113 : vector<8x128xf32>
    %116 = arith.divf %114, %115 : vector<8x128xf32>
    %117 = vector.extract_strided_slice %100 {offsets = [0, 256], sizes = [8, 128], strides = [1, 1]} : vector<8x384xf32> to vector<8x128xf32>
    %118 = vector.extract_strided_slice %97 {offsets = [0, 256], sizes = [8, 128], strides = [1, 1]} : vector<8x384xf32> to vector<8x128xf32>
    %119 = arith.mulf %108, %118 : vector<8x128xf32>
    %120 = arith.addf %117, %119 : vector<8x128xf32>
    %121 = math.tanh %120 : vector<8x128xf32>
    %cst_46 = arith.constant 1.000000e+00 : f32
    %122 = vector.broadcast %cst_46 : f32 to vector<8x128xf32>
    %123 = arith.subf %122, %116 : vector<8x128xf32>
    %124 = arith.mulf %123, %121 : vector<8x128xf32>
    %125 = arith.mulf %116, %91 : vector<8x128xf32>
    %126 = arith.addf %124, %125 : vector<8x128xf32>
    %127 = arith.index_cast %c0_i32 : i32 to index
    %c0_47 = arith.constant 0 : index
    %c0_48 = arith.constant 0 : index
    %128 = vector.load %arg7[%127, %c0_47, %c0_48] : memref<8x8x128xf32, #tpu.memory_space<vmem>>, vector<1x8x128xf32>
    %129 = vector.shape_cast %128 : vector<1x8x128xf32> to vector<8x128xf32>
    %130 = vector.shape_cast %126 : vector<8x128xf32> to vector<1x8x128xf32>
    tpu.vector_store %arg7[%127, %c0_47, %c0_48], %130 {strides = array<i32>} : memref<8x8x128xf32, #tpu.memory_space<vmem>>, vector<1x8x128xf32>,
    %c1_i32 = arith.constant 1 : i32
    %cst_49 = arith.constant dense<0.000000e+00> : vector<8x768xf32>
    %131 = tpu.matmul %126, %86, %cst_49 {dimension_numbers = #tpu.dot_dimension_numbers<[1], [0], [0], [1], [0, 0, 1, 1], [], []>} : vector<8x128xf32>, vector<128x768xf32>, vector<8x768xf32> -> vector<8x768xf32>
    %132 = vector.broadcast %87 : vector<1x768xf32> to vector<8x768xf32>
    %133 = arith.addf %131, %132 : vector<8x768xf32>
    %134 = vector.extract_strided_slice %133 {offsets = [0, 0], sizes = [8, 384], strides = [1, 1]} : vector<8x768xf32> to vector<8x384xf32>
    %135 = vector.extract_strided_slice %133 {offsets = [0, 384], sizes = [8, 384], strides = [1, 1]} : vector<8x768xf32> to vector<8x384xf32>
    %136 = arith.select %90, %134, %135 : vector<8x384xi1>, vector<8x384xf32>
    %137 = arith.index_cast %c1_i32 : i32 to index
    %c0_50 = arith.constant 0 : index
    %c0_51 = arith.constant 0 : index
    %138 = vector.load %arg9[%137, %c0_50, %c0_51] : memref<8x8x384xf32, #tpu.memory_space<vmem>>, vector<1x8x384xf32>
    %139 = vector.shape_cast %138 : vector<1x8x384xf32> to vector<8x384xf32>
    %140 = vector.extract_strided_slice %139 {offsets = [0, 0], sizes = [8, 128], strides = [1, 1]} : vector<8x384xf32> to vector<8x128xf32>
    %141 = vector.extract_strided_slice %136 {offsets = [0, 0], sizes = [8, 128], strides = [1, 1]} : vector<8x384xf32> to vector<8x128xf32>
    %142 = arith.addf %140, %141 : vector<8x128xf32>
    %143 = arith.negf %142 : vector<8x128xf32>
    %144 = math.exp %143 : vector<8x128xf32>
    %cst_52 = arith.constant 1.000000e+00 : f32
    %145 = vector.broadcast %cst_52 : f32 to vector<8x128xf32>
    %146 = arith.addf %145, %144 : vector<8x128xf32>
    %147 = arith.divf %145, %146 : vector<8x128xf32>
    %148 = vector.extract_strided_slice %139 {offsets = [0, 128], sizes = [8, 128], strides = [1, 1]} : vector<8x384xf32> to vector<8x128xf32>
    %149 = vector.extract_strided_slice %136 {offsets = [0, 128], sizes = [8, 128], strides = [1, 1]} : vector<8x384xf32> to vector<8x128xf32>
    %150 = arith.addf %148, %149 : vector<8x128xf32>
    %151 = arith.negf %150 : vector<8x128xf32>
    %152 = math.exp %151 : vector<8x128xf32>
    %cst_53 = arith.constant 1.000000e+00 : f32
    %153 = vector.broadcast %cst_53 : f32 to vector<8x128xf32>
    %154 = arith.addf %153, %152 : vector<8x128xf32>
    %155 = arith.divf %153, %154 : vector<8x128xf32>
    %156 = vector.extract_strided_slice %139 {offsets = [0, 256], sizes = [8, 128], strides = [1, 1]} : vector<8x384xf32> to vector<8x128xf32>
    %157 = vector.extract_strided_slice %136 {offsets = [0, 256], sizes = [8, 128], strides = [1, 1]} : vector<8x384xf32> to vector<8x128xf32>
    %158 = arith.mulf %147, %157 : vector<8x128xf32>
    %159 = arith.addf %156, %158 : vector<8x128xf32>
    %160 = math.tanh %159 : vector<8x128xf32>
    %cst_54 = arith.constant 1.000000e+00 : f32
    %161 = vector.broadcast %cst_54 : f32 to vector<8x128xf32>
    %162 = arith.subf %161, %155 : vector<8x128xf32>
    %163 = arith.mulf %162, %160 : vector<8x128xf32>
    %164 = arith.mulf %155, %126 : vector<8x128xf32>
    %165 = arith.addf %163, %164 : vector<8x128xf32>
    %166 = arith.index_cast %c1_i32 : i32 to index
    %c0_55 = arith.constant 0 : index
    %c0_56 = arith.constant 0 : index
    %167 = vector.load %arg7[%166, %c0_55, %c0_56] : memref<8x8x128xf32, #tpu.memory_space<vmem>>, vector<1x8x128xf32>
    %168 = vector.shape_cast %167 : vector<1x8x128xf32> to vector<8x128xf32>
    %169 = vector.shape_cast %165 : vector<8x128xf32> to vector<1x8x128xf32>
    tpu.vector_store %arg7[%166, %c0_55, %c0_56], %169 {strides = array<i32>} : memref<8x8x128xf32, #tpu.memory_space<vmem>>, vector<1x8x128xf32>,
    %c2_i32 = arith.constant 2 : i32
    %cst_57 = arith.constant dense<0.000000e+00> : vector<8x768xf32>
    %170 = tpu.matmul %165, %86, %cst_57 {dimension_numbers = #tpu.dot_dimension_numbers<[1], [0], [0], [1], [0, 0, 1, 1], [], []>} : vector<8x128xf32>, vector<128x768xf32>, vector<8x768xf32> -> vector<8x768xf32>
    %171 = vector.broadcast %87 : vector<1x768xf32> to vector<8x768xf32>
    %172 = arith.addf %170, %171 : vector<8x768xf32>
    %173 = vector.extract_strided_slice %172 {offsets = [0, 0], sizes = [8, 384], strides = [1, 1]} : vector<8x768xf32> to vector<8x384xf32>
    %174 = vector.extract_strided_slice %172 {offsets = [0, 384], sizes = [8, 384], strides = [1, 1]} : vector<8x768xf32> to vector<8x384xf32>
    %175 = arith.select %90, %173, %174 : vector<8x384xi1>, vector<8x384xf32>
    %176 = arith.index_cast %c2_i32 : i32 to index
    %c0_58 = arith.constant 0 : index
    %c0_59 = arith.constant 0 : index
    %177 = vector.load %arg9[%176, %c0_58, %c0_59] : memref<8x8x384xf32, #tpu.memory_space<vmem>>, vector<1x8x384xf32>
    %178 = vector.shape_cast %177 : vector<1x8x384xf32> to vector<8x384xf32>
    %179 = vector.extract_strided_slice %178 {offsets = [0, 0], sizes = [8, 128], strides = [1, 1]} : vector<8x384xf32> to vector<8x128xf32>
    %180 = vector.extract_strided_slice %175 {offsets = [0, 0], sizes = [8, 128], strides = [1, 1]} : vector<8x384xf32> to vector<8x128xf32>
    %181 = arith.addf %179, %180 : vector<8x128xf32>
    %182 = arith.negf %181 : vector<8x128xf32>
    %183 = math.exp %182 : vector<8x128xf32>
    %cst_60 = arith.constant 1.000000e+00 : f32
    %184 = vector.broadcast %cst_60 : f32 to vector<8x128xf32>
    %185 = arith.addf %184, %183 : vector<8x128xf32>
    %186 = arith.divf %184, %185 : vector<8x128xf32>
    %187 = vector.extract_strided_slice %178 {offsets = [0, 128], sizes = [8, 128], strides = [1, 1]} : vector<8x384xf32> to vector<8x128xf32>
    %188 = vector.extract_strided_slice %175 {offsets = [0, 128], sizes = [8, 128], strides = [1, 1]} : vector<8x384xf32> to vector<8x128xf32>
    %189 = arith.addf %187, %188 : vector<8x128xf32>
    %190 = arith.negf %189 : vector<8x128xf32>
    %191 = math.exp %190 : vector<8x128xf32>
    %cst_61 = arith.constant 1.000000e+00 : f32
    %192 = vector.broadcast %cst_61 : f32 to vector<8x128xf32>
    %193 = arith.addf %192, %191 : vector<8x128xf32>
    %194 = arith.divf %192, %193 : vector<8x128xf32>
    %195 = vector.extract_strided_slice %178 {offsets = [0, 256], sizes = [8, 128], strides = [1, 1]} : vector<8x384xf32> to vector<8x128xf32>
    %196 = vector.extract_strided_slice %175 {offsets = [0, 256], sizes = [8, 128], strides = [1, 1]} : vector<8x384xf32> to vector<8x128xf32>
    %197 = arith.mulf %186, %196 : vector<8x128xf32>
    %198 = arith.addf %195, %197 : vector<8x128xf32>
    %199 = math.tanh %198 : vector<8x128xf32>
    %cst_62 = arith.constant 1.000000e+00 : f32
    %200 = vector.broadcast %cst_62 : f32 to vector<8x128xf32>
    %201 = arith.subf %200, %194 : vector<8x128xf32>
    %202 = arith.mulf %201, %199 : vector<8x128xf32>
    %203 = arith.mulf %194, %165 : vector<8x128xf32>
    %204 = arith.addf %202, %203 : vector<8x128xf32>
    %205 = arith.index_cast %c2_i32 : i32 to index
    %c0_63 = arith.constant 0 : index
    %c0_64 = arith.constant 0 : index
    %206 = vector.load %arg7[%205, %c0_63, %c0_64] : memref<8x8x128xf32, #tpu.memory_space<vmem>>, vector<1x8x128xf32>
    %207 = vector.shape_cast %206 : vector<1x8x128xf32> to vector<8x128xf32>
    %208 = vector.shape_cast %204 : vector<8x128xf32> to vector<1x8x128xf32>
    tpu.vector_store %arg7[%205, %c0_63, %c0_64], %208 {strides = array<i32>} : memref<8x8x128xf32, #tpu.memory_space<vmem>>, vector<1x8x128xf32>,
    %c3_i32 = arith.constant 3 : i32
    %cst_65 = arith.constant dense<0.000000e+00> : vector<8x768xf32>
    %209 = tpu.matmul %204, %86, %cst_65 {dimension_numbers = #tpu.dot_dimension_numbers<[1], [0], [0], [1], [0, 0, 1, 1], [], []>} : vector<8x128xf32>, vector<128x768xf32>, vector<8x768xf32> -> vector<8x768xf32>
    %210 = vector.broadcast %87 : vector<1x768xf32> to vector<8x768xf32>
    %211 = arith.addf %209, %210 : vector<8x768xf32>
    %212 = vector.extract_strided_slice %211 {offsets = [0, 0], sizes = [8, 384], strides = [1, 1]} : vector<8x768xf32> to vector<8x384xf32>
    %213 = vector.extract_strided_slice %211 {offsets = [0, 384], sizes = [8, 384], strides = [1, 1]} : vector<8x768xf32> to vector<8x384xf32>
    %214 = arith.select %90, %212, %213 : vector<8x384xi1>, vector<8x384xf32>
    %215 = arith.index_cast %c3_i32 : i32 to index
    %c0_66 = arith.constant 0 : index
    %c0_67 = arith.constant 0 : index
    %216 = vector.load %arg9[%215, %c0_66, %c0_67] : memref<8x8x384xf32, #tpu.memory_space<vmem>>, vector<1x8x384xf32>
    %217 = vector.shape_cast %216 : vector<1x8x384xf32> to vector<8x384xf32>
    %218 = vector.extract_strided_slice %217 {offsets = [0, 0], sizes = [8, 128], strides = [1, 1]} : vector<8x384xf32> to vector<8x128xf32>
    %219 = vector.extract_strided_slice %214 {offsets = [0, 0], sizes = [8, 128], strides = [1, 1]} : vector<8x384xf32> to vector<8x128xf32>
    %220 = arith.addf %218, %219 : vector<8x128xf32>
    %221 = arith.negf %220 : vector<8x128xf32>
    %222 = math.exp %221 : vector<8x128xf32>
    %cst_68 = arith.constant 1.000000e+00 : f32
    %223 = vector.broadcast %cst_68 : f32 to vector<8x128xf32>
    %224 = arith.addf %223, %222 : vector<8x128xf32>
    %225 = arith.divf %223, %224 : vector<8x128xf32>
    %226 = vector.extract_strided_slice %217 {offsets = [0, 128], sizes = [8, 128], strides = [1, 1]} : vector<8x384xf32> to vector<8x128xf32>
    %227 = vector.extract_strided_slice %214 {offsets = [0, 128], sizes = [8, 128], strides = [1, 1]} : vector<8x384xf32> to vector<8x128xf32>
    %228 = arith.addf %226, %227 : vector<8x128xf32>
    %229 = arith.negf %228 : vector<8x128xf32>
    %230 = math.exp %229 : vector<8x128xf32>
    %cst_69 = arith.constant 1.000000e+00 : f32
    %231 = vector.broadcast %cst_69 : f32 to vector<8x128xf32>
    %232 = arith.addf %231, %230 : vector<8x128xf32>
    %233 = arith.divf %231, %232 : vector<8x128xf32>
    %234 = vector.extract_strided_slice %217 {offsets = [0, 256], sizes = [8, 128], strides = [1, 1]} : vector<8x384xf32> to vector<8x128xf32>
    %235 = vector.extract_strided_slice %214 {offsets = [0, 256], sizes = [8, 128], strides = [1, 1]} : vector<8x384xf32> to vector<8x128xf32>
    %236 = arith.mulf %225, %235 : vector<8x128xf32>
    %237 = arith.addf %234, %236 : vector<8x128xf32>
    %238 = math.tanh %237 : vector<8x128xf32>
    %cst_70 = arith.constant 1.000000e+00 : f32
    %239 = vector.broadcast %cst_70 : f32 to vector<8x128xf32>
    %240 = arith.subf %239, %233 : vector<8x128xf32>
    %241 = arith.mulf %240, %238 : vector<8x128xf32>
    %242 = arith.mulf %233, %204 : vector<8x128xf32>
    %243 = arith.addf %241, %242 : vector<8x128xf32>
    %244 = arith.index_cast %c3_i32 : i32 to index
    %c0_71 = arith.constant 0 : index
    %c0_72 = arith.constant 0 : index
    %245 = vector.load %arg7[%244, %c0_71, %c0_72] : memref<8x8x128xf32, #tpu.memory_space<vmem>>, vector<1x8x128xf32>
    %246 = vector.shape_cast %245 : vector<1x8x128xf32> to vector<8x128xf32>
    %247 = vector.shape_cast %243 : vector<8x128xf32> to vector<1x8x128xf32>
    tpu.vector_store %arg7[%244, %c0_71, %c0_72], %247 {strides = array<i32>} : memref<8x8x128xf32, #tpu.memory_space<vmem>>, vector<1x8x128xf32>,
    %c4_i32_73 = arith.constant 4 : i32
    %cst_74 = arith.constant dense<0.000000e+00> : vector<8x768xf32>
    %248 = tpu.matmul %243, %86, %cst_74 {dimension_numbers = #tpu.dot_dimension_numbers<[1], [0], [0], [1], [0, 0, 1, 1], [], []>} : vector<8x128xf32>, vector<128x768xf32>, vector<8x768xf32> -> vector<8x768xf32>
    %249 = vector.broadcast %87 : vector<1x768xf32> to vector<8x768xf32>
    %250 = arith.addf %248, %249 : vector<8x768xf32>
    %251 = vector.extract_strided_slice %250 {offsets = [0, 0], sizes = [8, 384], strides = [1, 1]} : vector<8x768xf32> to vector<8x384xf32>
    %252 = vector.extract_strided_slice %250 {offsets = [0, 384], sizes = [8, 384], strides = [1, 1]} : vector<8x768xf32> to vector<8x384xf32>
    %253 = arith.select %90, %251, %252 : vector<8x384xi1>, vector<8x384xf32>
    %254 = arith.index_cast %c4_i32_73 : i32 to index
    %c0_75 = arith.constant 0 : index
    %c0_76 = arith.constant 0 : index
    %255 = vector.load %arg9[%254, %c0_75, %c0_76] : memref<8x8x384xf32, #tpu.memory_space<vmem>>, vector<1x8x384xf32>
    %256 = vector.shape_cast %255 : vector<1x8x384xf32> to vector<8x384xf32>
    %257 = vector.extract_strided_slice %256 {offsets = [0, 0], sizes = [8, 128], strides = [1, 1]} : vector<8x384xf32> to vector<8x128xf32>
    %258 = vector.extract_strided_slice %253 {offsets = [0, 0], sizes = [8, 128], strides = [1, 1]} : vector<8x384xf32> to vector<8x128xf32>
    %259 = arith.addf %257, %258 : vector<8x128xf32>
    %260 = arith.negf %259 : vector<8x128xf32>
    %261 = math.exp %260 : vector<8x128xf32>
    %cst_77 = arith.constant 1.000000e+00 : f32
    %262 = vector.broadcast %cst_77 : f32 to vector<8x128xf32>
    %263 = arith.addf %262, %261 : vector<8x128xf32>
    %264 = arith.divf %262, %263 : vector<8x128xf32>
    %265 = vector.extract_strided_slice %256 {offsets = [0, 128], sizes = [8, 128], strides = [1, 1]} : vector<8x384xf32> to vector<8x128xf32>
    %266 = vector.extract_strided_slice %253 {offsets = [0, 128], sizes = [8, 128], strides = [1, 1]} : vector<8x384xf32> to vector<8x128xf32>
    %267 = arith.addf %265, %266 : vector<8x128xf32>
    %268 = arith.negf %267 : vector<8x128xf32>
    %269 = math.exp %268 : vector<8x128xf32>
    %cst_78 = arith.constant 1.000000e+00 : f32
    %270 = vector.broadcast %cst_78 : f32 to vector<8x128xf32>
    %271 = arith.addf %270, %269 : vector<8x128xf32>
    %272 = arith.divf %270, %271 : vector<8x128xf32>
    %273 = vector.extract_strided_slice %256 {offsets = [0, 256], sizes = [8, 128], strides = [1, 1]} : vector<8x384xf32> to vector<8x128xf32>
    %274 = vector.extract_strided_slice %253 {offsets = [0, 256], sizes = [8, 128], strides = [1, 1]} : vector<8x384xf32> to vector<8x128xf32>
    %275 = arith.mulf %264, %274 : vector<8x128xf32>
    %276 = arith.addf %273, %275 : vector<8x128xf32>
    %277 = math.tanh %276 : vector<8x128xf32>
    %cst_79 = arith.constant 1.000000e+00 : f32
    %278 = vector.broadcast %cst_79 : f32 to vector<8x128xf32>
    %279 = arith.subf %278, %272 : vector<8x128xf32>
    %280 = arith.mulf %279, %277 : vector<8x128xf32>
    %281 = arith.mulf %272, %243 : vector<8x128xf32>
    %282 = arith.addf %280, %281 : vector<8x128xf32>
    %283 = arith.index_cast %c4_i32_73 : i32 to index
    %c0_80 = arith.constant 0 : index
    %c0_81 = arith.constant 0 : index
    %284 = vector.load %arg7[%283, %c0_80, %c0_81] : memref<8x8x128xf32, #tpu.memory_space<vmem>>, vector<1x8x128xf32>
    %285 = vector.shape_cast %284 : vector<1x8x128xf32> to vector<8x128xf32>
    %286 = vector.shape_cast %282 : vector<8x128xf32> to vector<1x8x128xf32>
    tpu.vector_store %arg7[%283, %c0_80, %c0_81], %286 {strides = array<i32>} : memref<8x8x128xf32, #tpu.memory_space<vmem>>, vector<1x8x128xf32>,
    %c5_i32 = arith.constant 5 : i32
    %cst_82 = arith.constant dense<0.000000e+00> : vector<8x768xf32>
    %287 = tpu.matmul %282, %86, %cst_82 {dimension_numbers = #tpu.dot_dimension_numbers<[1], [0], [0], [1], [0, 0, 1, 1], [], []>} : vector<8x128xf32>, vector<128x768xf32>, vector<8x768xf32> -> vector<8x768xf32>
    %288 = vector.broadcast %87 : vector<1x768xf32> to vector<8x768xf32>
    %289 = arith.addf %287, %288 : vector<8x768xf32>
    %290 = vector.extract_strided_slice %289 {offsets = [0, 0], sizes = [8, 384], strides = [1, 1]} : vector<8x768xf32> to vector<8x384xf32>
    %291 = vector.extract_strided_slice %289 {offsets = [0, 384], sizes = [8, 384], strides = [1, 1]} : vector<8x768xf32> to vector<8x384xf32>
    %292 = arith.select %90, %290, %291 : vector<8x384xi1>, vector<8x384xf32>
    %293 = arith.index_cast %c5_i32 : i32 to index
    %c0_83 = arith.constant 0 : index
    %c0_84 = arith.constant 0 : index
    %294 = vector.load %arg9[%293, %c0_83, %c0_84] : memref<8x8x384xf32, #tpu.memory_space<vmem>>, vector<1x8x384xf32>
    %295 = vector.shape_cast %294 : vector<1x8x384xf32> to vector<8x384xf32>
    %296 = vector.extract_strided_slice %295 {offsets = [0, 0], sizes = [8, 128], strides = [1, 1]} : vector<8x384xf32> to vector<8x128xf32>
    %297 = vector.extract_strided_slice %292 {offsets = [0, 0], sizes = [8, 128], strides = [1, 1]} : vector<8x384xf32> to vector<8x128xf32>
    %298 = arith.addf %296, %297 : vector<8x128xf32>
    %299 = arith.negf %298 : vector<8x128xf32>
    %300 = math.exp %299 : vector<8x128xf32>
    %cst_85 = arith.constant 1.000000e+00 : f32
    %301 = vector.broadcast %cst_85 : f32 to vector<8x128xf32>
    %302 = arith.addf %301, %300 : vector<8x128xf32>
    %303 = arith.divf %301, %302 : vector<8x128xf32>
    %304 = vector.extract_strided_slice %295 {offsets = [0, 128], sizes = [8, 128], strides = [1, 1]} : vector<8x384xf32> to vector<8x128xf32>
    %305 = vector.extract_strided_slice %292 {offsets = [0, 128], sizes = [8, 128], strides = [1, 1]} : vector<8x384xf32> to vector<8x128xf32>
    %306 = arith.addf %304, %305 : vector<8x128xf32>
    %307 = arith.negf %306 : vector<8x128xf32>
    %308 = math.exp %307 : vector<8x128xf32>
    %cst_86 = arith.constant 1.000000e+00 : f32
    %309 = vector.broadcast %cst_86 : f32 to vector<8x128xf32>
    %310 = arith.addf %309, %308 : vector<8x128xf32>
    %311 = arith.divf %309, %310 : vector<8x128xf32>
    %312 = vector.extract_strided_slice %295 {offsets = [0, 256], sizes = [8, 128], strides = [1, 1]} : vector<8x384xf32> to vector<8x128xf32>
    %313 = vector.extract_strided_slice %292 {offsets = [0, 256], sizes = [8, 128], strides = [1, 1]} : vector<8x384xf32> to vector<8x128xf32>
    %314 = arith.mulf %303, %313 : vector<8x128xf32>
    %315 = arith.addf %312, %314 : vector<8x128xf32>
    %316 = math.tanh %315 : vector<8x128xf32>
    %cst_87 = arith.constant 1.000000e+00 : f32
    %317 = vector.broadcast %cst_87 : f32 to vector<8x128xf32>
    %318 = arith.subf %317, %311 : vector<8x128xf32>
    %319 = arith.mulf %318, %316 : vector<8x128xf32>
    %320 = arith.mulf %311, %282 : vector<8x128xf32>
    %321 = arith.addf %319, %320 : vector<8x128xf32>
    %322 = arith.index_cast %c5_i32 : i32 to index
    %c0_88 = arith.constant 0 : index
    %c0_89 = arith.constant 0 : index
    %323 = vector.load %arg7[%322, %c0_88, %c0_89] : memref<8x8x128xf32, #tpu.memory_space<vmem>>, vector<1x8x128xf32>
    %324 = vector.shape_cast %323 : vector<1x8x128xf32> to vector<8x128xf32>
    %325 = vector.shape_cast %321 : vector<8x128xf32> to vector<1x8x128xf32>
    tpu.vector_store %arg7[%322, %c0_88, %c0_89], %325 {strides = array<i32>} : memref<8x8x128xf32, #tpu.memory_space<vmem>>, vector<1x8x128xf32>,
    %c6_i32 = arith.constant 6 : i32
    %cst_90 = arith.constant dense<0.000000e+00> : vector<8x768xf32>
    %326 = tpu.matmul %321, %86, %cst_90 {dimension_numbers = #tpu.dot_dimension_numbers<[1], [0], [0], [1], [0, 0, 1, 1], [], []>} : vector<8x128xf32>, vector<128x768xf32>, vector<8x768xf32> -> vector<8x768xf32>
    %327 = vector.broadcast %87 : vector<1x768xf32> to vector<8x768xf32>
    %328 = arith.addf %326, %327 : vector<8x768xf32>
    %329 = vector.extract_strided_slice %328 {offsets = [0, 0], sizes = [8, 384], strides = [1, 1]} : vector<8x768xf32> to vector<8x384xf32>
    %330 = vector.extract_strided_slice %328 {offsets = [0, 384], sizes = [8, 384], strides = [1, 1]} : vector<8x768xf32> to vector<8x384xf32>
    %331 = arith.select %90, %329, %330 : vector<8x384xi1>, vector<8x384xf32>
    %332 = arith.index_cast %c6_i32 : i32 to index
    %c0_91 = arith.constant 0 : index
    %c0_92 = arith.constant 0 : index
    %333 = vector.load %arg9[%332, %c0_91, %c0_92] : memref<8x8x384xf32, #tpu.memory_space<vmem>>, vector<1x8x384xf32>
    %334 = vector.shape_cast %333 : vector<1x8x384xf32> to vector<8x384xf32>
    %335 = vector.extract_strided_slice %334 {offsets = [0, 0], sizes = [8, 128], strides = [1, 1]} : vector<8x384xf32> to vector<8x128xf32>
    %336 = vector.extract_strided_slice %331 {offsets = [0, 0], sizes = [8, 128], strides = [1, 1]} : vector<8x384xf32> to vector<8x128xf32>
    %337 = arith.addf %335, %336 : vector<8x128xf32>
    %338 = arith.negf %337 : vector<8x128xf32>
    %339 = math.exp %338 : vector<8x128xf32>
    %cst_93 = arith.constant 1.000000e+00 : f32
    %340 = vector.broadcast %cst_93 : f32 to vector<8x128xf32>
    %341 = arith.addf %340, %339 : vector<8x128xf32>
    %342 = arith.divf %340, %341 : vector<8x128xf32>
    %343 = vector.extract_strided_slice %334 {offsets = [0, 128], sizes = [8, 128], strides = [1, 1]} : vector<8x384xf32> to vector<8x128xf32>
    %344 = vector.extract_strided_slice %331 {offsets = [0, 128], sizes = [8, 128], strides = [1, 1]} : vector<8x384xf32> to vector<8x128xf32>
    %345 = arith.addf %343, %344 : vector<8x128xf32>
    %346 = arith.negf %345 : vector<8x128xf32>
    %347 = math.exp %346 : vector<8x128xf32>
    %cst_94 = arith.constant 1.000000e+00 : f32
    %348 = vector.broadcast %cst_94 : f32 to vector<8x128xf32>
    %349 = arith.addf %348, %347 : vector<8x128xf32>
    %350 = arith.divf %348, %349 : vector<8x128xf32>
    %351 = vector.extract_strided_slice %334 {offsets = [0, 256], sizes = [8, 128], strides = [1, 1]} : vector<8x384xf32> to vector<8x128xf32>
    %352 = vector.extract_strided_slice %331 {offsets = [0, 256], sizes = [8, 128], strides = [1, 1]} : vector<8x384xf32> to vector<8x128xf32>
    %353 = arith.mulf %342, %352 : vector<8x128xf32>
    %354 = arith.addf %351, %353 : vector<8x128xf32>
    %355 = math.tanh %354 : vector<8x128xf32>
    %cst_95 = arith.constant 1.000000e+00 : f32
    %356 = vector.broadcast %cst_95 : f32 to vector<8x128xf32>
    %357 = arith.subf %356, %350 : vector<8x128xf32>
    %358 = arith.mulf %357, %355 : vector<8x128xf32>
    %359 = arith.mulf %350, %321 : vector<8x128xf32>
    %360 = arith.addf %358, %359 : vector<8x128xf32>
    %361 = arith.index_cast %c6_i32 : i32 to index
    %c0_96 = arith.constant 0 : index
    %c0_97 = arith.constant 0 : index
    %362 = vector.load %arg7[%361, %c0_96, %c0_97] : memref<8x8x128xf32, #tpu.memory_space<vmem>>, vector<1x8x128xf32>
    %363 = vector.shape_cast %362 : vector<1x8x128xf32> to vector<8x128xf32>
    %364 = vector.shape_cast %360 : vector<8x128xf32> to vector<1x8x128xf32>
    tpu.vector_store %arg7[%361, %c0_96, %c0_97], %364 {strides = array<i32>} : memref<8x8x128xf32, #tpu.memory_space<vmem>>, vector<1x8x128xf32>,
    %c7_i32 = arith.constant 7 : i32
    %cst_98 = arith.constant dense<0.000000e+00> : vector<8x768xf32>
    %365 = tpu.matmul %360, %86, %cst_98 {dimension_numbers = #tpu.dot_dimension_numbers<[1], [0], [0], [1], [0, 0, 1, 1], [], []>} : vector<8x128xf32>, vector<128x768xf32>, vector<8x768xf32> -> vector<8x768xf32>
    %366 = vector.broadcast %87 : vector<1x768xf32> to vector<8x768xf32>
    %367 = arith.addf %365, %366 : vector<8x768xf32>
    %368 = vector.extract_strided_slice %367 {offsets = [0, 0], sizes = [8, 384], strides = [1, 1]} : vector<8x768xf32> to vector<8x384xf32>
    %369 = vector.extract_strided_slice %367 {offsets = [0, 384], sizes = [8, 384], strides = [1, 1]} : vector<8x768xf32> to vector<8x384xf32>
    %370 = arith.select %90, %368, %369 : vector<8x384xi1>, vector<8x384xf32>
    %371 = arith.index_cast %c7_i32 : i32 to index
    %c0_99 = arith.constant 0 : index
    %c0_100 = arith.constant 0 : index
    %372 = vector.load %arg9[%371, %c0_99, %c0_100] : memref<8x8x384xf32, #tpu.memory_space<vmem>>, vector<1x8x384xf32>
    %373 = vector.shape_cast %372 : vector<1x8x384xf32> to vector<8x384xf32>
    %374 = vector.extract_strided_slice %373 {offsets = [0, 0], sizes = [8, 128], strides = [1, 1]} : vector<8x384xf32> to vector<8x128xf32>
    %375 = vector.extract_strided_slice %370 {offsets = [0, 0], sizes = [8, 128], strides = [1, 1]} : vector<8x384xf32> to vector<8x128xf32>
    %376 = arith.addf %374, %375 : vector<8x128xf32>
    %377 = arith.negf %376 : vector<8x128xf32>
    %378 = math.exp %377 : vector<8x128xf32>
    %cst_101 = arith.constant 1.000000e+00 : f32
    %379 = vector.broadcast %cst_101 : f32 to vector<8x128xf32>
    %380 = arith.addf %379, %378 : vector<8x128xf32>
    %381 = arith.divf %379, %380 : vector<8x128xf32>
    %382 = vector.extract_strided_slice %373 {offsets = [0, 128], sizes = [8, 128], strides = [1, 1]} : vector<8x384xf32> to vector<8x128xf32>
    %383 = vector.extract_strided_slice %370 {offsets = [0, 128], sizes = [8, 128], strides = [1, 1]} : vector<8x384xf32> to vector<8x128xf32>
    %384 = arith.addf %382, %383 : vector<8x128xf32>
    %385 = arith.negf %384 : vector<8x128xf32>
    %386 = math.exp %385 : vector<8x128xf32>
    %cst_102 = arith.constant 1.000000e+00 : f32
    %387 = vector.broadcast %cst_102 : f32 to vector<8x128xf32>
    %388 = arith.addf %387, %386 : vector<8x128xf32>
    %389 = arith.divf %387, %388 : vector<8x128xf32>
    %390 = vector.extract_strided_slice %373 {offsets = [0, 256], sizes = [8, 128], strides = [1, 1]} : vector<8x384xf32> to vector<8x128xf32>
    %391 = vector.extract_strided_slice %370 {offsets = [0, 256], sizes = [8, 128], strides = [1, 1]} : vector<8x384xf32> to vector<8x128xf32>
    %392 = arith.mulf %381, %391 : vector<8x128xf32>
    %393 = arith.addf %390, %392 : vector<8x128xf32>
    %394 = math.tanh %393 : vector<8x128xf32>
    %cst_103 = arith.constant 1.000000e+00 : f32
    %395 = vector.broadcast %cst_103 : f32 to vector<8x128xf32>
    %396 = arith.subf %395, %389 : vector<8x128xf32>
    %397 = arith.mulf %396, %394 : vector<8x128xf32>
    %398 = arith.mulf %389, %360 : vector<8x128xf32>
    %399 = arith.addf %397, %398 : vector<8x128xf32>
    %400 = arith.index_cast %c7_i32 : i32 to index
    %c0_104 = arith.constant 0 : index
    %c0_105 = arith.constant 0 : index
    %401 = vector.load %arg7[%400, %c0_104, %c0_105] : memref<8x8x128xf32, #tpu.memory_space<vmem>>, vector<1x8x128xf32>
    %402 = vector.shape_cast %401 : vector<1x8x128xf32> to vector<8x128xf32>
    %403 = vector.shape_cast %399 : vector<8x128xf32> to vector<1x8x128xf32>
    tpu.vector_store %arg7[%400, %c0_104, %c0_105], %403 {strides = array<i32>} : memref<8x8x128xf32, #tpu.memory_space<vmem>>, vector<1x8x128xf32>,
    %c8_i32 = arith.constant 8 : i32
    %c0_106 = arith.constant 0 : index
    %c0_107 = arith.constant 0 : index
    %404 = vector.load %arg8[%c0_106, %c0_107] : memref<8x128xf32, #tpu.memory_space<vmem>>, vector<8x128xf32>
    tpu.vector_store %arg8[%c0_106, %c0_107], %399 {strides = array<i32>} : memref<8x128xf32, #tpu.memory_space<vmem>>, vector<8x128xf32>,
    return
  }
  func.func @transform_0(%arg0: i32) -> (i32, i32, i32) {
    %c0_i32 = arith.constant 0 : i32
    %c0_i32_0 = arith.constant 0 : i32
    %c0_i32_1 = arith.constant 0 : i32
    %c0_i32_2 = arith.constant 0 : i32
    return %c0_i32, %c0_i32_0, %c0_i32_1 : i32, i32, i32
  }
  func.func @transform_1(%arg0: i32) -> (i32, i32) {
    %c0_i32 = arith.constant 0 : i32
    %c0_i32_0 = arith.constant 0 : i32
    %c0_i32_1 = arith.constant 0 : i32
    return %c0_i32, %c0_i32_0 : i32, i32
  }
  func.func @transform_2(%arg0: i32) -> (i32, i32) {
    %c0_i32 = arith.constant 0 : i32
    %c0_i32_0 = arith.constant 0 : i32
    %c0_i32_1 = arith.constant 0 : i32
    return %c0_i32, %c0_i32_0 : i32, i32
  }
  func.func @transform_3(%arg0: i32) -> (i32, i32) {
    %c0_i32 = arith.constant 0 : i32
    %c0_i32_0 = arith.constant 0 : i32
    %c0_i32_1 = arith.constant 0 : i32
    return %c0_i32, %c0_i32_0 : i32, i32
  }
  func.func @transform_4(%arg0: i32) -> (i32, i32) {
    %c0_i32 = arith.constant 0 : i32
    %c0_i32_0 = arith.constant 0 : i32
    %c0_i32_1 = arith.constant 0 : i32
    return %c0_i32, %c0_i32_0 : i32, i32
  }
  func.func @transform_5(%arg0: i32) -> (i32, i32) {
    %c0_i32 = arith.constant 0 : i32
    %c0_i32_0 = arith.constant 0 : i32
    %c0_i32_1 = arith.constant 0 : i32
    return %c0_i32, %c0_i32_0 : i32, i32
  }
  func.func @transform_6(%arg0: i32) -> (i32, i32, i32) {
    %c0_i32 = arith.constant 0 : i32
    %c0_i32_0 = arith.constant 0 : i32
    %c0_i32_1 = arith.constant 0 : i32
    %c0_i32_2 = arith.constant 0 : i32
    return %c0_i32, %c0_i32_0, %c0_i32_1 : i32, i32, i32
  }
  func.func @transform_7(%arg0: i32) -> (i32, i32) {
    %c0_i32 = arith.constant 0 : i32
    %c0_i32_0 = arith.constant 0 : i32
    %c0_i32_1 = arith.constant 0 : i32
    return %c0_i32, %c0_i32_0 : i32, i32
  }
}

</mosaic_0001>

<llo_original>
// kernel: tpu_custom_call.1
$region0: #{tpu_custom_call.1}
  #allocation0 [shape = 'u32[]', space=smem, size = 0x4, offset = 0x4, fixed_abs, tag = 'smem constant byte address 0x4 - core index']
  #allocation1 [shape = 'u32[144,128]{1,0:T(1,128)}', space=vmem, size = 0x12000, scoped, tag = 'internal scratch']
  #allocation2 [shape = 'f32[8,8,384]{2,1,0:T(8,128)}', space=vmem, size = 0x18000, scoped, tag = 'scratch operand']
  %s0 = inlined_call_operand.hbm [shape: f32[4,8,100], index: 0, kind: input, shape index: {}]
  %s1 = inlined_call_operand.hbm [shape: f32[100,768], index: 1, kind: input, shape index: {}]
  %s2 = inlined_call_operand.hbm [shape: f32[128,768], index: 2, kind: input, shape index: {}]
  %s3 = inlined_call_operand.hbm [shape: f32[1,768], index: 3, kind: input, shape index: {}]
  %s4 = inlined_call_operand.hbm [shape: f32[1,768], index: 4, kind: input, shape index: {}]
  %s5 = inlined_call_operand.vmem [shape: f32[8,128], index: 5, kind: input, shape index: {}]
  %s6 = inlined_call_operand.hbm [shape: f32[8,8,128], index: 6, kind: output, shape index: {0}]
  %s7 = inlined_call_operand.hbm [shape: f32[8,128], index: 7, kind: output, shape index: {1}]
  %8 = xla_tuple %s6, %s7
  %s9 = sld [smem:[#allocation0]]
  $region62: #{tpu_custom_call.1} parent=0
    _
  %s11 = ssub.s32 1, %s9
  %s12 = scalar_select 0, %s11, %s9
  $region1: #{tpu_custom_call.1} parent=0
    #allocation3 [shape = 'u8[16384]{0}', space=vmem, size = 0x4000, scoped, tag = 'input window, operand 0, single buffered']
    #allocation4 [shape = 's32[1]{0}', space=sflag, size = 0x4, scoped, tag = 'scoped memory for tpu_custom_call.1']
    #allocation5 [shape = 's32[1]{0}', space=sflag, size = 0x4, scoped, tag = 'scoped memory for tpu_custom_call.1']
    #allocation6 [shape = 'u8[319488]{0}', space=vmem, size = 0x4e000, scoped, tag = 'input window, operand 1, single buffered']
    #allocation7 [shape = 's32[1]{0}', space=sflag, size = 0x4, scoped, tag = 'scoped memory for tpu_custom_call.1']
    #allocation8 [shape = 'u8[393216]{0}', space=vmem, size = 0x60000, scoped, tag = 'input window, operand 2, single buffered']
    #allocation9 [shape = 'u8[3072]{0}', space=vmem, size = 0xc00, scoped, tag = 'input window, operand 3, single buffered']
    #allocation10 [shape = 's32[1]{0}', space=sflag, size = 0x4, scoped, tag = 'scoped memory for tpu_custom_call.1']
    #allocation11 [shape = 'u8[3072]{0}', space=vmem, size = 0xc00, scoped, tag = 'input window, operand 4, single buffered']
    #allocation12 [shape = 'u8[32768]{0}', space=vmem, size = 0x8000, scoped, tag = 'output window, operand 0, single buffered']
    #allocation13 [shape = 'u8[4096]{0}', space=vmem, size = 0x1000, scoped, tag = 'output window, operand 1, single buffered']
    #allocation14 [shape = 's32[1]{0}', space=sflag, size = 0x4, scoped, tag = 'scoped memory for tpu_custom_call.1']
    %13 = vsyncpa [#allocation4], 0
    %14 = vsyncpa [#allocation7], 0
    %15 = vsyncpa [#allocation10], 0
    %16 = vsyncpa [#allocation5], 0
    %17 = vsyncpa [#allocation14], 0
    // Predicated region
    $region2: #{tpu_custom_call.1} parent=1 // pred_check
      _
    $region3: #{tpu_custom_call.1} parent=1 // pred_check_branch
      %19 = sbr.rel (0) target = $region5
    $region4: #{tpu_custom_call.1} parent=1 // pred_region
      %s21 = ssub.s32 512, 512
      %22 = vsyncadd [#allocation4], %s21
      %s23 = sshll.u32 [#allocation3], 4
      %s24 = int_to_ptr.vmem [resolvable:$true] %s23
      %29 = dma.hbm_to_vmem [thread:$0]  %s0, 512, %s24, [#allocation4], 128, 128, 8
    $region5: #{tpu_custom_call.1} parent=1 // pred_fallthru
      _
    // Predicated region
    $region6: #{tpu_custom_call.1} parent=1 // pred_check
      _
    $region7: #{tpu_custom_call.1} parent=1 // pred_check_branch
      %31 = sbr.rel (0) target = $region9
    $region8: #{tpu_custom_call.1} parent=1 // pred_region
      %s33 = ssub.s32 9984, 9984
      %34 = vsyncadd [#allocation7], %s33
      %s35 = sshll.u32 [#allocation6], 4
      %s36 = int_to_ptr.vmem [resolvable:$true] %s35
      %41 = dma.hbm_to_vmem [thread:$0]  %s1, 9984, %s36, [#allocation7], 768, 768, 48
    $region9: #{tpu_custom_call.1} parent=1 // pred_fallthru
      _
    // Predicated region
    $region10: #{tpu_custom_call.1} parent=1 // pred_check
      _
    $region11: #{tpu_custom_call.1} parent=1 // pred_check_branch
      %43 = sbr.rel (0) target = $region13
    $region12: #{tpu_custom_call.1} parent=1 // pred_region
      %s45 = ssub.s32 12288, 12288
      %46 = vsyncadd [#allocation7], %s45
      %s47 = sshll.u32 [#allocation8], 4
      %s48 = int_to_ptr.vmem [resolvable:$true] %s47
      %53 = dma.hbm_to_vmem [thread:$0]  %s2, 12288, %s48, [#allocation7], 768, 768, 48
    $region13: #{tpu_custom_call.1} parent=1 // pred_fallthru
      _
    // Predicated region
    $region14: #{tpu_custom_call.1} parent=1 // pred_check
      _
    $region15: #{tpu_custom_call.1} parent=1 // pred_check_branch
      %55 = sbr.rel (0) target = $region17
    $region16: #{tpu_custom_call.1} parent=1 // pred_region
      %s57 = ssub.s32 96, 96
      %58 = vsyncadd [#allocation10], %s57
      %s60 = sshll.u32 [#allocation9], 4
      %s61 = int_to_ptr.vmem [resolvable:$true] %s60
      %63 = dma.hbm_to_vmem [thread:$0]  %s3, 96, %s61, [#allocation10]
    $region17: #{tpu_custom_call.1} parent=1 // pred_fallthru
      _
    // Predicated region
    $region18: #{tpu_custom_call.1} parent=1 // pred_check
      _
    $region19: #{tpu_custom_call.1} parent=1 // pred_check_branch
      %65 = sbr.rel (0) target = $region21
    $region20: #{tpu_custom_call.1} parent=1 // pred_region
      %s67 = ssub.s32 96, 96
      %68 = vsyncadd [#allocation10], %s67
      %s70 = sshll.u32 [#allocation11], 4
      %s71 = int_to_ptr.vmem [resolvable:$true] %s70
      %73 = dma.hbm_to_vmem [thread:$0]  %s4, 96, %s71, [#allocation10]
    $region21: #{tpu_custom_call.1} parent=1 // pred_fallthru
      _
    // Predicated region
    $region22: #{tpu_custom_call.1} parent=1 // pred_check
      _
    $region23: #{tpu_custom_call.1} parent=1 // pred_check_branch
      %75 = sbr.rel (0) target = $region25
    $region24: #{tpu_custom_call.1} parent=1 // pred_region
      _
    $region25: #{tpu_custom_call.1} parent=1 // pred_fallthru
      _
    // Predicated region
    $region26: #{tpu_custom_call.1} parent=1 // pred_check
      _
    $region27: #{tpu_custom_call.1} parent=1 // pred_check_branch
      %77 = sbr.rel (0) target = $region29
    $region28: #{tpu_custom_call.1} parent=1 // pred_region
      %78 = dma.done [#allocation4], 512
    $region29: #{tpu_custom_call.1} parent=1 // pred_fallthru
      _
    // Predicated region
    $region30: #{tpu_custom_call.1} parent=1 // pred_check
      _
    $region31: #{tpu_custom_call.1} parent=1 // pred_check_branch
      %80 = sbr.rel (0) target = $region33
    $region32: #{tpu_custom_call.1} parent=1 // pred_region
      %81 = dma.done [#allocation7], 9984
    $region33: #{tpu_custom_call.1} parent=1 // pred_fallthru
      _
    // Predicated region
    $region34: #{tpu_custom_call.1} parent=1 // pred_check
      _
    $region35: #{tpu_custom_call.1} parent=1 // pred_check_branch
      %83 = sbr.rel (0) target = $region37
    $region36: #{tpu_custom_call.1} parent=1 // pred_region
      %84 = dma.done [#allocation7], 12288
    $region37: #{tpu_custom_call.1} parent=1 // pred_fallthru
      _
    // Predicated region
    $region38: #{tpu_custom_call.1} parent=1 // pred_check
      _
    $region39: #{tpu_custom_call.1} parent=1 // pred_check_branch
      %86 = sbr.rel (0) target = $region41
    $region40: #{tpu_custom_call.1} parent=1 // pred_region
      %87 = dma.done [#allocation10], 96
    $region41: #{tpu_custom_call.1} parent=1 // pred_fallthru
      _
    // Predicated region
    $region42: #{tpu_custom_call.1} parent=1 // pred_check
      _
    $region43: #{tpu_custom_call.1} parent=1 // pred_check_branch
      %89 = sbr.rel (0) target = $region45
    $region44: #{tpu_custom_call.1} parent=1 // pred_region
      %90 = dma.done [#allocation10], 96
    $region45: #{tpu_custom_call.1} parent=1 // pred_fallthru
      _
    %v91 = vld [vmem:[#allocation6] sm:$0xff]
    %v92 = vld [vmem:[#allocation6 + $0x8] sm:$0xff]
    %v93 = vld [vmem:[#allocation6 + $0x10] sm:$0xff]
    %v94 = vld [vmem:[#allocation6 + $0x18] sm:$0xff]
    %v95 = vld [vmem:[#allocation6 + $0x20] sm:$0xff]
    %v96 = vld [vmem:[#allocation6 + $0x28] sm:$0xff]
    %v97 = vld [vmem:[#allocation6 + $0x30] sm:$0xff]
    %v98 = vld [vmem:[#allocation6 + $0x38] sm:$0xff]
    %v99 = vld [vmem:[#allocation6 + $0x40] sm:$0xff]
    %v100 = vld [vmem:[#allocation6 + $0x48] sm:$0xff]
    %v101 = vld [vmem:[#allocation6 + $0x50] sm:$0xff]
    %v102 = vld [vmem:[#allocation6 + $0x58] sm:$0xff]
    %v103 = vld [vmem:[#allocation6 + $0x60] sm:$0xff]
    %v104 = vld [vmem:[#allocation6 + $0x68] sm:$0xff]
    %v105 = vld [vmem:[#allocation6 + $0x70] sm:$0xff]
    %v106 = vld [vmem:[#allocation6 + $0x78] sm:$0xff]
    %v107 = vld [vmem:[#allocation6 + $0x80] sm:$0xff]
    %v108 = vld [vmem:[#allocation6 + $0x88] sm:$0xff]
    %v109 = vld [vmem:[#allocation6 + $0x90] sm:$0xff]
    %v110 = vld [vmem:[#allocation6 + $0x98] sm:$0xff]
    %v111 = vld [vmem:[#allocation6 + $0xa0] sm:$0xff]
    %v112 = vld [vmem:[#allocation6 + $0xa8] sm:$0xff]
    %v113 = vld [vmem:[#allocation6 + $0xb0] sm:$0xff]
    %v114 = vld [vmem:[#allocation6 + $0xb8] sm:$0xff]
    %v115 = vld [vmem:[#allocation6 + $0xc0] sm:$0xff]
    %v116 = vld [vmem:[#allocation6 + $0xc8] sm:$0xff]
    %v117 = vld [vmem:[#allocation6 + $0xd0] sm:$0xff]
    %v118 = vld [vmem:[#allocation6 + $0xd8] sm:$0xff]
    %v119 = vld [vmem:[#allocation6 + $0xe0] sm:$0xff]
    %v120 = vld [vmem:[#allocation6 + $0xe8] sm:$0xff]
    %v121 = vld [vmem:[#allocation6 + $0xf0] sm:$0xff]
    %v122 = vld [vmem:[#allocation6 + $0xf8] sm:$0xff]
    %v123 = vld [vmem:[#allocation6 + $0x100] sm:$0xff]
    %v124 = vld [vmem:[#allocation6 + $0x108] sm:$0xff]
    %v125 = vld [vmem:[#allocation6 + $0x110] sm:$0xff]
    %v126 = vld [vmem:[#allocation6 + $0x118] sm:$0xff]
    %v127 = vld [vmem:[#allocation6 + $0x120] sm:$0xff]
    %v128 = vld [vmem:[#allocation6 + $0x128] sm:$0xff]
    %v129 = vld [vmem:[#allocation6 + $0x130] sm:$0xff]
    %v130 = vld [vmem:[#allocation6 + $0x138] sm:$0xff]
    %v131 = vld [vmem:[#allocation6 + $0x140] sm:$0xff]
    %v132 = vld [vmem:[#allocation6 + $0x148] sm:$0xff]
    %v133 = vld [vmem:[#allocation6 + $0x150] sm:$0xff]
    %v134 = vld [vmem:[#allocation6 + $0x158] sm:$0xff]
    %v135 = vld [vmem:[#allocation6 + $0x160] sm:$0xff]
    %v136 = vld [vmem:[#allocation6 + $0x168] sm:$0xff]
    %v137 = vld [vmem:[#allocation6 + $0x170] sm:$0xff]
    %v138 = vld [vmem:[#allocation6 + $0x178] sm:$0xff]
    %v139 = vld [vmem:[#allocation6 + $0x180] sm:$0xff]
    %v140 = vld [vmem:[#allocation6 + $0x188] sm:$0xff]
    %v141 = vld [vmem:[#allocation6 + $0x190] sm:$0xff]
    %v142 = vld [vmem:[#allocation6 + $0x198] sm:$0xff]
    %v143 = vld [vmem:[#allocation6 + $0x1a0] sm:$0xff]
    %v144 = vld [vmem:[#allocation6 + $0x1a8] sm:$0xff]
    %v145 = vld [vmem:[#allocation6 + $0x1b0] sm:$0xff]
    %v146 = vld [vmem:[#allocation6 + $0x1b8] sm:$0xff]
    %v147 = vld [vmem:[#allocation6 + $0x1c0] sm:$0xff]
    %v148 = vld [vmem:[#allocation6 + $0x1c8] sm:$0xff]
    %v149 = vld [vmem:[#allocation6 + $0x1d0] sm:$0xff]
    %v150 = vld [vmem:[#allocation6 + $0x1d8] sm:$0xff]
    %v151 = vld [vmem:[#allocation6 + $0x1e0] sm:$0xff]
    %v152 = vld [vmem:[#allocation6 + $0x1e8] sm:$0xff]
    %v153 = vld [vmem:[#allocation6 + $0x1f0] sm:$0xff]
    %v154 = vld [vmem:[#allocation6 + $0x1f8] sm:$0xff]
    %v155 = vld [vmem:[#allocation6 + $0x200] sm:$0xff]
    %v156 = vld [vmem:[#allocation6 + $0x208] sm:$0xff]
    %v157 = vld [vmem:[#allocation6 + $0x210] sm:$0xff]
    %v158 = vld [vmem:[#allocation6 + $0x218] sm:$0xff]
    %v159 = vld [vmem:[#allocation6 + $0x220] sm:$0xff]
    %v160 = vld [vmem:[#allocation6 + $0x228] sm:$0xff]
    %v161 = vld [vmem:[#allocation6 + $0x230] sm:$0xff]
    %v162 = vld [vmem:[#allocation6 + $0x238] sm:$0xff]
    %v163 = vld [vmem:[#allocation6 + $0x240] sm:$0xf]
    %v164 = vld [vmem:[#allocation6 + $0x248] sm:$0xf]
    %v165 = vld [vmem:[#allocation6 + $0x250] sm:$0xf]
    %v166 = vld [vmem:[#allocation6 + $0x258] sm:$0xf]
    %v167 = vld [vmem:[#allocation6 + $0x260] sm:$0xf]
    %v168 = vld [vmem:[#allocation6 + $0x268] sm:$0xf]
    %v169 = vld [vmem:[#allocation9] sm:$0x3f]
    %v170 = vld [vmem:[#allocation3] sm:$0xff]
    %v172 = vlaneseq
    %v173 = vshrl.u32 %v172, 7
    %v174 = vsub.s32 0, %v173
    %v175 = vrot.slane %v169, %v174
    %v176 = vlaneseq
    %v177 = vshrl.u32 %v176, 7
    %v178 = vsub.s32 1, %v177
    %v179 = vrot.slane %v169, %v178
    %v180 = vlaneseq
    %v181 = vshrl.u32 %v180, 7
    %v182 = vsub.s32 2, %v181
    %v183 = vrot.slane %v169, %v182
    %v184 = vlaneseq
    %v185 = vshrl.u32 %v184, 7
    %v186 = vsub.s32 3, %v185
    %v187 = vrot.slane %v169, %v186
    %v188 = vlaneseq
    %v189 = vshrl.u32 %v188, 7
    %v190 = vsub.s32 4, %v189
    %v191 = vrot.slane %v169, %v190
    %v192 = vlaneseq
    %v193 = vshrl.u32 %v192, 7
    %v194 = vsub.s32 5, %v193
    %v195 = vrot.slane %v169, %v194
    %vm202 = vcmask 818176
    %v204 = vsel %vm202, %v170, 0
    %vm206 = vcmask 1043456
    %v208 = vsel %vm206, %v163, 0
    %v211 = vsel %vm206, %v164, 0
    %v214 = vsel %vm206, %v165, 0
    %v217 = vsel %vm206, %v166, 0
    %v220 = vsel %vm206, %v167, 0
    %v223 = vsel %vm206, %v168, 0
    %225 = vmatprep.subr.mxu0 0.0
    %226 = vmatpush1.msra.mxu0 0.0
    %227 = vmatprep.subr.mxu0 0.0
    %228 = vmatpush1.msra.mxu0 0.0
    %229 = vmatprep.subr.mxu0 0.0
    %230 = vmatpush1.msra.mxu0 0.0
    %231 = vmatprep.subr.mxu0 %v211
    %232 = vmatpush1.msra.mxu0 %v208
    %233 = vmatprep.subr.mxu0 %v158
    %234 = vmatpush1.msra.mxu0 %v157
    %235 = vmatprep.subr.mxu0 %v152
    %236 = vmatpush1.msra.mxu0 %v151
    %237 = vmatprep.subr.mxu0 %v146
    %238 = vmatpush1.msra.mxu0 %v145
    %239 = vmatprep.subr.mxu0 %v140
    %240 = vmatpush1.msra.mxu0 %v139
    %241 = vmatprep.subr.mxu0 %v134
    %242 = vmatpush1.msra.mxu0 %v133
    %243 = vmatprep.subr.mxu0 %v128
    %244 = vmatpush1.msra.mxu0 %v127
    %245 = vmatprep.subr.mxu0 %v122
    %246 = vmatpush1.msra.mxu0 %v121
    %247 = vmatprep.subr.mxu0 %v116
    %248 = vmatpush1.msra.mxu0 %v115
    %249 = vmatprep.subr.mxu0 %v110
    %250 = vmatpush1.msra.mxu0 %v109
    %251 = vmatprep.subr.mxu0 %v104
    %252 = vmatpush1.msra.mxu0 %v103
    %253 = vmatprep.subr.mxu0 %v98
    %254 = vmatpush1.msra.mxu0 %v97
    %255 = vmatprep.subr.mxu0 %v92
    %256 = vmatpush1.msra.mxu0 %v91
    %257 = vmatprep.subr.mxu0 0.0
    %258 = vmatpush2.msra.mxu0 0.0
    %259 = vmatprep.subr.mxu0 0.0
    %260 = vmatpush2.msra.mxu0 0.0
    %261 = vmatprep.subr.mxu0 0.0
    %262 = vmatpush2.msra.mxu0 0.0
    %263 = vmatprep.subr.mxu0 0.0
    %264 = vmatpush2.msra.mxu0 0.0
    %265 = vmatprep.subr.mxu0 0.0
    %266 = vmatpush2.msra.mxu0 0.0
    %267 = vmatprep.subr.mxu0 0.0
    %268 = vmatpush2.msra.mxu0 0.0
    %269 = vmatprep.subr.mxu0 0.0
    %270 = vmatpush2.msra.mxu0 0.0
    %271 = vmatprep.subr.mxu0 0.0
    %272 = vmatpush2.msra.mxu0 0.0
    %273 = vmatprep.subr.mxu0 0.0
    %274 = vmatpush2.msra.mxu0 0.0
    %275 = vmatprep.subr.mxu0 0.0
    %276 = vmatpush2.msra.mxu0 0.0
    %277 = vmatprep.subr.mxu0 0.0
    %278 = vmatpush2.msra.mxu0 0.0
    %279 = vmatprep.subr.mxu0 0.0
    %280 = vmatpush2.msra.mxu0 0.0
    %281 = vmatprep.subr.mxu0 0.0
    %282 = vmatpush2.msra.mxu0 0.0
    %283 = vmatprep.subr.mxu0 0.0
    %284 = vmatpush2.msra.mxu0 0.0
    %285 = vmatprep.subr.mxu0 0.0
    %286 = vmatpush2.msra.mxu0 0.0
    %287 = vmatprep.subr.mxu0 0.0
    %288 = vmatpush2.msra.mxu0 0.0
    %289 = vmatprep.mubr.f32.mxu0 0.0
    %290 = vmatmul.mubr.f32.gmra.mxu0 %v204
    %v291 = vpop.f32.mrf.mxu0
    %v292 = vadd.f32 %v175, %v291
    %v293 = vpop.f32.mrf.mxu0
    %v294 = vadd.f32 %v179, %v293
    %295 = vdwg.mxu0
    %296 = vmatprep.subr.mxu0 0.0
    %297 = vmatpush1.msra.mxu0 0.0
    %298 = vmatprep.subr.mxu0 0.0
    %299 = vmatpush1.msra.mxu0 0.0
    %300 = vmatprep.subr.mxu0 0.0
    %301 = vmatpush1.msra.mxu0 0.0
    %302 = vmatprep.subr.mxu0 %v217
    %303 = vmatpush1.msra.mxu0 %v214
    %304 = vmatprep.subr.mxu0 %v160
    %305 = vmatpush1.msra.mxu0 %v159
    %306 = vmatprep.subr.mxu0 %v154
    %307 = vmatpush1.msra.mxu0 %v153
    %308 = vmatprep.subr.mxu0 %v148
    %309 = vmatpush1.msra.mxu0 %v147
    %310 = vmatprep.subr.mxu0 %v142
    %311 = vmatpush1.msra.mxu0 %v141
    %312 = vmatprep.subr.mxu0 %v136
    %313 = vmatpush1.msra.mxu0 %v135
    %314 = vmatprep.subr.mxu0 %v130
    %315 = vmatpush1.msra.mxu0 %v129
    %316 = vmatprep.subr.mxu0 %v124
    %317 = vmatpush1.msra.mxu0 %v123
    %318 = vmatprep.subr.mxu0 %v118
    %319 = vmatpush1.msra.mxu0 %v117
    %320 = vmatprep.subr.mxu0 %v112
    %321 = vmatpush1.msra.mxu0 %v111
    %322 = vmatprep.subr.mxu0 %v106
    %323 = vmatpush1.msra.mxu0 %v105
    %324 = vmatprep.subr.mxu0 %v100
    %325 = vmatpush1.msra.mxu0 %v99
    %326 = vmatprep.subr.mxu0 %v94
    %327 = vmatpush1.msra.mxu0 %v93
    %328 = vmatprep.subr.mxu0 0.0
    %329 = vmatpush2.msra.mxu0 0.0
    %330 = vmatprep.subr.mxu0 0.0
    %331 = vmatpush2.msra.mxu0 0.0
    %332 = vmatprep.subr.mxu0 0.0
    %333 = vmatpush2.msra.mxu0 0.0
    %334 = vmatprep.subr.mxu0 0.0
    %335 = vmatpush2.msra.mxu0 0.0
    %336 = vmatprep.subr.mxu0 0.0
    %337 = vmatpush2.msra.mxu0 0.0
    %338 = vmatprep.subr.mxu0 0.0
    %339 = vmatpush2.msra.mxu0 0.0
    %340 = vmatprep.subr.mxu0 0.0
    %341 = vmatpush2.msra.mxu0 0.0
    %342 = vmatprep.subr.mxu0 0.0
    %343 = vmatpush2.msra.mxu0 0.0
    %344 = vmatprep.subr.mxu0 0.0
    %345 = vmatpush2.msra.mxu0 0.0
    %346 = vmatprep.subr.mxu0 0.0
    %347 = vmatpush2.msra.mxu0 0.0
    %348 = vmatprep.subr.mxu0 0.0
    %349 = vmatpush2.msra.mxu0 0.0
    %350 = vmatprep.subr.mxu0 0.0
    %351 = vmatpush2.msra.mxu0 0.0
    %352 = vmatprep.subr.mxu0 0.0
    %353 = vmatpush2.msra.mxu0 0.0
    %354 = vmatprep.subr.mxu0 0.0
    %355 = vmatpush2.msra.mxu0 0.0
    %356 = vmatprep.subr.mxu0 0.0
    %357 = vmatpush2.msra.mxu0 0.0
    %358 = vmatprep.subr.mxu0 0.0
    %359 = vmatpush2.msra.mxu0 0.0
    %360 = vmatprep.mubr.f32.mxu0 0.0
    %361 = vmatmul.mubr.f32.gmra.mxu0 %v204
    %v362 = vpop.f32.mrf.mxu0
    %v363 = vadd.f32 %v183, %v362
    %v364 = vpop.f32.mrf.mxu0
    %v365 = vadd.f32 %v187, %v364
    %366 = vdwg.mxu0
    %367 = vmatprep.subr.mxu0 0.0
    %368 = vmatpush1.msra.mxu0 0.0
    %369 = vmatprep.subr.mxu0 0.0
    %370 = vmatpush1.msra.mxu0 0.0
    %371 = vmatprep.subr.mxu0 0.0
    %372 = vmatpush1.msra.mxu0 0.0
    %373 = vmatprep.subr.mxu0 %v223
    %374 = vmatpush1.msra.mxu0 %v220
    %375 = vmatprep.subr.mxu0 %v162
    %376 = vmatpush1.msra.mxu0 %v161
    %377 = vmatprep.subr.mxu0 %v156
    %378 = vmatpush1.msra.mxu0 %v155
    %379 = vmatprep.subr.mxu0 %v150
    %380 = vmatpush1.msra.mxu0 %v149
    %381 = vmatprep.subr.mxu0 %v144
    %382 = vmatpush1.msra.mxu0 %v143
    %383 = vmatprep.subr.mxu0 %v138
    %384 = vmatpush1.msra.mxu0 %v137
    %385 = vmatprep.subr.mxu0 %v132
    %386 = vmatpush1.msra.mxu0 %v131
    %387 = vmatprep.subr.mxu0 %v126
    %388 = vmatpush1.msra.mxu0 %v125
    %389 = vmatprep.subr.mxu0 %v120
    %390 = vmatpush1.msra.mxu0 %v119
    %391 = vmatprep.subr.mxu0 %v114
    %392 = vmatpush1.msra.mxu0 %v113
    %393 = vmatprep.subr.mxu0 %v108
    %394 = vmatpush1.msra.mxu0 %v107
    %395 = vmatprep.subr.mxu0 %v102
    %396 = vmatpush1.msra.mxu0 %v101
    %397 = vmatprep.subr.mxu0 %v96
    %398 = vmatpush1.msra.mxu0 %v95
    %399 = vmatprep.subr.mxu0 0.0
    %400 = vmatpush2.msra.mxu0 0.0
    %401 = vmatprep.subr.mxu0 0.0
    %402 = vmatpush2.msra.mxu0 0.0
    %403 = vmatprep.subr.mxu0 0.0
    %404 = vmatpush2.msra.mxu0 0.0
    %405 = vmatprep.subr.mxu0 0.0
    %406 = vmatpush2.msra.mxu0 0.0
    %407 = vmatprep.subr.mxu0 0.0
    %408 = vmatpush2.msra.mxu0 0.0
    %409 = vmatprep.subr.mxu0 0.0
    %410 = vmatpush2.msra.mxu0 0.0
    %411 = vmatprep.subr.mxu0 0.0
    %412 = vmatpush2.msra.mxu0 0.0
    %413 = vmatprep.subr.mxu0 0.0
    %414 = vmatpush2.msra.mxu0 0.0
    %415 = vmatprep.subr.mxu0 0.0
    %416 = vmatpush2.msra.mxu0 0.0
    %417 = vmatprep.subr.mxu0 0.0
    %418 = vmatpush2.msra.mxu0 0.0
    %419 = vmatprep.subr.mxu0 0.0
    %420 = vmatpush2.msra.mxu0 0.0
    %421 = vmatprep.subr.mxu0 0.0
    %422 = vmatpush2.msra.mxu0 0.0
    %423 = vmatprep.subr.mxu0 0.0
    %424 = vmatpush2.msra.mxu0 0.0
    %425 = vmatprep.subr.mxu0 0.0
    %426 = vmatpush2.msra.mxu0 0.0
    %427 = vmatprep.subr.mxu0 0.0
    %428 = vmatpush2.msra.mxu0 0.0
    %429 = vmatprep.subr.mxu0 0.0
    %430 = vmatpush2.msra.mxu0 0.0
    %431 = vmatprep.mubr.f32.mxu0 0.0
    %432 = vmatmul.mubr.f32.gmra.mxu0 %v204
    %v433 = vpop.f32.mrf.mxu0
    %v434 = vadd.f32 %v191, %v433
    %v435 = vpop.f32.mrf.mxu0
    %v436 = vadd.f32 %v195, %v435
    %437 = vdwg.mxu0
    %v441 = vcombine.low %v292, %v294
    %v442 = vcombine.high %v292, %v294
    %v443 = vcombine.high %v363, %v363
    %v445 = vunpack.c.l.s4 1966171168
    %v446 = vunpack.c.0.s8 %v445
    %v447 = vlaneseq
    %v448 = vshrl.u32 %v447, 7
    %v449 = vsub.s32 %v446, %v448
    %v450 = vrot.slane %v441, %v449
    %v452 = vunpack.c.l.s4 1966171168
    %v453 = vunpack.c.0.s8 %v452
    %v454 = vlaneseq
    %v455 = vshrl.u32 %v454, 7
    %v456 = vsub.s32 %v453, %v455
    %v457 = vrot.slane %v442, %v456
    %v459 = vunpack.c.l.s4 1966171168
    %v460 = vunpack.c.0.s8 %v459
    %v461 = vlaneseq
    %v462 = vshrl.u32 %v461, 7
    %v463 = vsub.s32 %v460, %v462
    %v464 = vrot.slane %v363, %v463
    %v466 = vunpack.c.l.s4 1966171168
    %v467 = vunpack.c.0.s8 %v466
    %v468 = vlaneseq
    %v469 = vshrl.u32 %v468, 7
    %v470 = vsub.s32 %v467, %v469
    %v471 = vrot.slane %v443, %v470
    %v472 = vcombine.low %v450, %v464
    %v473 = vcombine.high %v450, %v464
    %v474 = vcombine.low %v457, %v471
    %v475 = vcombine.high %v457, %v471
    %v477 = vunpack.c.l.s4 1966171168
    %v478 = vunpack.c.0.s8 %v477
    %v479 = vlaneseq
    %v480 = vshrl.u32 %v479, 7
    %v481 = vsub.s32 %v478, %v480
    %v482 = vrot.slane %v472, %v481
    %v484 = vunpack.c.l.s4 1966171168
    %v485 = vunpack.c.0.s8 %v484
    %v486 = vlaneseq
    %v487 = vshrl.u32 %v486, 7
    %v488 = vsub.s32 %v485, %v487
    %v489 = vrot.slane %v474, %v488
    %v491 = vunpack.c.l.s4 1966171168
    %v492 = vunpack.c.0.s8 %v491
    %v493 = vlaneseq
    %v494 = vshrl.u32 %v493, 7
    %v495 = vsub.s32 %v492, %v494
    %v496 = vrot.slane %v473, %v495
    %v498 = vunpack.c.l.s4 1966171168
    %v499 = vunpack.c.0.s8 %v498
    %v500 = vlaneseq
    %v501 = vshrl.u32 %v500, 7
    %v502 = vsub.s32 %v499, %v501
    %v503 = vrot.slane %v475, %v502
    %v504 = vcombine.high %v482, %v482
    %v505 = vcombine.high %v489, %v489
    %v506 = vcombine.high %v496, %v496
    %v507 = vcombine.high %v503, %v503
    %v516 = vlaneseq
    %vm517 = vcmp.ge.s32.totalorder %v516, 0
    %vm518 = vcmp.lt.s32.totalorder %v516, 384
    %vm519 = vmand %vm517, %vm518
    %520 = vst.msk [vmem:[#allocation2] ss:$8 sm:$0x7] %vm519, %v482
    %521 = vst.msk [vmem:[#allocation2] ss:$8 sm:$0x0] %vm519, %v482
    %s522 = scalar_lea.vmem [#allocation2], 24
    %523 = vst.msk [vmem:[%s522] ss:$8 sm:$0x7] %vm519, %v496
    %524 = vst.msk [vmem:[%s522] ss:$8 sm:$0x0] %vm519, %v496
    %s525 = scalar_lea.vmem [#allocation2], 48
    %526 = vst.msk [vmem:[%s525] ss:$8 sm:$0x7] %vm519, %v504
    %527 = vst.msk [vmem:[%s525] ss:$8 sm:$0x0] %vm519, %v504
    %s528 = scalar_lea.vmem [#allocation2], 72
    %529 = vst.msk [vmem:[%s528] ss:$8 sm:$0x7] %vm519, %v506
    %530 = vst.msk [vmem:[%s528] ss:$8 sm:$0x0] %vm519, %v506
    %s531 = scalar_lea.vmem [#allocation2], 96
    %532 = vst.msk [vmem:[%s531] ss:$8 sm:$0x7] %vm519, %v489
    %533 = vst.msk [vmem:[%s531] ss:$8 sm:$0x0] %vm519, %v489
    %s534 = scalar_lea.vmem [#allocation2], 120
    %535 = vst.msk [vmem:[%s534] ss:$8 sm:$0x7] %vm519, %v503
    %536 = vst.msk [vmem:[%s534] ss:$8 sm:$0x0] %vm519, %v503
    %s537 = scalar_lea.vmem [#allocation2], 144
    %538 = vst.msk [vmem:[%s537] ss:$8 sm:$0x7] %vm519, %v505
    %539 = vst.msk [vmem:[%s537] ss:$8 sm:$0x0] %vm519, %v505
    %s540 = scalar_lea.vmem [#allocation2], 168
    %541 = vst.msk [vmem:[%s540] ss:$8 sm:$0x7] %vm519, %v507
    %542 = vst.msk [vmem:[%s540] ss:$8 sm:$0x0] %vm519, %v507
    %v546 = vrot.slane %v365, 7
    %v547 = vrot.slane %v434, 7
    %v548 = vrot.slane %v436, 7
    %v552 = vrot.slane %v365, 5
    %v553 = vrot.slane %v434, 5
    %v554 = vrot.slane %v436, 5
    %v558 = vrot.slane %v365, 3
    %v559 = vrot.slane %v434, 3
    %v560 = vrot.slane %v436, 3
    %v564 = vrot.slane %v365, 1
    %v565 = vrot.slane %v434, 1
    %v566 = vrot.slane %v436, 1
    %vm570 = vcmask 1040384
    %v571 = vsel %vm570, %v546, %v552
    %v572 = vsel %vm570, %v547, %v553
    %v573 = vsel %vm570, %v548, %v554
    %vm574 = vcmask 1041408
    %v575 = vsel %vm574, %v571, %v558
    %v576 = vsel %vm574, %v572, %v559
    %v577 = vsel %vm574, %v573, %v560
    %vm578 = vcmask 1042432
    %v579 = vsel %vm578, %v575, %v564
    %v580 = vsel %vm578, %v576, %v565
    %v581 = vsel %vm578, %v577, %v566
    %v582 = vsel %vm206, %v579, %v546
    %v583 = vsel %vm206, %v580, %v547
    %v584 = vsel %vm206, %v581, %v548
    %vm585 = vcmask 1044480
    %v586 = vsel %vm585, %v582, %v552
    %v587 = vsel %vm585, %v583, %v553
    %v588 = vsel %vm585, %v584, %v554
    %vm589 = vcmask 1045504
    %v590 = vsel %vm589, %v586, %v558
    %v591 = vsel %vm589, %v587, %v559
    %v592 = vsel %vm589, %v588, %v560
    %vm593 = vcmask 1046528
    %v594 = vsel %vm593, %v590, %v564
    %v595 = vsel %vm593, %v591, %v565
    %v596 = vsel %vm593, %v592, %v566
    %v600 = vcombine.low %v594, %v595
    %v601 = vcombine.high %v594, %v595
    %v602 = vcombine.high %v596, %v596
    %v604 = vunpack.c.l.s4 1966171168
    %v605 = vunpack.c.0.s8 %v604
    %v606 = vlaneseq
    %v607 = vshrl.u32 %v606, 7
    %v608 = vsub.s32 %v605, %v607
    %v609 = vrot.slane %v600, %v608
    %v611 = vunpack.c.l.s4 1966171168
    %v612 = vunpack.c.0.s8 %v611
    %v613 = vlaneseq
    %v614 = vshrl.u32 %v613, 7
    %v615 = vsub.s32 %v612, %v614
    %v616 = vrot.slane %v601, %v615
    %v618 = vunpack.c.l.s4 1966171168
    %v619 = vunpack.c.0.s8 %v618
    %v620 = vlaneseq
    %v621 = vshrl.u32 %v620, 7
    %v622 = vsub.s32 %v619, %v621
    %v623 = vrot.slane %v596, %v622
    %v625 = vunpack.c.l.s4 1966171168
    %v626 = vunpack.c.0.s8 %v625
    %v627 = vlaneseq
    %v628 = vshrl.u32 %v627, 7
    %v629 = vsub.s32 %v626, %v628
    %v630 = vrot.slane %v602, %v629
    %v631 = vcombine.low %v609, %v623
    %v632 = vcombine.high %v609, %v623
    %v633 = vcombine.low %v616, %v630
    %v634 = vcombine.high %v616, %v630
    %v636 = vunpack.c.l.s4 1966171168
    %v637 = vunpack.c.0.s8 %v636
    %v638 = vlaneseq
    %v639 = vshrl.u32 %v638, 7
    %v640 = vsub.s32 %v637, %v639
    %v641 = vrot.slane %v631, %v640
    %v643 = vunpack.c.l.s4 1966171168
    %v644 = vunpack.c.0.s8 %v643
    %v645 = vlaneseq
    %v646 = vshrl.u32 %v645, 7
    %v647 = vsub.s32 %v644, %v646
    %v648 = vrot.slane %v633, %v647
    %v650 = vunpack.c.l.s4 1966171168
    %v651 = vunpack.c.0.s8 %v650
    %v652 = vlaneseq
    %v653 = vshrl.u32 %v652, 7
    %v654 = vsub.s32 %v651, %v653
    %v655 = vrot.slane %v632, %v654
    %v657 = vunpack.c.l.s4 1966171168
    %v658 = vunpack.c.0.s8 %v657
    %v659 = vlaneseq
    %v660 = vshrl.u32 %v659, 7
    %v661 = vsub.s32 %v658, %v660
    %v662 = vrot.slane %v634, %v661
    %v663 = vcombine.high %v641, %v641
    %v664 = vcombine.high %v648, %v648
    %v665 = vcombine.high %v655, %v655
    %v666 = vcombine.high %v662, %v662
    %s675 = scalar_lea.vmem [#allocation2], 4
    %676 = vst.msk [vmem:[%s675] ss:$8 sm:$0x7] %vm519, %v641
    %677 = vst.msk [vmem:[%s675] ss:$8 sm:$0x0] %vm519, %v641
    %s678 = scalar_lea.vmem [#allocation2], 28
    %679 = vst.msk [vmem:[%s678] ss:$8 sm:$0x7] %vm519, %v655
    %680 = vst.msk [vmem:[%s678] ss:$8 sm:$0x0] %vm519, %v655
    %s681 = scalar_lea.vmem [#allocation2], 52
    %682 = vst.msk [vmem:[%s681] ss:$8 sm:$0x7] %vm519, %v663
    %683 = vst.msk [vmem:[%s681] ss:$8 sm:$0x0] %vm519, %v663
    %s684 = scalar_lea.vmem [#allocation2], 76
    %685 = vst.msk [vmem:[%s684] ss:$8 sm:$0x7] %vm519, %v665
    %686 = vst.msk [vmem:[%s684] ss:$8 sm:$0x0] %vm519, %v665
    %s687 = scalar_lea.vmem [#allocation2], 100
    %688 = vst.msk [vmem:[%s687] ss:$8 sm:$0x7] %vm519, %v648
    %689 = vst.msk [vmem:[%s687] ss:$8 sm:$0x0] %vm519, %v648
    %s690 = scalar_lea.vmem [#allocation2], 124
    %691 = vst.msk [vmem:[%s690] ss:$8 sm:$0x7] %vm519, %v662
    %692 = vst.msk [vmem:[%s690] ss:$8 sm:$0x0] %vm519, %v662
    %s693 = scalar_lea.vmem [#allocation2], 148
    %694 = vst.msk [vmem:[%s693] ss:$8 sm:$0x7] %vm519, %v664
    %695 = vst.msk [vmem:[%s693] ss:$8 sm:$0x0] %vm519, %v664
    %s696 = scalar_lea.vmem [#allocation2], 172
    %697 = vst.msk [vmem:[%s696] ss:$8 sm:$0x7] %vm519, %v666
    %698 = vst.msk [vmem:[%s696] ss:$8 sm:$0x0] %vm519, %v666
    %s699 = scalar_lea.vmem [#allocation3], 8
    %v700 = vld [vmem:[%s699] sm:$0xff]
    %v702 = vsel %vm202, %v700, 0
    %704 = vmatprep.subr.mxu0 0.0
    %705 = vmatpush1.msra.mxu0 0.0
    %706 = vmatprep.subr.mxu0 0.0
    %707 = vmatpush1.msra.mxu0 0.0
    %708 = vmatprep.subr.mxu0 0.0
    %709 = vmatpush1.msra.mxu0 0.0
    %710 = vmatprep.subr.mxu0 %v211
    %711 = vmatpush1.msra.mxu0 %v208
    %712 = vmatprep.subr.mxu0 %v158
    %713 = vmatpush1.msra.mxu0 %v157
    %714 = vmatprep.subr.mxu0 %v152
    %715 = vmatpush1.msra.mxu0 %v151
    %716 = vmatprep.subr.mxu0 %v146
    %717 = vmatpush1.msra.mxu0 %v145
    %718 = vmatprep.subr.mxu0 %v140
    %719 = vmatpush1.msra.mxu0 %v139
    %720 = vmatprep.subr.mxu0 %v134
    %721 = vmatpush1.msra.mxu0 %v133
    %722 = vmatprep.subr.mxu0 %v128
    %723 = vmatpush1.msra.mxu0 %v127
    %724 = vmatprep.subr.mxu0 %v122
    %725 = vmatpush1.msra.mxu0 %v121
    %726 = vmatprep.subr.mxu0 %v116
    %727 = vmatpush1.msra.mxu0 %v115
    %728 = vmatprep.subr.mxu0 %v110
    %729 = vmatpush1.msra.mxu0 %v109
    %730 = vmatprep.subr.mxu0 %v104
    %731 = vmatpush1.msra.mxu0 %v103
    %732 = vmatprep.subr.mxu0 %v98
    %733 = vmatpush1.msra.mxu0 %v97
    %734 = vmatprep.subr.mxu0 %v92
    %735 = vmatpush1.msra.mxu0 %v91
    %736 = vmatprep.subr.mxu0 0.0
    %737 = vmatpush2.msra.mxu0 0.0
    %738 = vmatprep.subr.mxu0 0.0
    %739 = vmatpush2.msra.mxu0 0.0
    %740 = vmatprep.subr.mxu0 0.0
    %741 = vmatpush2.msra.mxu0 0.0
    %742 = vmatprep.subr.mxu0 0.0
    %743 = vmatpush2.msra.mxu0 0.0
    %744 = vmatprep.subr.mxu0 0.0
    %745 = vmatpush2.msra.mxu0 0.0
    %746 = vmatprep.subr.mxu0 0.0
    %747 = vmatpush2.msra.mxu0 0.0
    %748 = vmatprep.subr.mxu0 0.0
    %749 = vmatpush2.msra.mxu0 0.0
    %750 = vmatprep.subr.mxu0 0.0
    %751 = vmatpush2.msra.mxu0 0.0
    %752 = vmatprep.subr.mxu0 0.0
    %753 = vmatpush2.msra.mxu0 0.0
    %754 = vmatprep.subr.mxu0 0.0
    %755 = vmatpush2.msra.mxu0 0.0
    %756 = vmatprep.subr.mxu0 0.0
    %757 = vmatpush2.msra.mxu0 0.0
    %758 = vmatprep.subr.mxu0 0.0
    %759 = vmatpush2.msra.mxu0 0.0
    %760 = vmatprep.subr.mxu0 0.0
    %761 = vmatpush2.msra.mxu0 0.0
    %762 = vmatprep.subr.mxu0 0.0
    %763 = vmatpush2.msra.mxu0 0.0
    %764 = vmatprep.subr.mxu0 0.0
    %765 = vmatpush2.msra.mxu0 0.0
    %766 = vmatprep.subr.mxu0 0.0
    %767 = vmatpush2.msra.mxu0 0.0
    %768 = vmatprep.mubr.f32.mxu0 0.0
    %769 = vmatmul.mubr.f32.gmra.mxu0 %v702
    %v770 = vpop.f32.mrf.mxu0
    %v771 = vadd.f32 %v175, %v770
    %v772 = vpop.f32.mrf.mxu0
    %v773 = vadd.f32 %v179, %v772
    %774 = vdwg.mxu0
    %775 = vmatprep.subr.mxu0 0.0
    %776 = vmatpush1.msra.mxu0 0.0
    %777 = vmatprep.subr.mxu0 0.0
    %778 = vmatpush1.msra.mxu0 0.0
    %779 = vmatprep.subr.mxu0 0.0
    %780 = vmatpush1.msra.mxu0 0.0
    %781 = vmatprep.subr.mxu0 %v217
    %782 = vmatpush1.msra.mxu0 %v214
    %783 = vmatprep.subr.mxu0 %v160
    %784 = vmatpush1.msra.mxu0 %v159
    %785 = vmatprep.subr.mxu0 %v154
    %786 = vmatpush1.msra.mxu0 %v153
    %787 = vmatprep.subr.mxu0 %v148
    %788 = vmatpush1.msra.mxu0 %v147
    %789 = vmatprep.subr.mxu0 %v142
    %790 = vmatpush1.msra.mxu0 %v141
    %791 = vmatprep.subr.mxu0 %v136
    %792 = vmatpush1.msra.mxu0 %v135
    %793 = vmatprep.subr.mxu0 %v130
    %794 = vmatpush1.msra.mxu0 %v129
    %795 = vmatprep.subr.mxu0 %v124
    %796 = vmatpush1.msra.mxu0 %v123
    %797 = vmatprep.subr.mxu0 %v118
    %798 = vmatpush1.msra.mxu0 %v117
    %799 = vmatprep.subr.mxu0 %v112
    %800 = vmatpush1.msra.mxu0 %v111
    %801 = vmatprep.subr.mxu0 %v106
    %802 = vmatpush1.msra.mxu0 %v105
    %803 = vmatprep.subr.mxu0 %v100
    %804 = vmatpush1.msra.mxu0 %v99
    %805 = vmatprep.subr.mxu0 %v94
    %806 = vmatpush1.msra.mxu0 %v93
    %807 = vmatprep.subr.mxu0 0.0
    %808 = vmatpush2.msra.mxu0 0.0
    %809 = vmatprep.subr.mxu0 0.0
    %810 = vmatpush2.msra.mxu0 0.0
    %811 = vmatprep.subr.mxu0 0.0
    %812 = vmatpush2.msra.mxu0 0.0
    %813 = vmatprep.subr.mxu0 0.0
    %814 = vmatpush2.msra.mxu0 0.0
    %815 = vmatprep.subr.mxu0 0.0
    %816 = vmatpush2.msra.mxu0 0.0
    %817 = vmatprep.subr.mxu0 0.0
    %818 = vmatpush2.msra.mxu0 0.0
    %819 = vmatprep.subr.mxu0 0.0
    %820 = vmatpush2.msra.mxu0 0.0
    %821 = vmatprep.subr.mxu0 0.0
    %822 = vmatpush2.msra.mxu0 0.0
    %823 = vmatprep.subr.mxu0 0.0
    %824 = vmatpush2.msra.mxu0 0.0
    %825 = vmatprep.subr.mxu0 0.0
    %826 = vmatpush2.msra.mxu0 0.0
    %827 = vmatprep.subr.mxu0 0.0
    %828 = vmatpush2.msra.mxu0 0.0
    %829 = vmatprep.subr.mxu0 0.0
    %830 = vmatpush2.msra.mxu0 0.0
    %831 = vmatprep.subr.mxu0 0.0
    %832 = vmatpush2.msra.mxu0 0.0
    %833 = vmatprep.subr.mxu0 0.0
    %834 = vmatpush2.msra.mxu0 0.0
    %835 = vmatprep.subr.mxu0 0.0
    %836 = vmatpush2.msra.mxu0 0.0
    %837 = vmatprep.subr.mxu0 0.0
    %838 = vmatpush2.msra.mxu0 0.0
    %839 = vmatprep.mubr.f32.mxu0 0.0
    %840 = vmatmul.mubr.f32.gmra.mxu0 %v702
    %v841 = vpop.f32.mrf.mxu0
    %v842 = vadd.f32 %v183, %v841
    %v843 = vpop.f32.mrf.mxu0
    %v844 = vadd.f32 %v187, %v843
    %845 = vdwg.mxu0
    %846 = vmatprep.subr.mxu0 0.0
    %847 = vmatpush1.msra.mxu0 0.0
    %848 = vmatprep.subr.mxu0 0.0
    %849 = vmatpush1.msra.mxu0 0.0
    %850 = vmatprep.subr.mxu0 0.0
    %851 = vmatpush1.msra.mxu0 0.0
    %852 = vmatprep.subr.mxu0 %v223
    %853 = vmatpush1.msra.mxu0 %v220
    %854 = vmatprep.subr.mxu0 %v162
    %855 = vmatpush1.msra.mxu0 %v161
    %856 = vmatprep.subr.mxu0 %v156
    %857 = vmatpush1.msra.mxu0 %v155
    %858 = vmatprep.subr.mxu0 %v150
    %859 = vmatpush1.msra.mxu0 %v149
    %860 = vmatprep.subr.mxu0 %v144
    %861 = vmatpush1.msra.mxu0 %v143
    %862 = vmatprep.subr.mxu0 %v138
    %863 = vmatpush1.msra.mxu0 %v137
    %864 = vmatprep.subr.mxu0 %v132
    %865 = vmatpush1.msra.mxu0 %v131
    %866 = vmatprep.subr.mxu0 %v126
    %867 = vmatpush1.msra.mxu0 %v125
    %868 = vmatprep.subr.mxu0 %v120
    %869 = vmatpush1.msra.mxu0 %v119
    %870 = vmatprep.subr.mxu0 %v114
    %871 = vmatpush1.msra.mxu0 %v113
    %872 = vmatprep.subr.mxu0 %v108
    %873 = vmatpush1.msra.mxu0 %v107
    %874 = vmatprep.subr.mxu0 %v102
    %875 = vmatpush1.msra.mxu0 %v101
    %876 = vmatprep.subr.mxu0 %v96
    %877 = vmatpush1.msra.mxu0 %v95
    %878 = vmatprep.subr.mxu0 0.0
    %879 = vmatpush2.msra.mxu0 0.0
    %880 = vmatprep.subr.mxu0 0.0
    %881 = vmatpush2.msra.mxu0 0.0
    %882 = vmatprep.subr.mxu0 0.0
    %883 = vmatpush2.msra.mxu0 0.0
    %884 = vmatprep.subr.mxu0 0.0
    %885 = vmatpush2.msra.mxu0 0.0
    %886 = vmatprep.subr.mxu0 0.0
    %887 = vmatpush2.msra.mxu0 0.0
    %888 = vmatprep.subr.mxu0 0.0
    %889 = vmatpush2.msra.mxu0 0.0
    %890 = vmatprep.subr.mxu0 0.0
    %891 = vmatpush2.msra.mxu0 0.0
    %892 = vmatprep.subr.mxu0 0.0
    %893 = vmatpush2.msra.mxu0 0.0
    %894 = vmatprep.subr.mxu0 0.0
    %895 = vmatpush2.msra.mxu0 0.0
    %896 = vmatprep.subr.mxu0 0.0
    %897 = vmatpush2.msra.mxu0 0.0
    %898 = vmatprep.subr.mxu0 0.0
    %899 = vmatpush2.msra.mxu0 0.0
    %900 = vmatprep.subr.mxu0 0.0
    %901 = vmatpush2.msra.mxu0 0.0
    %902 = vmatprep.subr.mxu0 0.0
    %903 = vmatpush2.msra.mxu0 0.0
    %904 = vmatprep.subr.mxu0 0.0
    %905 = vmatpush2.msra.mxu0 0.0
    %906 = vmatprep.subr.mxu0 0.0
    %907 = vmatpush2.msra.mxu0 0.0
    %908 = vmatprep.subr.mxu0 0.0
    %909 = vmatpush2.msra.mxu0 0.0
    %910 = vmatprep.mubr.f32.mxu0 0.0
    %911 = vmatmul.mubr.f32.gmra.mxu0 %v702
    %v912 = vpop.f32.mrf.mxu0
    %v913 = vadd.f32 %v191, %v912
    %v914 = vpop.f32.mrf.mxu0
    %v915 = vadd.f32 %v195, %v914
    %916 = vdwg.mxu0
    %v920 = vcombine.low %v771, %v773
    %v921 = vcombine.high %v771, %v773
    %v922 = vcombine.high %v842, %v842
    %v924 = vunpack.c.l.s4 1966171168
    %v925 = vunpack.c.0.s8 %v924
    %v926 = vlaneseq
    %v927 = vshrl.u32 %v926, 7
    %v928 = vsub.s32 %v925, %v927
    %v929 = vrot.slane %v920, %v928
    %v931 = vunpack.c.l.s4 1966171168
    %v932 = vunpack.c.0.s8 %v931
    %v933 = vlaneseq
    %v934 = vshrl.u32 %v933, 7
    %v935 = vsub.s32 %v932, %v934
    %v936 = vrot.slane %v921, %v935
    %v938 = vunpack.c.l.s4 1966171168
    %v939 = vunpack.c.0.s8 %v938
    %v940 = vlaneseq
    %v941 = vshrl.u32 %v940, 7
    %v942 = vsub.s32 %v939, %v941
    %v943 = vrot.slane %v842, %v942
    %v945 = vunpack.c.l.s4 1966171168
    %v946 = vunpack.c.0.s8 %v945
    %v947 = vlaneseq
    %v948 = vshrl.u32 %v947, 7
    %v949 = vsub.s32 %v946, %v948
    %v950 = vrot.slane %v922, %v949
    %v951 = vcombine.low %v929, %v943
    %v952 = vcombine.high %v929, %v943
    %v953 = vcombine.low %v936, %v950
    %v954 = vcombine.high %v936, %v950
    %v956 = vunpack.c.l.s4 1966171168
    %v957 = vunpack.c.0.s8 %v956
    %v958 = vlaneseq
    %v959 = vshrl.u32 %v958, 7
    %v960 = vsub.s32 %v957, %v959
    %v961 = vrot.slane %v951, %v960
    %v963 = vunpack.c.l.s4 1966171168
    %v964 = vunpack.c.0.s8 %v963
    %v965 = vlaneseq
    %v966 = vshrl.u32 %v965, 7
    %v967 = vsub.s32 %v964, %v966
    %v968 = vrot.slane %v953, %v967
    %v970 = vunpack.c.l.s4 1966171168
    %v971 = vunpack.c.0.s8 %v970
    %v972 = vlaneseq
    %v973 = vshrl.u32 %v972, 7
    %v974 = vsub.s32 %v971, %v973
    %v975 = vrot.slane %v952, %v974
    %v977 = vunpack.c.l.s4 1966171168
    %v978 = vunpack.c.0.s8 %v977
    %v979 = vlaneseq
    %v980 = vshrl.u32 %v979, 7
    %v981 = vsub.s32 %v978, %v980
    %v982 = vrot.slane %v954, %v981
    %v983 = vcombine.high %v961, %v961
    %v984 = vcombine.high %v968, %v968
    %v985 = vcombine.high %v975, %v975
    %v986 = vcombine.high %v982, %v982
    %s995 = scalar_lea.vmem [#allocation2], 1
    %996 = vst.msk [vmem:[%s995] ss:$8 sm:$0x7] %vm519, %v961
    %997 = vst.msk [vmem:[%s995] ss:$8 sm:$0x0] %vm519, %v961
    %s998 = scalar_lea.vmem [#allocation2], 25
    %999 = vst.msk [vmem:[%s998] ss:$8 sm:$0x7] %vm519, %v975
    %1000 = vst.msk [vmem:[%s998] ss:$8 sm:$0x0] %vm519, %v975
    %s1001 = scalar_lea.vmem [#allocation2], 49
    %1002 = vst.msk [vmem:[%s1001] ss:$8 sm:$0x7] %vm519, %v983
    %1003 = vst.msk [vmem:[%s1001] ss:$8 sm:$0x0] %vm519, %v983
    %s1004 = scalar_lea.vmem [#allocation2], 73
    %1005 = vst.msk [vmem:[%s1004] ss:$8 sm:$0x7] %vm519, %v985
    %1006 = vst.msk [vmem:[%s1004] ss:$8 sm:$0x0] %vm519, %v985
    %s1007 = scalar_lea.vmem [#allocation2], 97
    %1008 = vst.msk [vmem:[%s1007] ss:$8 sm:$0x7] %vm519, %v968
    %1009 = vst.msk [vmem:[%s1007] ss:$8 sm:$0x0] %vm519, %v968
    %s1010 = scalar_lea.vmem [#allocation2], 121
    %1011 = vst.msk [vmem:[%s1010] ss:$8 sm:$0x7] %vm519, %v982
    %1012 = vst.msk [vmem:[%s1010] ss:$8 sm:$0x0] %vm519, %v982
    %s1013 = scalar_lea.vmem [#allocation2], 145
    %1014 = vst.msk [vmem:[%s1013] ss:$8 sm:$0x7] %vm519, %v984
    %1015 = vst.msk [vmem:[%s1013] ss:$8 sm:$0x0] %vm519, %v984
    %s1016 = scalar_lea.vmem [#allocation2], 169
    %1017 = vst.msk [vmem:[%s1016] ss:$8 sm:$0x7] %vm519, %v986
    %1018 = vst.msk [vmem:[%s1016] ss:$8 sm:$0x0] %vm519, %v986
    %v1022 = vrot.slane %v844, 7
    %v1023 = vrot.slane %v913, 7
    %v1024 = vrot.slane %v915, 7
    %v1028 = vrot.slane %v844, 5
    %v1029 = vrot.slane %v913, 5
    %v1030 = vrot.slane %v915, 5
    %v1034 = vrot.slane %v844, 3
    %v1035 = vrot.slane %v913, 3
    %v1036 = vrot.slane %v915, 3
    %v1040 = vrot.slane %v844, 1
    %v1041 = vrot.slane %v913, 1
    %v1042 = vrot.slane %v915, 1
    %v1046 = vsel %vm570, %v1022, %v1028
    %v1047 = vsel %vm570, %v1023, %v1029
    %v1048 = vsel %vm570, %v1024, %v1030
    %v1049 = vsel %vm574, %v1046, %v1034
    %v1050 = vsel %vm574, %v1047, %v1035
    %v1051 = vsel %vm574, %v1048, %v1036
    %v1052 = vsel %vm578, %v1049, %v1040
    %v1053 = vsel %vm578, %v1050, %v1041
    %v1054 = vsel %vm578, %v1051, %v1042
    %v1055 = vsel %vm206, %v1052, %v1022
    %v1056 = vsel %vm206, %v1053, %v1023
    %v1057 = vsel %vm206, %v1054, %v1024
    %v1058 = vsel %vm585, %v1055, %v1028
    %v1059 = vsel %vm585, %v1056, %v1029
    %v1060 = vsel %vm585, %v1057, %v1030
    %v1061 = vsel %vm589, %v1058, %v1034
    %v1062 = vsel %vm589, %v1059, %v1035
    %v1063 = vsel %vm589, %v1060, %v1036
    %v1064 = vsel %vm593, %v1061, %v1040
    %v1065 = vsel %vm593, %v1062, %v1041
    %v1066 = vsel %vm593, %v1063, %v1042
    %v1070 = vcombine.low %v1064, %v1065
    %v1071 = vcombine.high %v1064, %v1065
    %v1072 = vcombine.high %v1066, %v1066
    %v1074 = vunpack.c.l.s4 1966171168
    %v1075 = vunpack.c.0.s8 %v1074
    %v1076 = vlaneseq
    %v1077 = vshrl.u32 %v1076, 7
    %v1078 = vsub.s32 %v1075, %v1077
    %v1079 = vrot.slane %v1070, %v1078
    %v1081 = vunpack.c.l.s4 1966171168
    %v1082 = vunpack.c.0.s8 %v1081
    %v1083 = vlaneseq
    %v1084 = vshrl.u32 %v1083, 7
    %v1085 = vsub.s32 %v1082, %v1084
    %v1086 = vrot.slane %v1071, %v1085
    %v1088 = vunpack.c.l.s4 1966171168
    %v1089 = vunpack.c.0.s8 %v1088
    %v1090 = vlaneseq
    %v1091 = vshrl.u32 %v1090, 7
    %v1092 = vsub.s32 %v1089, %v1091
    %v1093 = vrot.slane %v1066, %v1092
    %v1095 = vunpack.c.l.s4 1966171168
    %v1096 = vunpack.c.0.s8 %v1095
    %v1097 = vlaneseq
    %v1098 = vshrl.u32 %v1097, 7
    %v1099 = vsub.s32 %v1096, %v1098
    %v1100 = vrot.slane %v1072, %v1099
    %v1101 = vcombine.low %v1079, %v1093
    %v1102 = vcombine.high %v1079, %v1093
    %v1103 = vcombine.low %v1086, %v1100
    %v1104 = vcombine.high %v1086, %v1100
    %v1106 = vunpack.c.l.s4 1966171168
    %v1107 = vunpack.c.0.s8 %v1106
    %v1108 = vlaneseq
    %v1109 = vshrl.u32 %v1108, 7
    %v1110 = vsub.s32 %v1107, %v1109
    %v1111 = vrot.slane %v1101, %v1110
    %v1113 = vunpack.c.l.s4 1966171168
    %v1114 = vunpack.c.0.s8 %v1113
    %v1115 = vlaneseq
    %v1116 = vshrl.u32 %v1115, 7
    %v1117 = vsub.s32 %v1114, %v1116
    %v1118 = vrot.slane %v1103, %v1117
    %v1120 = vunpack.c.l.s4 1966171168
    %v1121 = vunpack.c.0.s8 %v1120
    %v1122 = vlaneseq
    %v1123 = vshrl.u32 %v1122, 7
    %v1124 = vsub.s32 %v1121, %v1123
    %v1125 = vrot.slane %v1102, %v1124
    %v1127 = vunpack.c.l.s4 1966171168
    %v1128 = vunpack.c.0.s8 %v1127
    %v1129 = vlaneseq
    %v1130 = vshrl.u32 %v1129, 7
    %v1131 = vsub.s32 %v1128, %v1130
    %v1132 = vrot.slane %v1104, %v1131
    %v1133 = vcombine.high %v1111, %v1111
    %v1134 = vcombine.high %v1118, %v1118
    %v1135 = vcombine.high %v1125, %v1125
    %v1136 = vcombine.high %v1132, %v1132
    %s1145 = scalar_lea.vmem [#allocation2], 5
    %1146 = vst.msk [vmem:[%s1145] ss:$8 sm:$0x7] %vm519, %v1111
    %1147 = vst.msk [vmem:[%s1145] ss:$8 sm:$0x0] %vm519, %v1111
    %s1148 = scalar_lea.vmem [#allocation2], 29
    %1149 = vst.msk [vmem:[%s1148] ss:$8 sm:$0x7] %vm519, %v1125
    %1150 = vst.msk [vmem:[%s1148] ss:$8 sm:$0x0] %vm519, %v1125
    %s1151 = scalar_lea.vmem [#allocation2], 53
    %1152 = vst.msk [vmem:[%s1151] ss:$8 sm:$0x7] %vm519, %v1133
    %1153 = vst.msk [vmem:[%s1151] ss:$8 sm:$0x0] %vm519, %v1133
    %s1154 = scalar_lea.vmem [#allocation2], 77
    %1155 = vst.msk [vmem:[%s1154] ss:$8 sm:$0x7] %vm519, %v1135
    %1156 = vst.msk [vmem:[%s1154] ss:$8 sm:$0x0] %vm519, %v1135
    %s1157 = scalar_lea.vmem [#allocation2], 101
    %1158 = vst.msk [vmem:[%s1157] ss:$8 sm:$0x7] %vm519, %v1118
    %1159 = vst.msk [vmem:[%s1157] ss:$8 sm:$0x0] %vm519, %v1118
    %s1160 = scalar_lea.vmem [#allocation2], 125
    %1161 = vst.msk [vmem:[%s1160] ss:$8 sm:$0x7] %vm519, %v1132
    %1162 = vst.msk [vmem:[%s1160] ss:$8 sm:$0x0] %vm519, %v1132
    %s1163 = scalar_lea.vmem [#allocation2], 149
    %1164 = vst.msk [vmem:[%s1163] ss:$8 sm:$0x7] %vm519, %v1134
    %1165 = vst.msk [vmem:[%s1163] ss:$8 sm:$0x0] %vm519, %v1134
    %s1166 = scalar_lea.vmem [#allocation2], 173
    %1167 = vst.msk [vmem:[%s1166] ss:$8 sm:$0x7] %vm519, %v1136
    %1168 = vst.msk [vmem:[%s1166] ss:$8 sm:$0x0] %vm519, %v1136
    %s1169 = scalar_lea.vmem [#allocation3], 16
    %v1170 = vld [vmem:[%s1169] sm:$0xff]
    %v1172 = vsel %vm202, %v1170, 0
    %1174 = vmatprep.subr.mxu0 0.0
    %1175 = vmatpush1.msra.mxu0 0.0
    %1176 = vmatprep.subr.mxu0 0.0
    %1177 = vmatpush1.msra.mxu0 0.0
    %1178 = vmatprep.subr.mxu0 0.0
    %1179 = vmatpush1.msra.mxu0 0.0
    %1180 = vmatprep.subr.mxu0 %v211
    %1181 = vmatpush1.msra.mxu0 %v208
    %1182 = vmatprep.subr.mxu0 %v158
    %1183 = vmatpush1.msra.mxu0 %v157
    %1184 = vmatprep.subr.mxu0 %v152
    %1185 = vmatpush1.msra.mxu0 %v151
    %1186 = vmatprep.subr.mxu0 %v146
    %1187 = vmatpush1.msra.mxu0 %v145
    %1188 = vmatprep.subr.mxu0 %v140
    %1189 = vmatpush1.msra.mxu0 %v139
    %1190 = vmatprep.subr.mxu0 %v134
    %1191 = vmatpush1.msra.mxu0 %v133
    %1192 = vmatprep.subr.mxu0 %v128
    %1193 = vmatpush1.msra.mxu0 %v127
    %1194 = vmatprep.subr.mxu0 %v122
    %1195 = vmatpush1.msra.mxu0 %v121
    %1196 = vmatprep.subr.mxu0 %v116
    %1197 = vmatpush1.msra.mxu0 %v115
    %1198 = vmatprep.subr.mxu0 %v110
    %1199 = vmatpush1.msra.mxu0 %v109
    %1200 = vmatprep.subr.mxu0 %v104
    %1201 = vmatpush1.msra.mxu0 %v103
    %1202 = vmatprep.subr.mxu0 %v98
    %1203 = vmatpush1.msra.mxu0 %v97
    %1204 = vmatprep.subr.mxu0 %v92
    %1205 = vmatpush1.msra.mxu0 %v91
    %1206 = vmatprep.subr.mxu0 0.0
    %1207 = vmatpush2.msra.mxu0 0.0
    %1208 = vmatprep.subr.mxu0 0.0
    %1209 = vmatpush2.msra.mxu0 0.0
    %1210 = vmatprep.subr.mxu0 0.0
    %1211 = vmatpush2.msra.mxu0 0.0
    %1212 = vmatprep.subr.mxu0 0.0
    %1213 = vmatpush2.msra.mxu0 0.0
    %1214 = vmatprep.subr.mxu0 0.0
    %1215 = vmatpush2.msra.mxu0 0.0
    %1216 = vmatprep.subr.mxu0 0.0
    %1217 = vmatpush2.msra.mxu0 0.0
    %1218 = vmatprep.subr.mxu0 0.0
    %1219 = vmatpush2.msra.mxu0 0.0
    %1220 = vmatprep.subr.mxu0 0.0
    %1221 = vmatpush2.msra.mxu0 0.0
    %1222 = vmatprep.subr.mxu0 0.0
    %1223 = vmatpush2.msra.mxu0 0.0
    %1224 = vmatprep.subr.mxu0 0.0
    %1225 = vmatpush2.msra.mxu0 0.0
    %1226 = vmatprep.subr.mxu0 0.0
    %1227 = vmatpush2.msra.mxu0 0.0
    %1228 = vmatprep.subr.mxu0 0.0
    %1229 = vmatpush2.msra.mxu0 0.0
    %1230 = vmatprep.subr.mxu0 0.0
    %1231 = vmatpush2.msra.mxu0 0.0
    %1232 = vmatprep.subr.mxu0 0.0
    %1233 = vmatpush2.msra.mxu0 0.0
    %1234 = vmatprep.subr.mxu0 0.0
    %1235 = vmatpush2.msra.mxu0 0.0
    %1236 = vmatprep.subr.mxu0 0.0
    %1237 = vmatpush2.msra.mxu0 0.0
    %1238 = vmatprep.mubr.f32.mxu0 0.0
    %1239 = vmatmul.mubr.f32.gmra.mxu0 %v1172
    %v1240 = vpop.f32.mrf.mxu0
    %v1241 = vadd.f32 %v175, %v1240
    %v1242 = vpop.f32.mrf.mxu0
    %v1243 = vadd.f32 %v179, %v1242
    %1244 = vdwg.mxu0
    %1245 = vmatprep.subr.mxu0 0.0
    %1246 = vmatpush1.msra.mxu0 0.0
    %1247 = vmatprep.subr.mxu0 0.0
    %1248 = vmatpush1.msra.mxu0 0.0
    %1249 = vmatprep.subr.mxu0 0.0
    %1250 = vmatpush1.msra.mxu0 0.0
    %1251 = vmatprep.subr.mxu0 %v217
    %1252 = vmatpush1.msra.mxu0 %v214
    %1253 = vmatprep.subr.mxu0 %v160
    %1254 = vmatpush1.msra.mxu0 %v159
    %1255 = vmatprep.subr.mxu0 %v154
    %1256 = vmatpush1.msra.mxu0 %v153
    %1257 = vmatprep.subr.mxu0 %v148
    %1258 = vmatpush1.msra.mxu0 %v147
    %1259 = vmatprep.subr.mxu0 %v142
    %1260 = vmatpush1.msra.mxu0 %v141
    %1261 = vmatprep.subr.mxu0 %v136
    %1262 = vmatpush1.msra.mxu0 %v135
    %1263 = vmatprep.subr.mxu0 %v130
    %1264 = vmatpush1.msra.mxu0 %v129
    %1265 = vmatprep.subr.mxu0 %v124
    %1266 = vmatpush1.msra.mxu0 %v123
    %1267 = vmatprep.subr.mxu0 %v118
    %1268 = vmatpush1.msra.mxu0 %v117
    %1269 = vmatprep.subr.mxu0 %v112
    %1270 = vmatpush1.msra.mxu0 %v111
    %1271 = vmatprep.subr.mxu0 %v106
    %1272 = vmatpush1.msra.mxu0 %v105
    %1273 = vmatprep.subr.mxu0 %v100
    %1274 = vmatpush1.msra.mxu0 %v99
    %1275 = vmatprep.subr.mxu0 %v94
    %1276 = vmatpush1.msra.mxu0 %v93
    %1277 = vmatprep.subr.mxu0 0.0
    %1278 = vmatpush2.msra.mxu0 0.0
    %1279 = vmatprep.subr.mxu0 0.0
    %1280 = vmatpush2.msra.mxu0 0.0
    %1281 = vmatprep.subr.mxu0 0.0
    %1282 = vmatpush2.msra.mxu0 0.0
    %1283 = vmatprep.subr.mxu0 0.0
    %1284 = vmatpush2.msra.mxu0 0.0
    %1285 = vmatprep.subr.mxu0 0.0
    %1286 = vmatpush2.msra.mxu0 0.0
    %1287 = vmatprep.subr.mxu0 0.0
    %1288 = vmatpush2.msra.mxu0 0.0
    %1289 = vmatprep.subr.mxu0 0.0
    %1290 = vmatpush2.msra.mxu0 0.0
    %1291 = vmatprep.subr.mxu0 0.0
    %1292 = vmatpush2.msra.mxu0 0.0
    %1293 = vmatprep.subr.mxu0 0.0
    %1294 = vmatpush2.msra.mxu0 0.0
    %1295 = vmatprep.subr.mxu0 0.0
    %1296 = vmatpush2.msra.mxu0 0.0
    %1297 = vmatprep.subr.mxu0 0.0
    %1298 = vmatpush2.msra.mxu0 0.0
    %1299 = vmatprep.subr.mxu0 0.0
    %1300 = vmatpush2.msra.mxu0 0.0
    %1301 = vmatprep.subr.mxu0 0.0
    %1302 = vmatpush2.msra.mxu0 0.0
    %1303 = vmatprep.subr.mxu0 0.0
    %1304 = vmatpush2.msra.mxu0 0.0
    %1305 = vmatprep.subr.mxu0 0.0
    %1306 = vmatpush2.msra.mxu0 0.0
    %1307 = vmatprep.subr.mxu0 0.0
    %1308 = vmatpush2.msra.mxu0 0.0
    %1309 = vmatprep.mubr.f32.mxu0 0.0
    %1310 = vmatmul.mubr.f32.gmra.mxu0 %v1172
    %v1311 = vpop.f32.mrf.mxu0
    %v1312 = vadd.f32 %v183, %v1311
    %v1313 = vpop.f32.mrf.mxu0
    %v1314 = vadd.f32 %v187, %v1313
    %1315 = vdwg.mxu0
    %1316 = vmatprep.subr.mxu0 0.0
    %1317 = vmatpush1.msra.mxu0 0.0
    %1318 = vmatprep.subr.mxu0 0.0
    %1319 = vmatpush1.msra.mxu0 0.0
    %1320 = vmatprep.subr.mxu0 0.0
    %1321 = vmatpush1.msra.mxu0 0.0
    %1322 = vmatprep.subr.mxu0 %v223
    %1323 = vmatpush1.msra.mxu0 %v220
    %1324 = vmatprep.subr.mxu0 %v162
    %1325 = vmatpush1.msra.mxu0 %v161
    %1326 = vmatprep.subr.mxu0 %v156
    %1327 = vmatpush1.msra.mxu0 %v155
    %1328 = vmatprep.subr.mxu0 %v150
    %1329 = vmatpush1.msra.mxu0 %v149
    %1330 = vmatprep.subr.mxu0 %v144
    %1331 = vmatpush1.msra.mxu0 %v143
    %1332 = vmatprep.subr.mxu0 %v138
    %1333 = vmatpush1.msra.mxu0 %v137
    %1334 = vmatprep.subr.mxu0 %v132
    %1335 = vmatpush1.msra.mxu0 %v131
    %1336 = vmatprep.subr.mxu0 %v126
    %1337 = vmatpush1.msra.mxu0 %v125
    %1338 = vmatprep.subr.mxu0 %v120
    %1339 = vmatpush1.msra.mxu0 %v119
    %1340 = vmatprep.subr.mxu0 %v114
    %1341 = vmatpush1.msra.mxu0 %v113
    %1342 = vmatprep.subr.mxu0 %v108
    %1343 = vmatpush1.msra.mxu0 %v107
    %1344 = vmatprep.subr.mxu0 %v102
    %1345 = vmatpush1.msra.mxu0 %v101
    %1346 = vmatprep.subr.mxu0 %v96
    %1347 = vmatpush1.msra.mxu0 %v95
    %1348 = vmatprep.subr.mxu0 0.0
    %1349 = vmatpush2.msra.mxu0 0.0
    %1350 = vmatprep.subr.mxu0 0.0
    %1351 = vmatpush2.msra.mxu0 0.0
    %1352 = vmatprep.subr.mxu0 0.0
    %1353 = vmatpush2.msra.mxu0 0.0
    %1354 = vmatprep.subr.mxu0 0.0
    %1355 = vmatpush2.msra.mxu0 0.0
    %1356 = vmatprep.subr.mxu0 0.0
    %1357 = vmatpush2.msra.mxu0 0.0
    %1358 = vmatprep.subr.mxu0 0.0
    %1359 = vmatpush2.msra.mxu0 0.0
    %1360 = vmatprep.subr.mxu0 0.0
    %1361 = vmatpush2.msra.mxu0 0.0
    %1362 = vmatprep.subr.mxu0 0.0
    %1363 = vmatpush2.msra.mxu0 0.0
    %1364 = vmatprep.subr.mxu0 0.0
    %1365 = vmatpush2.msra.mxu0 0.0
    %1366 = vmatprep.subr.mxu0 0.0
    %1367 = vmatpush2.msra.mxu0 0.0
    %1368 = vmatprep.subr.mxu0 0.0
    %1369 = vmatpush2.msra.mxu0 0.0
    %1370 = vmatprep.subr.mxu0 0.0
    %1371 = vmatpush2.msra.mxu0 0.0
    %1372 = vmatprep.subr.mxu0 0.0
    %1373 = vmatpush2.msra.mxu0 0.0
    %1374 = vmatprep.subr.mxu0 0.0
    %1375 = vmatpush2.msra.mxu0 0.0
    %1376 = vmatprep.subr.mxu0 0.0
    %1377 = vmatpush2.msra.mxu0 0.0
    %1378 = vmatprep.subr.mxu0 0.0
    %1379 = vmatpush2.msra.mxu0 0.0
    %1380 = vmatprep.mubr.f32.mxu0 0.0
    %1381 = vmatmul.mubr.f32.gmra.mxu0 %v1172
    %v1382 = vpop.f32.mrf.mxu0
    %v1383 = vadd.f32 %v191, %v1382
    %v1384 = vpop.f32.mrf.mxu0
    %v1385 = vadd.f32 %v195, %v1384
    %1386 = vdwg.mxu0
    %v1390 = vcombine.low %v1241, %v1243
    %v1391 = vcombine.high %v1241, %v1243
    %v1392 = vcombine.high %v1312, %v1312
    %v1394 = vunpack.c.l.s4 1966171168
    %v1395 = vunpack.c.0.s8 %v1394
    %v1396 = vlaneseq
    %v1397 = vshrl.u32 %v1396, 7
    %v1398 = vsub.s32 %v1395, %v1397
    %v1399 = vrot.slane %v1390, %v1398
    %v1401 = vunpack.c.l.s4 1966171168
    %v1402 = vunpack.c.0.s8 %v1401
    %v1403 = vlaneseq
    %v1404 = vshrl.u32 %v1403, 7
    %v1405 = vsub.s32 %v1402, %v1404
    %v1406 = vrot.slane %v1391, %v1405
    %v1408 = vunpack.c.l.s4 1966171168
    %v1409 = vunpack.c.0.s8 %v1408
    %v1410 = vlaneseq
    %v1411 = vshrl.u32 %v1410, 7
    %v1412 = vsub.s32 %v1409, %v1411
    %v1413 = vrot.slane %v1312, %v1412
    %v1415 = vunpack.c.l.s4 1966171168
    %v1416 = vunpack.c.0.s8 %v1415
    %v1417 = vlaneseq
    %v1418 = vshrl.u32 %v1417, 7
    %v1419 = vsub.s32 %v1416, %v1418
    %v1420 = vrot.slane %v1392, %v1419
    %v1421 = vcombine.low %v1399, %v1413
    %v1422 = vcombine.high %v1399, %v1413
    %v1423 = vcombine.low %v1406, %v1420
    %v1424 = vcombine.high %v1406, %v1420
    %v1426 = vunpack.c.l.s4 1966171168
    %v1427 = vunpack.c.0.s8 %v1426
    %v1428 = vlaneseq
    %v1429 = vshrl.u32 %v1428, 7
    %v1430 = vsub.s32 %v1427, %v1429
    %v1431 = vrot.slane %v1421, %v1430
    %v1433 = vunpack.c.l.s4 1966171168
    %v1434 = vunpack.c.0.s8 %v1433
    %v1435 = vlaneseq
    %v1436 = vshrl.u32 %v1435, 7
    %v1437 = vsub.s32 %v1434, %v1436
    %v1438 = vrot.slane %v1423, %v1437
    %v1440 = vunpack.c.l.s4 1966171168
    %v1441 = vunpack.c.0.s8 %v1440
    %v1442 = vlaneseq
    %v1443 = vshrl.u32 %v1442, 7
    %v1444 = vsub.s32 %v1441, %v1443
    %v1445 = vrot.slane %v1422, %v1444
    %v1447 = vunpack.c.l.s4 1966171168
    %v1448 = vunpack.c.0.s8 %v1447
    %v1449 = vlaneseq
    %v1450 = vshrl.u32 %v1449, 7
    %v1451 = vsub.s32 %v1448, %v1450
    %v1452 = vrot.slane %v1424, %v1451
    %v1453 = vcombine.high %v1431, %v1431
    %v1454 = vcombine.high %v1438, %v1438
    %v1455 = vcombine.high %v1445, %v1445
    %v1456 = vcombine.high %v1452, %v1452
    %s1465 = scalar_lea.vmem [#allocation2], 2
    %1466 = vst.msk [vmem:[%s1465] ss:$8 sm:$0x7] %vm519, %v1431
    %1467 = vst.msk [vmem:[%s1465] ss:$8 sm:$0x0] %vm519, %v1431
    %s1468 = scalar_lea.vmem [#allocation2], 26
    %1469 = vst.msk [vmem:[%s1468] ss:$8 sm:$0x7] %vm519, %v1445
    %1470 = vst.msk [vmem:[%s1468] ss:$8 sm:$0x0] %vm519, %v1445
    %s1471 = scalar_lea.vmem [#allocation2], 50
    %1472 = vst.msk [vmem:[%s1471] ss:$8 sm:$0x7] %vm519, %v1453
    %1473 = vst.msk [vmem:[%s1471] ss:$8 sm:$0x0] %vm519, %v1453
    %s1474 = scalar_lea.vmem [#allocation2], 74
    %1475 = vst.msk [vmem:[%s1474] ss:$8 sm:$0x7] %vm519, %v1455
    %1476 = vst.msk [vmem:[%s1474] ss:$8 sm:$0x0] %vm519, %v1455
    %s1477 = scalar_lea.vmem [#allocation2], 98
    %1478 = vst.msk [vmem:[%s1477] ss:$8 sm:$0x7] %vm519, %v1438
    %1479 = vst.msk [vmem:[%s1477] ss:$8 sm:$0x0] %vm519, %v1438
    %s1480 = scalar_lea.vmem [#allocation2], 122
    %1481 = vst.msk [vmem:[%s1480] ss:$8 sm:$0x7] %vm519, %v1452
    %1482 = vst.msk [vmem:[%s1480] ss:$8 sm:$0x0] %vm519, %v1452
    %s1483 = scalar_lea.vmem [#allocation2], 146
    %1484 = vst.msk [vmem:[%s1483] ss:$8 sm:$0x7] %vm519, %v1454
    %1485 = vst.msk [vmem:[%s1483] ss:$8 sm:$0x0] %vm519, %v1454
    %s1486 = scalar_lea.vmem [#allocation2], 170
    %1487 = vst.msk [vmem:[%s1486] ss:$8 sm:$0x7] %vm519, %v1456
    %1488 = vst.msk [vmem:[%s1486] ss:$8 sm:$0x0] %vm519, %v1456
    %v1492 = vrot.slane %v1314, 7
    %v1493 = vrot.slane %v1383, 7
    %v1494 = vrot.slane %v1385, 7
    %v1498 = vrot.slane %v1314, 5
    %v1499 = vrot.slane %v1383, 5
    %v1500 = vrot.slane %v1385, 5
    %v1504 = vrot.slane %v1314, 3
    %v1505 = vrot.slane %v1383, 3
    %v1506 = vrot.slane %v1385, 3
    %v1510 = vrot.slane %v1314, 1
    %v1511 = vrot.slane %v1383, 1
    %v1512 = vrot.slane %v1385, 1
    %v1516 = vsel %vm570, %v1492, %v1498
    %v1517 = vsel %vm570, %v1493, %v1499
    %v1518 = vsel %vm570, %v1494, %v1500
    %v1519 = vsel %vm574, %v1516, %v1504
    %v1520 = vsel %vm574, %v1517, %v1505
    %v1521 = vsel %vm574, %v1518, %v1506
    %v1522 = vsel %vm578, %v1519, %v1510
    %v1523 = vsel %vm578, %v1520, %v1511
    %v1524 = vsel %vm578, %v1521, %v1512
    %v1525 = vsel %vm206, %v1522, %v1492
    %v1526 = vsel %vm206, %v1523, %v1493
    %v1527 = vsel %vm206, %v1524, %v1494
    %v1528 = vsel %vm585, %v1525, %v1498
    %v1529 = vsel %vm585, %v1526, %v1499
    %v1530 = vsel %vm585, %v1527, %v1500
    %v1531 = vsel %vm589, %v1528, %v1504
    %v1532 = vsel %vm589, %v1529, %v1505
    %v1533 = vsel %vm589, %v1530, %v1506
    %v1534 = vsel %vm593, %v1531, %v1510
    %v1535 = vsel %vm593, %v1532, %v1511
    %v1536 = vsel %vm593, %v1533, %v1512
    %v1540 = vcombine.low %v1534, %v1535
    %v1541 = vcombine.high %v1534, %v1535
    %v1542 = vcombine.high %v1536, %v1536
    %v1544 = vunpack.c.l.s4 1966171168
    %v1545 = vunpack.c.0.s8 %v1544
    %v1546 = vlaneseq
    %v1547 = vshrl.u32 %v1546, 7
    %v1548 = vsub.s32 %v1545, %v1547
    %v1549 = vrot.slane %v1540, %v1548
    %v1551 = vunpack.c.l.s4 1966171168
    %v1552 = vunpack.c.0.s8 %v1551
    %v1553 = vlaneseq
    %v1554 = vshrl.u32 %v1553, 7
    %v1555 = vsub.s32 %v1552, %v1554
    %v1556 = vrot.slane %v1541, %v1555
    %v1558 = vunpack.c.l.s4 1966171168
    %v1559 = vunpack.c.0.s8 %v1558
    %v1560 = vlaneseq
    %v1561 = vshrl.u32 %v1560, 7
    %v1562 = vsub.s32 %v1559, %v1561
    %v1563 = vrot.slane %v1536, %v1562
    %v1565 = vunpack.c.l.s4 1966171168
    %v1566 = vunpack.c.0.s8 %v1565
    %v1567 = vlaneseq
    %v1568 = vshrl.u32 %v1567, 7
    %v1569 = vsub.s32 %v1566, %v1568
    %v1570 = vrot.slane %v1542, %v1569
    %v1571 = vcombine.low %v1549, %v1563
    %v1572 = vcombine.high %v1549, %v1563
    %v1573 = vcombine.low %v1556, %v1570
    %v1574 = vcombine.high %v1556, %v1570
    %v1576 = vunpack.c.l.s4 1966171168
    %v1577 = vunpack.c.0.s8 %v1576
    %v1578 = vlaneseq
    %v1579 = vshrl.u32 %v1578, 7
    %v1580 = vsub.s32 %v1577, %v1579
    %v1581 = vrot.slane %v1571, %v1580
    %v1583 = vunpack.c.l.s4 1966171168
    %v1584 = vunpack.c.0.s8 %v1583
    %v1585 = vlaneseq
    %v1586 = vshrl.u32 %v1585, 7
    %v1587 = vsub.s32 %v1584, %v1586
    %v1588 = vrot.slane %v1573, %v1587
    %v1590 = vunpack.c.l.s4 1966171168
    %v1591 = vunpack.c.0.s8 %v1590
    %v1592 = vlaneseq
    %v1593 = vshrl.u32 %v1592, 7
    %v1594 = vsub.s32 %v1591, %v1593
    %v1595 = vrot.slane %v1572, %v1594
    %v1597 = vunpack.c.l.s4 1966171168
    %v1598 = vunpack.c.0.s8 %v1597
    %v1599 = vlaneseq
    %v1600 = vshrl.u32 %v1599, 7
    %v1601 = vsub.s32 %v1598, %v1600
    %v1602 = vrot.slane %v1574, %v1601
    %v1603 = vcombine.high %v1581, %v1581
    %v1604 = vcombine.high %v1588, %v1588
    %v1605 = vcombine.high %v1595, %v1595
    %v1606 = vcombine.high %v1602, %v1602
    %s1615 = scalar_lea.vmem [#allocation2], 6
    %1616 = vst.msk [vmem:[%s1615] ss:$8 sm:$0x7] %vm519, %v1581
    %1617 = vst.msk [vmem:[%s1615] ss:$8 sm:$0x0] %vm519, %v1581
    %s1618 = scalar_lea.vmem [#allocation2], 30
    %1619 = vst.msk [vmem:[%s1618] ss:$8 sm:$0x7] %vm519, %v1595
    %1620 = vst.msk [vmem:[%s1618] ss:$8 sm:$0x0] %vm519, %v1595
    %s1621 = scalar_lea.vmem [#allocation2], 54
    %1622 = vst.msk [vmem:[%s1621] ss:$8 sm:$0x7] %vm519, %v1603
    %1623 = vst.msk [vmem:[%s1621] ss:$8 sm:$0x0] %vm519, %v1603
    %s1624 = scalar_lea.vmem [#allocation2], 78
    %1625 = vst.msk [vmem:[%s1624] ss:$8 sm:$0x7] %vm519, %v1605
    %1626 = vst.msk [vmem:[%s1624] ss:$8 sm:$0x0] %vm519, %v1605
    %s1627 = scalar_lea.vmem [#allocation2], 102
    %1628 = vst.msk [vmem:[%s1627] ss:$8 sm:$0x7] %vm519, %v1588
    %1629 = vst.msk [vmem:[%s1627] ss:$8 sm:$0x0] %vm519, %v1588
    %s1630 = scalar_lea.vmem [#allocation2], 126
    %1631 = vst.msk [vmem:[%s1630] ss:$8 sm:$0x7] %vm519, %v1602
    %1632 = vst.msk [vmem:[%s1630] ss:$8 sm:$0x0] %vm519, %v1602
    %s1633 = scalar_lea.vmem [#allocation2], 150
    %1634 = vst.msk [vmem:[%s1633] ss:$8 sm:$0x7] %vm519, %v1604
    %1635 = vst.msk [vmem:[%s1633] ss:$8 sm:$0x0] %vm519, %v1604
    %s1636 = scalar_lea.vmem [#allocation2], 174
    %1637 = vst.msk [vmem:[%s1636] ss:$8 sm:$0x7] %vm519, %v1606
    %1638 = vst.msk [vmem:[%s1636] ss:$8 sm:$0x0] %vm519, %v1606
    %s1639 = scalar_lea.vmem [#allocation3], 24
    %v1640 = vld [vmem:[%s1639] sm:$0xff]
    %v1642 = vsel %vm202, %v1640, 0
    %1644 = vmatprep.subr.mxu0 0.0
    %1645 = vmatpush1.msra.mxu0 0.0
    %1646 = vmatprep.subr.mxu0 0.0
    %1647 = vmatpush1.msra.mxu0 0.0
    %1648 = vmatprep.subr.mxu0 0.0
    %1649 = vmatpush1.msra.mxu0 0.0
    %1650 = vmatprep.subr.mxu0 %v211
    %1651 = vmatpush1.msra.mxu0 %v208
    %1652 = vmatprep.subr.mxu0 %v158
    %1653 = vmatpush1.msra.mxu0 %v157
    %1654 = vmatprep.subr.mxu0 %v152
    %1655 = vmatpush1.msra.mxu0 %v151
    %1656 = vmatprep.subr.mxu0 %v146
    %1657 = vmatpush1.msra.mxu0 %v145
    %1658 = vmatprep.subr.mxu0 %v140
    %1659 = vmatpush1.msra.mxu0 %v139
    %1660 = vmatprep.subr.mxu0 %v134
    %1661 = vmatpush1.msra.mxu0 %v133
    %1662 = vmatprep.subr.mxu0 %v128
    %1663 = vmatpush1.msra.mxu0 %v127
    %1664 = vmatprep.subr.mxu0 %v122
    %1665 = vmatpush1.msra.mxu0 %v121
    %1666 = vmatprep.subr.mxu0 %v116
    %1667 = vmatpush1.msra.mxu0 %v115
    %1668 = vmatprep.subr.mxu0 %v110
    %1669 = vmatpush1.msra.mxu0 %v109
    %1670 = vmatprep.subr.mxu0 %v104
    %1671 = vmatpush1.msra.mxu0 %v103
    %1672 = vmatprep.subr.mxu0 %v98
    %1673 = vmatpush1.msra.mxu0 %v97
    %1674 = vmatprep.subr.mxu0 %v92
    %1675 = vmatpush1.msra.mxu0 %v91
    %1676 = vmatprep.subr.mxu0 0.0
    %1677 = vmatpush2.msra.mxu0 0.0
    %1678 = vmatprep.subr.mxu0 0.0
    %1679 = vmatpush2.msra.mxu0 0.0
    %1680 = vmatprep.subr.mxu0 0.0
    %1681 = vmatpush2.msra.mxu0 0.0
    %1682 = vmatprep.subr.mxu0 0.0
    %1683 = vmatpush2.msra.mxu0 0.0
    %1684 = vmatprep.subr.mxu0 0.0
    %1685 = vmatpush2.msra.mxu0 0.0
    %1686 = vmatprep.subr.mxu0 0.0
    %1687 = vmatpush2.msra.mxu0 0.0
    %1688 = vmatprep.subr.mxu0 0.0
    %1689 = vmatpush2.msra.mxu0 0.0
    %1690 = vmatprep.subr.mxu0 0.0
    %1691 = vmatpush2.msra.mxu0 0.0
    %1692 = vmatprep.subr.mxu0 0.0
    %1693 = vmatpush2.msra.mxu0 0.0
    %1694 = vmatprep.subr.mxu0 0.0
    %1695 = vmatpush2.msra.mxu0 0.0
    %1696 = vmatprep.subr.mxu0 0.0
    %1697 = vmatpush2.msra.mxu0 0.0
    %1698 = vmatprep.subr.mxu0 0.0
    %1699 = vmatpush2.msra.mxu0 0.0
    %1700 = vmatprep.subr.mxu0 0.0
    %1701 = vmatpush2.msra.mxu0 0.0
    %1702 = vmatprep.subr.mxu0 0.0
    %1703 = vmatpush2.msra.mxu0 0.0
    %1704 = vmatprep.subr.mxu0 0.0
    %1705 = vmatpush2.msra.mxu0 0.0
    %1706 = vmatprep.subr.mxu0 0.0
    %1707 = vmatpush2.msra.mxu0 0.0
    %1708 = vmatprep.mubr.f32.mxu0 0.0
    %1709 = vmatmul.mubr.f32.gmra.mxu0 %v1642
    %v1710 = vpop.f32.mrf.mxu0
    %v1711 = vadd.f32 %v175, %v1710
    %v1712 = vpop.f32.mrf.mxu0
    %v1713 = vadd.f32 %v179, %v1712
    %1714 = vdwg.mxu0
    %1715 = vmatprep.subr.mxu0 0.0
    %1716 = vmatpush1.msra.mxu0 0.0
    %1717 = vmatprep.subr.mxu0 0.0
    %1718 = vmatpush1.msra.mxu0 0.0
    %1719 = vmatprep.subr.mxu0 0.0
    %1720 = vmatpush1.msra.mxu0 0.0
    %1721 = vmatprep.subr.mxu0 %v217
    %1722 = vmatpush1.msra.mxu0 %v214
    %1723 = vmatprep.subr.mxu0 %v160
    %1724 = vmatpush1.msra.mxu0 %v159
    %1725 = vmatprep.subr.mxu0 %v154
    %1726 = vmatpush1.msra.mxu0 %v153
    %1727 = vmatprep.subr.mxu0 %v148
    %1728 = vmatpush1.msra.mxu0 %v147
    %1729 = vmatprep.subr.mxu0 %v142
    %1730 = vmatpush1.msra.mxu0 %v141
    %1731 = vmatprep.subr.mxu0 %v136
    %1732 = vmatpush1.msra.mxu0 %v135
    %1733 = vmatprep.subr.mxu0 %v130
    %1734 = vmatpush1.msra.mxu0 %v129
    %1735 = vmatprep.subr.mxu0 %v124
    %1736 = vmatpush1.msra.mxu0 %v123
    %1737 = vmatprep.subr.mxu0 %v118
    %1738 = vmatpush1.msra.mxu0 %v117
    %1739 = vmatprep.subr.mxu0 %v112
    %1740 = vmatpush1.msra.mxu0 %v111
    %1741 = vmatprep.subr.mxu0 %v106
    %1742 = vmatpush1.msra.mxu0 %v105
    %1743 = vmatprep.subr.mxu0 %v100
    %1744 = vmatpush1.msra.mxu0 %v99
    %1745 = vmatprep.subr.mxu0 %v94
    %1746 = vmatpush1.msra.mxu0 %v93
    %1747 = vmatprep.subr.mxu0 0.0
    %1748 = vmatpush2.msra.mxu0 0.0
    %1749 = vmatprep.subr.mxu0 0.0
    %1750 = vmatpush2.msra.mxu0 0.0
    %1751 = vmatprep.subr.mxu0 0.0
    %1752 = vmatpush2.msra.mxu0 0.0
    %1753 = vmatprep.subr.mxu0 0.0
    %1754 = vmatpush2.msra.mxu0 0.0
    %1755 = vmatprep.subr.mxu0 0.0
    %1756 = vmatpush2.msra.mxu0 0.0
    %1757 = vmatprep.subr.mxu0 0.0
    %1758 = vmatpush2.msra.mxu0 0.0
    %1759 = vmatprep.subr.mxu0 0.0
    %1760 = vmatpush2.msra.mxu0 0.0
    %1761 = vmatprep.subr.mxu0 0.0
    %1762 = vmatpush2.msra.mxu0 0.0
    %1763 = vmatprep.subr.mxu0 0.0
    %1764 = vmatpush2.msra.mxu0 0.0
    %1765 = vmatprep.subr.mxu0 0.0
    %1766 = vmatpush2.msra.mxu0 0.0
    %1767 = vmatprep.subr.mxu0 0.0
    %1768 = vmatpush2.msra.mxu0 0.0
    %1769 = vmatprep.subr.mxu0 0.0
    %1770 = vmatpush2.msra.mxu0 0.0
    %1771 = vmatprep.subr.mxu0 0.0
    %1772 = vmatpush2.msra.mxu0 0.0
    %1773 = vmatprep.subr.mxu0 0.0
    %1774 = vmatpush2.msra.mxu0 0.0
    %1775 = vmatprep.subr.mxu0 0.0
    %1776 = vmatpush2.msra.mxu0 0.0
    %1777 = vmatprep.subr.mxu0 0.0
    %1778 = vmatpush2.msra.mxu0 0.0
    %1779 = vmatprep.mubr.f32.mxu0 0.0
    %1780 = vmatmul.mubr.f32.gmra.mxu0 %v1642
    %v1781 = vpop.f32.mrf.mxu0
    %v1782 = vadd.f32 %v183, %v1781
    %v1783 = vpop.f32.mrf.mxu0
    %v1784 = vadd.f32 %v187, %v1783
    %1785 = vdwg.mxu0
    %1786 = vmatprep.subr.mxu0 0.0
    %1787 = vmatpush1.msra.mxu0 0.0
    %1788 = vmatprep.subr.mxu0 0.0
    %1789 = vmatpush1.msra.mxu0 0.0
    %1790 = vmatprep.subr.mxu0 0.0
    %1791 = vmatpush1.msra.mxu0 0.0
    %1792 = vmatprep.subr.mxu0 %v223
    %1793 = vmatpush1.msra.mxu0 %v220
    %1794 = vmatprep.subr.mxu0 %v162
    %1795 = vmatpush1.msra.mxu0 %v161
    %1796 = vmatprep.subr.mxu0 %v156
    %1797 = vmatpush1.msra.mxu0 %v155
    %1798 = vmatprep.subr.mxu0 %v150
    %1799 = vmatpush1.msra.mxu0 %v149
    %1800 = vmatprep.subr.mxu0 %v144
    %1801 = vmatpush1.msra.mxu0 %v143
    %1802 = vmatprep.subr.mxu0 %v138
    %1803 = vmatpush1.msra.mxu0 %v137
    %1804 = vmatprep.subr.mxu0 %v132
    %1805 = vmatpush1.msra.mxu0 %v131
    %1806 = vmatprep.subr.mxu0 %v126
    %1807 = vmatpush1.msra.mxu0 %v125
    %1808 = vmatprep.subr.mxu0 %v120
    %1809 = vmatpush1.msra.mxu0 %v119
    %1810 = vmatprep.subr.mxu0 %v114
    %1811 = vmatpush1.msra.mxu0 %v113
    %1812 = vmatprep.subr.mxu0 %v108
    %1813 = vmatpush1.msra.mxu0 %v107
    %1814 = vmatprep.subr.mxu0 %v102
    %1815 = vmatpush1.msra.mxu0 %v101
    %1816 = vmatprep.subr.mxu0 %v96
    %1817 = vmatpush1.msra.mxu0 %v95
    %1818 = vmatprep.subr.mxu0 0.0
    %1819 = vmatpush2.msra.mxu0 0.0
    %1820 = vmatprep.subr.mxu0 0.0
    %1821 = vmatpush2.msra.mxu0 0.0
    %1822 = vmatprep.subr.mxu0 0.0
    %1823 = vmatpush2.msra.mxu0 0.0
    %1824 = vmatprep.subr.mxu0 0.0
    %1825 = vmatpush2.msra.mxu0 0.0
    %1826 = vmatprep.subr.mxu0 0.0
    %1827 = vmatpush2.msra.mxu0 0.0
    %1828 = vmatprep.subr.mxu0 0.0
    %1829 = vmatpush2.msra.mxu0 0.0
    %1830 = vmatprep.subr.mxu0 0.0
    %1831 = vmatpush2.msra.mxu0 0.0
    %1832 = vmatprep.subr.mxu0 0.0
    %1833 = vmatpush2.msra.mxu0 0.0
    %1834 = vmatprep.subr.mxu0 0.0
    %1835 = vmatpush2.msra.mxu0 0.0
    %1836 = vmatprep.subr.mxu0 0.0
    %1837 = vmatpush2.msra.mxu0 0.0
    %1838 = vmatprep.subr.mxu0 0.0
    %1839 = vmatpush2.msra.mxu0 0.0
    %1840 = vmatprep.subr.mxu0 0.0
    %1841 = vmatpush2.msra.mxu0 0.0
    %1842 = vmatprep.subr.mxu0 0.0
    %1843 = vmatpush2.msra.mxu0 0.0
    %1844 = vmatprep.subr.mxu0 0.0
    %1845 = vmatpush2.msra.mxu0 0.0
    %1846 = vmatprep.subr.mxu0 0.0
    %1847 = vmatpush2.msra.mxu0 0.0
    %1848 = vmatprep.subr.mxu0 0.0
    %1849 = vmatpush2.msra.mxu0 0.0
    %1850 = vmatprep.mubr.f32.mxu0 0.0
    %1851 = vmatmul.mubr.f32.gmra.mxu0 %v1642
    %v1852 = vpop.f32.mrf.mxu0
    %v1853 = vadd.f32 %v191, %v1852
    %v1854 = vpop.f32.mrf.mxu0
    %v1855 = vadd.f32 %v195, %v1854
    %1856 = vdwg.mxu0
    %v1860 = vcombine.low %v1711, %v1713
    %v1861 = vcombine.high %v1711, %v1713
    %v1862 = vcombine.high %v1782, %v1782
    %v1864 = vunpack.c.l.s4 1966171168
    %v1865 = vunpack.c.0.s8 %v1864
    %v1866 = vlaneseq
    %v1867 = vshrl.u32 %v1866, 7
    %v1868 = vsub.s32 %v1865, %v1867
    %v1869 = vrot.slane %v1860, %v1868
    %v1871 = vunpack.c.l.s4 1966171168
    %v1872 = vunpack.c.0.s8 %v1871
    %v1873 = vlaneseq
    %v1874 = vshrl.u32 %v1873, 7
    %v1875 = vsub.s32 %v1872, %v1874
    %v1876 = vrot.slane %v1861, %v1875
    %v1878 = vunpack.c.l.s4 1966171168
    %v1879 = vunpack.c.0.s8 %v1878
    %v1880 = vlaneseq
    %v1881 = vshrl.u32 %v1880, 7
    %v1882 = vsub.s32 %v1879, %v1881
    %v1883 = vrot.slane %v1782, %v1882
    %v1885 = vunpack.c.l.s4 1966171168
    %v1886 = vunpack.c.0.s8 %v1885
    %v1887 = vlaneseq
    %v1888 = vshrl.u32 %v1887, 7
    %v1889 = vsub.s32 %v1886, %v1888
    %v1890 = vrot.slane %v1862, %v1889
    %v1891 = vcombine.low %v1869, %v1883
    %v1892 = vcombine.high %v1869, %v1883
    %v1893 = vcombine.low %v1876, %v1890
    %v1894 = vcombine.high %v1876, %v1890
    %v1896 = vunpack.c.l.s4 1966171168
    %v1897 = vunpack.c.0.s8 %v1896
    %v1898 = vlaneseq
    %v1899 = vshrl.u32 %v1898, 7
    %v1900 = vsub.s32 %v1897, %v1899
    %v1901 = vrot.slane %v1891, %v1900
    %v1903 = vunpack.c.l.s4 1966171168
    %v1904 = vunpack.c.0.s8 %v1903
    %v1905 = vlaneseq
    %v1906 = vshrl.u32 %v1905, 7
    %v1907 = vsub.s32 %v1904, %v1906
    %v1908 = vrot.slane %v1893, %v1907
    %v1910 = vunpack.c.l.s4 1966171168
    %v1911 = vunpack.c.0.s8 %v1910
    %v1912 = vlaneseq
    %v1913 = vshrl.u32 %v1912, 7
    %v1914 = vsub.s32 %v1911, %v1913
    %v1915 = vrot.slane %v1892, %v1914
    %v1917 = vunpack.c.l.s4 1966171168
    %v1918 = vunpack.c.0.s8 %v1917
    %v1919 = vlaneseq
    %v1920 = vshrl.u32 %v1919, 7
    %v1921 = vsub.s32 %v1918, %v1920
    %v1922 = vrot.slane %v1894, %v1921
    %v1923 = vcombine.high %v1901, %v1901
    %v1924 = vcombine.high %v1908, %v1908
    %v1925 = vcombine.high %v1915, %v1915
    %v1926 = vcombine.high %v1922, %v1922
    %s1935 = scalar_lea.vmem [#allocation2], 3
    %1936 = vst.msk [vmem:[%s1935] ss:$8 sm:$0x7] %vm519, %v1901
    %1937 = vst.msk [vmem:[%s1935] ss:$8 sm:$0x0] %vm519, %v1901
    %s1938 = scalar_lea.vmem [#allocation2], 27
    %1939 = vst.msk [vmem:[%s1938] ss:$8 sm:$0x7] %vm519, %v1915
    %1940 = vst.msk [vmem:[%s1938] ss:$8 sm:$0x0] %vm519, %v1915
    %s1941 = scalar_lea.vmem [#allocation2], 51
    %1942 = vst.msk [vmem:[%s1941] ss:$8 sm:$0x7] %vm519, %v1923
    %1943 = vst.msk [vmem:[%s1941] ss:$8 sm:$0x0] %vm519, %v1923
    %s1944 = scalar_lea.vmem [#allocation2], 75
    %1945 = vst.msk [vmem:[%s1944] ss:$8 sm:$0x7] %vm519, %v1925
    %1946 = vst.msk [vmem:[%s1944] ss:$8 sm:$0x0] %vm519, %v1925
    %s1947 = scalar_lea.vmem [#allocation2], 99
    %1948 = vst.msk [vmem:[%s1947] ss:$8 sm:$0x7] %vm519, %v1908
    %1949 = vst.msk [vmem:[%s1947] ss:$8 sm:$0x0] %vm519, %v1908
    %s1950 = scalar_lea.vmem [#allocation2], 123
    %1951 = vst.msk [vmem:[%s1950] ss:$8 sm:$0x7] %vm519, %v1922
    %1952 = vst.msk [vmem:[%s1950] ss:$8 sm:$0x0] %vm519, %v1922
    %s1953 = scalar_lea.vmem [#allocation2], 147
    %1954 = vst.msk [vmem:[%s1953] ss:$8 sm:$0x7] %vm519, %v1924
    %1955 = vst.msk [vmem:[%s1953] ss:$8 sm:$0x0] %vm519, %v1924
    %s1956 = scalar_lea.vmem [#allocation2], 171
    %1957 = vst.msk [vmem:[%s1956] ss:$8 sm:$0x7] %vm519, %v1926
    %1958 = vst.msk [vmem:[%s1956] ss:$8 sm:$0x0] %vm519, %v1926
    %v1962 = vrot.slane %v1784, 7
    %v1963 = vrot.slane %v1853, 7
    %v1964 = vrot.slane %v1855, 7
    %v1968 = vrot.slane %v1784, 5
    %v1969 = vrot.slane %v1853, 5
    %v1970 = vrot.slane %v1855, 5
    %v1974 = vrot.slane %v1784, 3
    %v1975 = vrot.slane %v1853, 3
    %v1976 = vrot.slane %v1855, 3
    %v1980 = vrot.slane %v1784, 1
    %v1981 = vrot.slane %v1853, 1
    %v1982 = vrot.slane %v1855, 1
    %v1986 = vsel %vm570, %v1962, %v1968
    %v1987 = vsel %vm570, %v1963, %v1969
    %v1988 = vsel %vm570, %v1964, %v1970
    %v1989 = vsel %vm574, %v1986, %v1974
    %v1990 = vsel %vm574, %v1987, %v1975
    %v1991 = vsel %vm574, %v1988, %v1976
    %v1992 = vsel %vm578, %v1989, %v1980
    %v1993 = vsel %vm578, %v1990, %v1981
    %v1994 = vsel %vm578, %v1991, %v1982
    %v1995 = vsel %vm206, %v1992, %v1962
    %v1996 = vsel %vm206, %v1993, %v1963
    %v1997 = vsel %vm206, %v1994, %v1964
    %v1998 = vsel %vm585, %v1995, %v1968
    %v1999 = vsel %vm585, %v1996, %v1969
    %v2000 = vsel %vm585, %v1997, %v1970
    %v2001 = vsel %vm589, %v1998, %v1974
    %v2002 = vsel %vm589, %v1999, %v1975
    %v2003 = vsel %vm589, %v2000, %v1976
    %v2004 = vsel %vm593, %v2001, %v1980
    %v2005 = vsel %vm593, %v2002, %v1981
    %v2006 = vsel %vm593, %v2003, %v1982
    %v2010 = vcombine.low %v2004, %v2005
    %v2011 = vcombine.high %v2004, %v2005
    %v2012 = vcombine.high %v2006, %v2006
    %v2014 = vunpack.c.l.s4 1966171168
    %v2015 = vunpack.c.0.s8 %v2014
    %v2016 = vlaneseq
    %v2017 = vshrl.u32 %v2016, 7
    %v2018 = vsub.s32 %v2015, %v2017
    %v2019 = vrot.slane %v2010, %v2018
    %v2021 = vunpack.c.l.s4 1966171168
    %v2022 = vunpack.c.0.s8 %v2021
    %v2023 = vlaneseq
    %v2024 = vshrl.u32 %v2023, 7
    %v2025 = vsub.s32 %v2022, %v2024
    %v2026 = vrot.slane %v2011, %v2025
    %v2028 = vunpack.c.l.s4 1966171168
    %v2029 = vunpack.c.0.s8 %v2028
    %v2030 = vlaneseq
    %v2031 = vshrl.u32 %v2030, 7
    %v2032 = vsub.s32 %v2029, %v2031
    %v2033 = vrot.slane %v2006, %v2032
    %v2035 = vunpack.c.l.s4 1966171168
    %v2036 = vunpack.c.0.s8 %v2035
    %v2037 = vlaneseq
    %v2038 = vshrl.u32 %v2037, 7
    %v2039 = vsub.s32 %v2036, %v2038
    %v2040 = vrot.slane %v2012, %v2039
    %v2041 = vcombine.low %v2019, %v2033
    %v2042 = vcombine.high %v2019, %v2033
    %v2043 = vcombine.low %v2026, %v2040
    %v2044 = vcombine.high %v2026, %v2040
    %v2046 = vunpack.c.l.s4 1966171168
    %v2047 = vunpack.c.0.s8 %v2046
    %v2048 = vlaneseq
    %v2049 = vshrl.u32 %v2048, 7
    %v2050 = vsub.s32 %v2047, %v2049
    %v2051 = vrot.slane %v2041, %v2050
    %v2053 = vunpack.c.l.s4 1966171168
    %v2054 = vunpack.c.0.s8 %v2053
    %v2055 = vlaneseq
    %v2056 = vshrl.u32 %v2055, 7
    %v2057 = vsub.s32 %v2054, %v2056
    %v2058 = vrot.slane %v2043, %v2057
    %v2060 = vunpack.c.l.s4 1966171168
    %v2061 = vunpack.c.0.s8 %v2060
    %v2062 = vlaneseq
    %v2063 = vshrl.u32 %v2062, 7
    %v2064 = vsub.s32 %v2061, %v2063
    %v2065 = vrot.slane %v2042, %v2064
    %v2067 = vunpack.c.l.s4 1966171168
    %v2068 = vunpack.c.0.s8 %v2067
    %v2069 = vlaneseq
    %v2070 = vshrl.u32 %v2069, 7
    %v2071 = vsub.s32 %v2068, %v2070
    %v2072 = vrot.slane %v2044, %v2071
    %v2073 = vcombine.high %v2051, %v2051
    %v2074 = vcombine.high %v2058, %v2058
    %v2075 = vcombine.high %v2065, %v2065
    %v2076 = vcombine.high %v2072, %v2072
    %s2085 = scalar_lea.vmem [#allocation2], 7
    %2086 = vst.msk [vmem:[%s2085] ss:$8 sm:$0x7] %vm519, %v2051
    %2087 = vst.msk [vmem:[%s2085] ss:$8 sm:$0x0] %vm519, %v2051
    %s2088 = scalar_lea.vmem [#allocation2], 31
    %2089 = vst.msk [vmem:[%s2088] ss:$8 sm:$0x7] %vm519, %v2065
    %2090 = vst.msk [vmem:[%s2088] ss:$8 sm:$0x0] %vm519, %v2065
    %s2091 = scalar_lea.vmem [#allocation2], 55
    %2092 = vst.msk [vmem:[%s2091] ss:$8 sm:$0x7] %vm519, %v2073
    %2093 = vst.msk [vmem:[%s2091] ss:$8 sm:$0x0] %vm519, %v2073
    %s2094 = scalar_lea.vmem [#allocation2], 79
    %2095 = vst.msk [vmem:[%s2094] ss:$8 sm:$0x7] %vm519, %v2075
    %2096 = vst.msk [vmem:[%s2094] ss:$8 sm:$0x0] %vm519, %v2075
    %s2097 = scalar_lea.vmem [#allocation2], 103
    %2098 = vst.msk [vmem:[%s2097] ss:$8 sm:$0x7] %vm519, %v2058
    %2099 = vst.msk [vmem:[%s2097] ss:$8 sm:$0x0] %vm519, %v2058
    %s2100 = scalar_lea.vmem [#allocation2], 127
    %2101 = vst.msk [vmem:[%s2100] ss:$8 sm:$0x7] %vm519, %v2072
    %2102 = vst.msk [vmem:[%s2100] ss:$8 sm:$0x0] %vm519, %v2072
    %s2103 = scalar_lea.vmem [#allocation2], 151
    %2104 = vst.msk [vmem:[%s2103] ss:$8 sm:$0x7] %vm519, %v2074
    %2105 = vst.msk [vmem:[%s2103] ss:$8 sm:$0x0] %vm519, %v2074
    %s2106 = scalar_lea.vmem [#allocation2], 175
    %2107 = vst.msk [vmem:[%s2106] ss:$8 sm:$0x7] %vm519, %v2076
    %2108 = vst.msk [vmem:[%s2106] ss:$8 sm:$0x0] %vm519, %v2076
    %v2109 = vld [vmem:[#allocation8] sm:$0xff]
    %v2110 = vld [vmem:[#allocation8 + $0x8] sm:$0xff]
    %v2111 = vld [vmem:[#allocation8 + $0x10] sm:$0xff]
    %v2112 = vld [vmem:[#allocation8 + $0x18] sm:$0xff]
    %v2113 = vld [vmem:[#allocation8 + $0x20] sm:$0xff]
    %v2114 = vld [vmem:[#allocation8 + $0x28] sm:$0xff]
    %v2115 = vld [vmem:[#allocation8 + $0x30] sm:$0xff]
    %v2116 = vld [vmem:[#allocation8 + $0x38] sm:$0xff]
    %v2117 = vld [vmem:[#allocation8 + $0x40] sm:$0xff]
    %v2118 = vld [vmem:[#allocation8 + $0x48] sm:$0xff]
    %v2119 = vld [vmem:[#allocation8 + $0x50] sm:$0xff]
    %v2120 = vld [vmem:[#allocation8 + $0x58] sm:$0xff]
    %v2121 = vld [vmem:[#allocation8 + $0x60] sm:$0xff]
    %v2122 = vld [vmem:[#allocation8 + $0x68] sm:$0xff]
    %v2123 = vld [vmem:[#allocation8 + $0x70] sm:$0xff]
    %v2124 = vld [vmem:[#allocation8 + $0x78] sm:$0xff]
    %v2125 = vld [vmem:[#allocation8 + $0x80] sm:$0xff]
    %v2126 = vld [vmem:[#allocation8 + $0x88] sm:$0xff]
    %v2127 = vld [vmem:[#allocation8 + $0x90] sm:$0xff]
    %v2128 = vld [vmem:[#allocation8 + $0x98] sm:$0xff]
    %v2129 = vld [vmem:[#allocation8 + $0xa0] sm:$0xff]
    %v2130 = vld [vmem:[#allocation8 + $0xa8] sm:$0xff]
    %v2131 = vld [vmem:[#allocation8 + $0xb0] sm:$0xff]
    %v2132 = vld [vmem:[#allocation8 + $0xb8] sm:$0xff]
    %v2133 = vld [vmem:[#allocation8 + $0xc0] sm:$0xff]
    %v2134 = vld [vmem:[#allocation8 + $0xc8] sm:$0xff]
    %v2135 = vld [vmem:[#allocation8 + $0xd0] sm:$0xff]
    %v2136 = vld [vmem:[#allocation8 + $0xd8] sm:$0xff]
    %v2137 = vld [vmem:[#allocation8 + $0xe0] sm:$0xff]
    %v2138 = vld [vmem:[#allocation8 + $0xe8] sm:$0xff]
    %v2139 = vld [vmem:[#allocation8 + $0xf0] sm:$0xff]
    %v2140 = vld [vmem:[#allocation8 + $0xf8] sm:$0xff]
    %v2141 = vld [vmem:[#allocation8 + $0x100] sm:$0xff]
    %v2142 = vld [vmem:[#allocation8 + $0x108] sm:$0xff]
    %v2143 = vld [vmem:[#allocation8 + $0x110] sm:$0xff]
    %v2144 = vld [vmem:[#allocation8 + $0x118] sm:$0xff]
    %v2145 = vld [vmem:[#allocation8 + $0x120] sm:$0xff]
    %v2146 = vld [vmem:[#allocation8 + $0x128] sm:$0xff]
    %v2147 = vld [vmem:[#allocation8 + $0x130] sm:$0xff]
    %v2148 = vld [vmem:[#allocation8 + $0x138] sm:$0xff]
    %v2149 = vld [vmem:[#allocation8 + $0x140] sm:$0xff]
    %v2150 = vld [vmem:[#allocation8 + $0x148] sm:$0xff]
    %v2151 = vld [vmem:[#allocation8 + $0x150] sm:$0xff]
    %v2152 = vld [vmem:[#allocation8 + $0x158] sm:$0xff]
    %v2153 = vld [vmem:[#allocation8 + $0x160] sm:$0xff]
    %v2154 = vld [vmem:[#allocation8 + $0x168] sm:$0xff]
    %v2155 = vld [vmem:[#allocation8 + $0x170] sm:$0xff]
    %v2156 = vld [vmem:[#allocation8 + $0x178] sm:$0xff]
    %v2157 = vld [vmem:[#allocation8 + $0x180] sm:$0xff]
    %v2158 = vld [vmem:[#allocation8 + $0x188] sm:$0xff]
    %v2159 = vld [vmem:[#allocation8 + $0x190] sm:$0xff]
    %v2160 = vld [vmem:[#allocation8 + $0x198] sm:$0xff]
    %v2161 = vld [vmem:[#allocation8 + $0x1a0] sm:$0xff]
    %v2162 = vld [vmem:[#allocation8 + $0x1a8] sm:$0xff]
    %v2163 = vld [vmem:[#allocation8 + $0x1b0] sm:$0xff]
    %v2164 = vld [vmem:[#allocation8 + $0x1b8] sm:$0xff]
    %v2165 = vld [vmem:[#allocation8 + $0x1c0] sm:$0xff]
    %v2166 = vld [vmem:[#allocation8 + $0x1c8] sm:$0xff]
    %v2167 = vld [vmem:[#allocation8 + $0x1d0] sm:$0xff]
    %v2168 = vld [vmem:[#allocation8 + $0x1d8] sm:$0xff]
    %v2169 = vld [vmem:[#allocation8 + $0x1e0] sm:$0xff]
    %v2170 = vld [vmem:[#allocation8 + $0x1e8] sm:$0xff]
    %v2171 = vld [vmem:[#allocation8 + $0x1f0] sm:$0xff]
    %v2172 = vld [vmem:[#allocation8 + $0x1f8] sm:$0xff]
    %v2173 = vld [vmem:[#allocation8 + $0x200] sm:$0xff]
    %v2174 = vld [vmem:[#allocation8 + $0x208] sm:$0xff]
    %v2175 = vld [vmem:[#allocation8 + $0x210] sm:$0xff]
    %v2176 = vld [vmem:[#allocation8 + $0x218] sm:$0xff]
    %v2177 = vld [vmem:[#allocation8 + $0x220] sm:$0xff]
    %v2178 = vld [vmem:[#allocation8 + $0x228] sm:$0xff]
    %v2179 = vld [vmem:[#allocation8 + $0x230] sm:$0xff]
    %v2180 = vld [vmem:[#allocation8 + $0x238] sm:$0xff]
    %v2181 = vld [vmem:[#allocation8 + $0x240] sm:$0xff]
    %v2182 = vld [vmem:[#allocation8 + $0x248] sm:$0xff]
    %v2183 = vld [vmem:[#allocation8 + $0x250] sm:$0xff]
    %v2184 = vld [vmem:[#allocation8 + $0x258] sm:$0xff]
    %v2185 = vld [vmem:[#allocation8 + $0x260] sm:$0xff]
    %v2186 = vld [vmem:[#allocation8 + $0x268] sm:$0xff]
    %v2187 = vld [vmem:[#allocation8 + $0x270] sm:$0xff]
    %v2188 = vld [vmem:[#allocation8 + $0x278] sm:$0xff]
    %v2189 = vld [vmem:[#allocation8 + $0x280] sm:$0xff]
    %v2190 = vld [vmem:[#allocation8 + $0x288] sm:$0xff]
    %v2191 = vld [vmem:[#allocation8 + $0x290] sm:$0xff]
    %v2192 = vld [vmem:[#allocation8 + $0x298] sm:$0xff]
    %v2193 = vld [vmem:[#allocation8 + $0x2a0] sm:$0xff]
    %v2194 = vld [vmem:[#allocation8 + $0x2a8] sm:$0xff]
    %v2195 = vld [vmem:[#allocation8 + $0x2b0] sm:$0xff]
    %v2196 = vld [vmem:[#allocation8 + $0x2b8] sm:$0xff]
    %v2197 = vld [vmem:[#allocation8 + $0x2c0] sm:$0xff]
    %v2198 = vld [vmem:[#allocation8 + $0x2c8] sm:$0xff]
    %v2199 = vld [vmem:[#allocation8 + $0x2d0] sm:$0xff]
    %v2200 = vld [vmem:[#allocation8 + $0x2d8] sm:$0xff]
    %v2201 = vld [vmem:[#allocation8 + $0x2e0] sm:$0xff]
    %v2202 = vld [vmem:[#allocation8 + $0x2e8] sm:$0xff]
    %v2203 = vld [vmem:[#allocation8 + $0x2f0] sm:$0xff]
    %v2204 = vld [vmem:[#allocation8 + $0x2f8] sm:$0xff]
    %v2205 = vld [vmem:[#allocation11] sm:$0x3f]
    %v2206 = vlaneseq
    %v2207 = vshrl.u32 %v2206, 7
    %vm2208 = vcmp.lt.s32.totalorder %v2207, 4
    %v2209 = vld [vmem:[%s5] sm:$0xff]
    %v2211 = vlaneseq
    %v2212 = vshrl.u32 %v2211, 7
    %v2213 = vsub.s32 0, %v2212
    %v2214 = vrot.slane %v2205, %v2213
    %v2215 = vlaneseq
    %v2216 = vshrl.u32 %v2215, 7
    %v2217 = vsub.s32 1, %v2216
    %v2218 = vrot.slane %v2205, %v2217
    %v2219 = vlaneseq
    %v2220 = vshrl.u32 %v2219, 7
    %v2221 = vsub.s32 2, %v2220
    %v2222 = vrot.slane %v2205, %v2221
    %v2223 = vlaneseq
    %v2224 = vshrl.u32 %v2223, 7
    %v2225 = vsub.s32 3, %v2224
    %v2226 = vrot.slane %v2205, %v2225
    %v2227 = vlaneseq
    %v2228 = vshrl.u32 %v2227, 7
    %v2229 = vsub.s32 4, %v2228
    %v2230 = vrot.slane %v2205, %v2229
    %v2231 = vlaneseq
    %v2232 = vshrl.u32 %v2231, 7
    %v2233 = vsub.s32 5, %v2232
    %v2234 = vrot.slane %v2205, %v2233
    %2241 = vmatprep.subr.mxu0 %v2200
    %2242 = vmatpush1.msra.mxu0 %v2199
    %2243 = vmatprep.subr.mxu0 %v2194
    %2244 = vmatpush1.msra.mxu0 %v2193
    %2245 = vmatprep.subr.mxu0 %v2188
    %2246 = vmatpush1.msra.mxu0 %v2187
    %2247 = vmatprep.subr.mxu0 %v2182
    %2248 = vmatpush1.msra.mxu0 %v2181
    %2249 = vmatprep.subr.mxu0 %v2176
    %2250 = vmatpush1.msra.mxu0 %v2175
    %2251 = vmatprep.subr.mxu0 %v2170
    %2252 = vmatpush1.msra.mxu0 %v2169
    %2253 = vmatprep.subr.mxu0 %v2164
    %2254 = vmatpush1.msra.mxu0 %v2163
    %2255 = vmatprep.subr.mxu0 %v2158
    %2256 = vmatpush1.msra.mxu0 %v2157
    %2257 = vmatprep.subr.mxu0 %v2152
    %2258 = vmatpush1.msra.mxu0 %v2151
    %2259 = vmatprep.subr.mxu0 %v2146
    %2260 = vmatpush1.msra.mxu0 %v2145
    %2261 = vmatprep.subr.mxu0 %v2140
    %2262 = vmatpush1.msra.mxu0 %v2139
    %2263 = vmatprep.subr.mxu0 %v2134
    %2264 = vmatpush1.msra.mxu0 %v2133
    %2265 = vmatprep.subr.mxu0 %v2128
    %2266 = vmatpush1.msra.mxu0 %v2127
    %2267 = vmatprep.subr.mxu0 %v2122
    %2268 = vmatpush1.msra.mxu0 %v2121
    %2269 = vmatprep.subr.mxu0 %v2116
    %2270 = vmatpush1.msra.mxu0 %v2115
    %2271 = vmatprep.subr.mxu0 %v2110
    %2272 = vmatpush1.msra.mxu0 %v2109
    %2273 = vmatprep.subr.mxu0 0.0
    %2274 = vmatpush2.msra.mxu0 0.0
    %2275 = vmatprep.subr.mxu0 0.0
    %2276 = vmatpush2.msra.mxu0 0.0
    %2277 = vmatprep.subr.mxu0 0.0
    %2278 = vmatpush2.msra.mxu0 0.0
    %2279 = vmatprep.subr.mxu0 0.0
    %2280 = vmatpush2.msra.mxu0 0.0
    %2281 = vmatprep.subr.mxu0 0.0
    %2282 = vmatpush2.msra.mxu0 0.0
    %2283 = vmatprep.subr.mxu0 0.0
    %2284 = vmatpush2.msra.mxu0 0.0
    %2285 = vmatprep.subr.mxu0 0.0
    %2286 = vmatpush2.msra.mxu0 0.0
    %2287 = vmatprep.subr.mxu0 0.0
    %2288 = vmatpush2.msra.mxu0 0.0
    %2289 = vmatprep.subr.mxu0 0.0
    %2290 = vmatpush2.msra.mxu0 0.0
    %2291 = vmatprep.subr.mxu0 0.0
    %2292 = vmatpush2.msra.mxu0 0.0
    %2293 = vmatprep.subr.mxu0 0.0
    %2294 = vmatpush2.msra.mxu0 0.0
    %2295 = vmatprep.subr.mxu0 0.0
    %2296 = vmatpush2.msra.mxu0 0.0
    %2297 = vmatprep.subr.mxu0 0.0
    %2298 = vmatpush2.msra.mxu0 0.0
    %2299 = vmatprep.subr.mxu0 0.0
    %2300 = vmatpush2.msra.mxu0 0.0
    %2301 = vmatprep.subr.mxu0 0.0
    %2302 = vmatpush2.msra.mxu0 0.0
    %2303 = vmatprep.subr.mxu0 0.0
    %2304 = vmatpush2.msra.mxu0 0.0
    %2305 = vmatprep.mubr.f32.mxu0 0.0
    %2306 = vmatmul.mubr.f32.gmra.mxu0 %v2209
    %v2307 = vpop.f32.mrf.mxu0
    %v2308 = vadd.f32 %v2214, %v2307
    %v2309 = vpop.f32.mrf.mxu0
    %v2310 = vadd.f32 %v2218, %v2309
    %2311 = vdwg.mxu0
    %2312 = vmatprep.subr.mxu0 %v2202
    %2313 = vmatpush1.msra.mxu0 %v2201
    %2314 = vmatprep.subr.mxu0 %v2196
    %2315 = vmatpush1.msra.mxu0 %v2195
    %2316 = vmatprep.subr.mxu0 %v2190
    %2317 = vmatpush1.msra.mxu0 %v2189
    %2318 = vmatprep.subr.mxu0 %v2184
    %2319 = vmatpush1.msra.mxu0 %v2183
    %2320 = vmatprep.subr.mxu0 %v2178
    %2321 = vmatpush1.msra.mxu0 %v2177
    %2322 = vmatprep.subr.mxu0 %v2172
    %2323 = vmatpush1.msra.mxu0 %v2171
    %2324 = vmatprep.subr.mxu0 %v2166
    %2325 = vmatpush1.msra.mxu0 %v2165
    %2326 = vmatprep.subr.mxu0 %v2160
    %2327 = vmatpush1.msra.mxu0 %v2159
    %2328 = vmatprep.subr.mxu0 %v2154
    %2329 = vmatpush1.msra.mxu0 %v2153
    %2330 = vmatprep.subr.mxu0 %v2148
    %2331 = vmatpush1.msra.mxu0 %v2147
    %2332 = vmatprep.subr.mxu0 %v2142
    %2333 = vmatpush1.msra.mxu0 %v2141
    %2334 = vmatprep.subr.mxu0 %v2136
    %2335 = vmatpush1.msra.mxu0 %v2135
    %2336 = vmatprep.subr.mxu0 %v2130
    %2337 = vmatpush1.msra.mxu0 %v2129
    %2338 = vmatprep.subr.mxu0 %v2124
    %2339 = vmatpush1.msra.mxu0 %v2123
    %2340 = vmatprep.subr.mxu0 %v2118
    %2341 = vmatpush1.msra.mxu0 %v2117
    %2342 = vmatprep.subr.mxu0 %v2112
    %2343 = vmatpush1.msra.mxu0 %v2111
    %2344 = vmatprep.subr.mxu0 0.0
    %2345 = vmatpush2.msra.mxu0 0.0
    %2346 = vmatprep.subr.mxu0 0.0
    %2347 = vmatpush2.msra.mxu0 0.0
    %2348 = vmatprep.subr.mxu0 0.0
    %2349 = vmatpush2.msra.mxu0 0.0
    %2350 = vmatprep.subr.mxu0 0.0
    %2351 = vmatpush2.msra.mxu0 0.0
    %2352 = vmatprep.subr.mxu0 0.0
    %2353 = vmatpush2.msra.mxu0 0.0
    %2354 = vmatprep.subr.mxu0 0.0
    %2355 = vmatpush2.msra.mxu0 0.0
    %2356 = vmatprep.subr.mxu0 0.0
    %2357 = vmatpush2.msra.mxu0 0.0
    %2358 = vmatprep.subr.mxu0 0.0
    %2359 = vmatpush2.msra.mxu0 0.0
    %2360 = vmatprep.subr.mxu0 0.0
    %2361 = vmatpush2.msra.mxu0 0.0
    %2362 = vmatprep.subr.mxu0 0.0
    %2363 = vmatpush2.msra.mxu0 0.0
    %2364 = vmatprep.subr.mxu0 0.0
    %2365 = vmatpush2.msra.mxu0 0.0
    %2366 = vmatprep.subr.mxu0 0.0
    %2367 = vmatpush2.msra.mxu0 0.0
    %2368 = vmatprep.subr.mxu0 0.0
    %2369 = vmatpush2.msra.mxu0 0.0
    %2370 = vmatprep.subr.mxu0 0.0
    %2371 = vmatpush2.msra.mxu0 0.0
    %2372 = vmatprep.subr.mxu0 0.0
    %2373 = vmatpush2.msra.mxu0 0.0
    %2374 = vmatprep.subr.mxu0 0.0
    %2375 = vmatpush2.msra.mxu0 0.0
    %2376 = vmatprep.mubr.f32.mxu0 0.0
    %2377 = vmatmul.mubr.f32.gmra.mxu0 %v2209
    %v2378 = vpop.f32.mrf.mxu0
    %v2379 = vadd.f32 %v2222, %v2378
    %v2380 = vpop.f32.mrf.mxu0
    %v2381 = vadd.f32 %v2226, %v2380
    %2382 = vdwg.mxu0
    %2383 = vmatprep.subr.mxu0 %v2204
    %2384 = vmatpush1.msra.mxu0 %v2203
    %2385 = vmatprep.subr.mxu0 %v2198
    %2386 = vmatpush1.msra.mxu0 %v2197
    %2387 = vmatprep.subr.mxu0 %v2192
    %2388 = vmatpush1.msra.mxu0 %v2191
    %2389 = vmatprep.subr.mxu0 %v2186
    %2390 = vmatpush1.msra.mxu0 %v2185
    %2391 = vmatprep.subr.mxu0 %v2180
    %2392 = vmatpush1.msra.mxu0 %v2179
    %2393 = vmatprep.subr.mxu0 %v2174
    %2394 = vmatpush1.msra.mxu0 %v2173
    %2395 = vmatprep.subr.mxu0 %v2168
    %2396 = vmatpush1.msra.mxu0 %v2167
    %2397 = vmatprep.subr.mxu0 %v2162
    %2398 = vmatpush1.msra.mxu0 %v2161
    %2399 = vmatprep.subr.mxu0 %v2156
    %2400 = vmatpush1.msra.mxu0 %v2155
    %2401 = vmatprep.subr.mxu0 %v2150
    %2402 = vmatpush1.msra.mxu0 %v2149
    %2403 = vmatprep.subr.mxu0 %v2144
    %2404 = vmatpush1.msra.mxu0 %v2143
    %2405 = vmatprep.subr.mxu0 %v2138
    %2406 = vmatpush1.msra.mxu0 %v2137
    %2407 = vmatprep.subr.mxu0 %v2132
    %2408 = vmatpush1.msra.mxu0 %v2131
    %2409 = vmatprep.subr.mxu0 %v2126
    %2410 = vmatpush1.msra.mxu0 %v2125
    %2411 = vmatprep.subr.mxu0 %v2120
    %2412 = vmatpush1.msra.mxu0 %v2119
    %2413 = vmatprep.subr.mxu0 %v2114
    %2414 = vmatpush1.msra.mxu0 %v2113
    %2415 = vmatprep.subr.mxu0 0.0
    %2416 = vmatpush2.msra.mxu0 0.0
    %2417 = vmatprep.subr.mxu0 0.0
    %2418 = vmatpush2.msra.mxu0 0.0
    %2419 = vmatprep.subr.mxu0 0.0
    %2420 = vmatpush2.msra.mxu0 0.0
    %2421 = vmatprep.subr.mxu0 0.0
    %2422 = vmatpush2.msra.mxu0 0.0
    %2423 = vmatprep.subr.mxu0 0.0
    %2424 = vmatpush2.msra.mxu0 0.0
    %2425 = vmatprep.subr.mxu0 0.0
    %2426 = vmatpush2.msra.mxu0 0.0
    %2427 = vmatprep.subr.mxu0 0.0
    %2428 = vmatpush2.msra.mxu0 0.0
    %2429 = vmatprep.subr.mxu0 0.0
    %2430 = vmatpush2.msra.mxu0 0.0
    %2431 = vmatprep.subr.mxu0 0.0
    %2432 = vmatpush2.msra.mxu0 0.0
    %2433 = vmatprep.subr.mxu0 0.0
    %2434 = vmatpush2.msra.mxu0 0.0
    %2435 = vmatprep.subr.mxu0 0.0
    %2436 = vmatpush2.msra.mxu0 0.0
    %2437 = vmatprep.subr.mxu0 0.0
    %2438 = vmatpush2.msra.mxu0 0.0
    %2439 = vmatprep.subr.mxu0 0.0
    %2440 = vmatpush2.msra.mxu0 0.0
    %2441 = vmatprep.subr.mxu0 0.0
    %2442 = vmatpush2.msra.mxu0 0.0
    %2443 = vmatprep.subr.mxu0 0.0
    %2444 = vmatpush2.msra.mxu0 0.0
    %2445 = vmatprep.subr.mxu0 0.0
    %2446 = vmatpush2.msra.mxu0 0.0
    %2447 = vmatprep.mubr.f32.mxu0 0.0
    %2448 = vmatmul.mubr.f32.gmra.mxu0 %v2209
    %v2449 = vpop.f32.mrf.mxu0
    %v2450 = vadd.f32 %v2230, %v2449
    %v2451 = vpop.f32.mrf.mxu0
    %v2452 = vadd.f32 %v2234, %v2451
    %2453 = vdwg.mxu0
    %v2454 = vsel %vm2208, %v2308, %v2381
    %v2455 = vsel %vm2208, %v2310, %v2450
    %v2456 = vsel %vm2208, %v2379, %v2452
    %v2457 = vld [vmem:[#allocation2] sm:$0xff]
    %v2458 = vld [vmem:[#allocation2 + $0x8] sm:$0xff]
    %v2459 = vld [vmem:[#allocation2 + $0x10] sm:$0xff]
    %v2460 = vadd.f32 %v2457, %v2454
    %v2461 = vxor.u32 %v2460, 2147483648
    %v2462 = vmul.f32 %v2461, 1.442695
    %v2463 = vpow.pop %v2462
    %v2464 = vadd.f32 %v2463, 1.0
    %v2465 = vrcp.pop %v2464
    %v2466 = vmul.f32 1.0, %v2465
    %v2467 = vadd.f32 %v2458, %v2455
    %v2468 = vxor.u32 %v2467, 2147483648
    %v2469 = vmul.f32 %v2468, 1.442695
    %v2470 = vpow.pop %v2469
    %v2471 = vadd.f32 %v2470, 1.0
    %v2472 = vrcp.pop %v2471
    %v2473 = vmul.f32 1.0, %v2472
    %v2474 = vmul.f32 %v2466, %v2456
    %v2475 = vadd.f32 %v2459, %v2474
    %v2476 = vtanh.pop %v2475
    %v2477 = vsub.f32 1.0, %v2473
    %v2478 = vmul.f32 %v2477, %v2476
    %v2479 = vmul.f32 %v2473, %v2209
    %v2480 = vadd.f32 %v2478, %v2479
    %2481 = vst [vmem:[#allocation12] sm:$0xff] %v2480
    %2482 = vmatprep.subr.mxu0 %v2200
    %2483 = vmatpush1.msra.mxu0 %v2199
    %2484 = vmatprep.subr.mxu0 %v2194
    %2485 = vmatpush1.msra.mxu0 %v2193
    %2486 = vmatprep.subr.mxu0 %v2188
    %2487 = vmatpush1.msra.mxu0 %v2187
    %2488 = vmatprep.subr.mxu0 %v2182
    %2489 = vmatpush1.msra.mxu0 %v2181
    %2490 = vmatprep.subr.mxu0 %v2176
    %2491 = vmatpush1.msra.mxu0 %v2175
    %2492 = vmatprep.subr.mxu0 %v2170
    %2493 = vmatpush1.msra.mxu0 %v2169
    %2494 = vmatprep.subr.mxu0 %v2164
    %2495 = vmatpush1.msra.mxu0 %v2163
    %2496 = vmatprep.subr.mxu0 %v2158
    %2497 = vmatpush1.msra.mxu0 %v2157
    %2498 = vmatprep.subr.mxu0 %v2152
    %2499 = vmatpush1.msra.mxu0 %v2151
    %2500 = vmatprep.subr.mxu0 %v2146
    %2501 = vmatpush1.msra.mxu0 %v2145
    %2502 = vmatprep.subr.mxu0 %v2140
    %2503 = vmatpush1.msra.mxu0 %v2139
    %2504 = vmatprep.subr.mxu0 %v2134
    %2505 = vmatpush1.msra.mxu0 %v2133
    %2506 = vmatprep.subr.mxu0 %v2128
    %2507 = vmatpush1.msra.mxu0 %v2127
    %2508 = vmatprep.subr.mxu0 %v2122
    %2509 = vmatpush1.msra.mxu0 %v2121
    %2510 = vmatprep.subr.mxu0 %v2116
    %2511 = vmatpush1.msra.mxu0 %v2115
    %2512 = vmatprep.subr.mxu0 %v2110
    %2513 = vmatpush1.msra.mxu0 %v2109
    %2514 = vmatprep.subr.mxu0 0.0
    %2515 = vmatpush2.msra.mxu0 0.0
    %2516 = vmatprep.subr.mxu0 0.0
    %2517 = vmatpush2.msra.mxu0 0.0
    %2518 = vmatprep.subr.mxu0 0.0
    %2519 = vmatpush2.msra.mxu0 0.0
    %2520 = vmatprep.subr.mxu0 0.0
    %2521 = vmatpush2.msra.mxu0 0.0
    %2522 = vmatprep.subr.mxu0 0.0
    %2523 = vmatpush2.msra.mxu0 0.0
    %2524 = vmatprep.subr.mxu0 0.0
    %2525 = vmatpush2.msra.mxu0 0.0
    %2526 = vmatprep.subr.mxu0 0.0
    %2527 = vmatpush2.msra.mxu0 0.0
    %2528 = vmatprep.subr.mxu0 0.0
    %2529 = vmatpush2.msra.mxu0 0.0
    %2530 = vmatprep.subr.mxu0 0.0
    %2531 = vmatpush2.msra.mxu0 0.0
    %2532 = vmatprep.subr.mxu0 0.0
    %2533 = vmatpush2.msra.mxu0 0.0
    %2534 = vmatprep.subr.mxu0 0.0
    %2535 = vmatpush2.msra.mxu0 0.0
    %2536 = vmatprep.subr.mxu0 0.0
    %2537 = vmatpush2.msra.mxu0 0.0
    %2538 = vmatprep.subr.mxu0 0.0
    %2539 = vmatpush2.msra.mxu0 0.0
    %2540 = vmatprep.subr.mxu0 0.0
    %2541 = vmatpush2.msra.mxu0 0.0
    %2542 = vmatprep.subr.mxu0 0.0
    %2543 = vmatpush2.msra.mxu0 0.0
    %2544 = vmatprep.subr.mxu0 0.0
    %2545 = vmatpush2.msra.mxu0 0.0
    %2546 = vmatprep.mubr.f32.mxu0 0.0
    %2547 = vmatmul.mubr.f32.gmra.mxu0 %v2480
    %v2548 = vpop.f32.mrf.mxu0
    %v2549 = vadd.f32 %v2214, %v2548
    %v2550 = vpop.f32.mrf.mxu0
    %v2551 = vadd.f32 %v2218, %v2550
    %2552 = vdwg.mxu0
    %2553 = vmatprep.subr.mxu0 %v2202
    %2554 = vmatpush1.msra.mxu0 %v2201
    %2555 = vmatprep.subr.mxu0 %v2196
    %2556 = vmatpush1.msra.mxu0 %v2195
    %2557 = vmatprep.subr.mxu0 %v2190
    %2558 = vmatpush1.msra.mxu0 %v2189
    %2559 = vmatprep.subr.mxu0 %v2184
    %2560 = vmatpush1.msra.mxu0 %v2183
    %2561 = vmatprep.subr.mxu0 %v2178
    %2562 = vmatpush1.msra.mxu0 %v2177
    %2563 = vmatprep.subr.mxu0 %v2172
    %2564 = vmatpush1.msra.mxu0 %v2171
    %2565 = vmatprep.subr.mxu0 %v2166
    %2566 = vmatpush1.msra.mxu0 %v2165
    %2567 = vmatprep.subr.mxu0 %v2160
    %2568 = vmatpush1.msra.mxu0 %v2159
    %2569 = vmatprep.subr.mxu0 %v2154
    %2570 = vmatpush1.msra.mxu0 %v2153
    %2571 = vmatprep.subr.mxu0 %v2148
    %2572 = vmatpush1.msra.mxu0 %v2147
    %2573 = vmatprep.subr.mxu0 %v2142
    %2574 = vmatpush1.msra.mxu0 %v2141
    %2575 = vmatprep.subr.mxu0 %v2136
    %2576 = vmatpush1.msra.mxu0 %v2135
    %2577 = vmatprep.subr.mxu0 %v2130
    %2578 = vmatpush1.msra.mxu0 %v2129
    %2579 = vmatprep.subr.mxu0 %v2124
    %2580 = vmatpush1.msra.mxu0 %v2123
    %2581 = vmatprep.subr.mxu0 %v2118
    %2582 = vmatpush1.msra.mxu0 %v2117
    %2583 = vmatprep.subr.mxu0 %v2112
    %2584 = vmatpush1.msra.mxu0 %v2111
    %2585 = vmatprep.subr.mxu0 0.0
    %2586 = vmatpush2.msra.mxu0 0.0
    %2587 = vmatprep.subr.mxu0 0.0
    %2588 = vmatpush2.msra.mxu0 0.0
    %2589 = vmatprep.subr.mxu0 0.0
    %2590 = vmatpush2.msra.mxu0 0.0
    %2591 = vmatprep.subr.mxu0 0.0
    %2592 = vmatpush2.msra.mxu0 0.0
    %2593 = vmatprep.subr.mxu0 0.0
    %2594 = vmatpush2.msra.mxu0 0.0
    %2595 = vmatprep.subr.mxu0 0.0
    %2596 = vmatpush2.msra.mxu0 0.0
    %2597 = vmatprep.subr.mxu0 0.0
    %2598 = vmatpush2.msra.mxu0 0.0
    %2599 = vmatprep.subr.mxu0 0.0
    %2600 = vmatpush2.msra.mxu0 0.0
    %2601 = vmatprep.subr.mxu0 0.0
    %2602 = vmatpush2.msra.mxu0 0.0
    %2603 = vmatprep.subr.mxu0 0.0
    %2604 = vmatpush2.msra.mxu0 0.0
    %2605 = vmatprep.subr.mxu0 0.0
    %2606 = vmatpush2.msra.mxu0 0.0
    %2607 = vmatprep.subr.mxu0 0.0
    %2608 = vmatpush2.msra.mxu0 0.0
    %2609 = vmatprep.subr.mxu0 0.0
    %2610 = vmatpush2.msra.mxu0 0.0
    %2611 = vmatprep.subr.mxu0 0.0
    %2612 = vmatpush2.msra.mxu0 0.0
    %2613 = vmatprep.subr.mxu0 0.0
    %2614 = vmatpush2.msra.mxu0 0.0
    %2615 = vmatprep.subr.mxu0 0.0
    %2616 = vmatpush2.msra.mxu0 0.0
    %2617 = vmatprep.mubr.f32.mxu0 0.0
    %2618 = vmatmul.mubr.f32.gmra.mxu0 %v2480
    %v2619 = vpop.f32.mrf.mxu0
    %v2620 = vadd.f32 %v2222, %v2619
    %v2621 = vpop.f32.mrf.mxu0
    %v2622 = vadd.f32 %v2226, %v2621
    %2623 = vdwg.mxu0
    %2624 = vmatprep.subr.mxu0 %v2204
    %2625 = vmatpush1.msra.mxu0 %v2203
    %2626 = vmatprep.subr.mxu0 %v2198
    %2627 = vmatpush1.msra.mxu0 %v2197
    %2628 = vmatprep.subr.mxu0 %v2192
    %2629 = vmatpush1.msra.mxu0 %v2191
    %2630 = vmatprep.subr.mxu0 %v2186
    %2631 = vmatpush1.msra.mxu0 %v2185
    %2632 = vmatprep.subr.mxu0 %v2180
    %2633 = vmatpush1.msra.mxu0 %v2179
    %2634 = vmatprep.subr.mxu0 %v2174
    %2635 = vmatpush1.msra.mxu0 %v2173
    %2636 = vmatprep.subr.mxu0 %v2168
    %2637 = vmatpush1.msra.mxu0 %v2167
    %2638 = vmatprep.subr.mxu0 %v2162
    %2639 = vmatpush1.msra.mxu0 %v2161
    %2640 = vmatprep.subr.mxu0 %v2156
    %2641 = vmatpush1.msra.mxu0 %v2155
    %2642 = vmatprep.subr.mxu0 %v2150
    %2643 = vmatpush1.msra.mxu0 %v2149
    %2644 = vmatprep.subr.mxu0 %v2144
    %2645 = vmatpush1.msra.mxu0 %v2143
    %2646 = vmatprep.subr.mxu0 %v2138
    %2647 = vmatpush1.msra.mxu0 %v2137
    %2648 = vmatprep.subr.mxu0 %v2132
    %2649 = vmatpush1.msra.mxu0 %v2131
    %2650 = vmatprep.subr.mxu0 %v2126
    %2651 = vmatpush1.msra.mxu0 %v2125
    %2652 = vmatprep.subr.mxu0 %v2120
    %2653 = vmatpush1.msra.mxu0 %v2119
    %2654 = vmatprep.subr.mxu0 %v2114
    %2655 = vmatpush1.msra.mxu0 %v2113
    %2656 = vmatprep.subr.mxu0 0.0
    %2657 = vmatpush2.msra.mxu0 0.0
    %2658 = vmatprep.subr.mxu0 0.0
    %2659 = vmatpush2.msra.mxu0 0.0
    %2660 = vmatprep.subr.mxu0 0.0
    %2661 = vmatpush2.msra.mxu0 0.0
    %2662 = vmatprep.subr.mxu0 0.0
    %2663 = vmatpush2.msra.mxu0 0.0
    %2664 = vmatprep.subr.mxu0 0.0
    %2665 = vmatpush2.msra.mxu0 0.0
    %2666 = vmatprep.subr.mxu0 0.0
    %2667 = vmatpush2.msra.mxu0 0.0
    %2668 = vmatprep.subr.mxu0 0.0
    %2669 = vmatpush2.msra.mxu0 0.0
    %2670 = vmatprep.subr.mxu0 0.0
    %2671 = vmatpush2.msra.mxu0 0.0
    %2672 = vmatprep.subr.mxu0 0.0
    %2673 = vmatpush2.msra.mxu0 0.0
    %2674 = vmatprep.subr.mxu0 0.0
    %2675 = vmatpush2.msra.mxu0 0.0
    %2676 = vmatprep.subr.mxu0 0.0
    %2677 = vmatpush2.msra.mxu0 0.0
    %2678 = vmatprep.subr.mxu0 0.0
    %2679 = vmatpush2.msra.mxu0 0.0
    %2680 = vmatprep.subr.mxu0 0.0
    %2681 = vmatpush2.msra.mxu0 0.0
    %2682 = vmatprep.subr.mxu0 0.0
    %2683 = vmatpush2.msra.mxu0 0.0
    %2684 = vmatprep.subr.mxu0 0.0
    %2685 = vmatpush2.msra.mxu0 0.0
    %2686 = vmatprep.subr.mxu0 0.0
    %2687 = vmatpush2.msra.mxu0 0.0
    %2688 = vmatprep.mubr.f32.mxu0 0.0
    %2689 = vmatmul.mubr.f32.gmra.mxu0 %v2480
    %v2690 = vpop.f32.mrf.mxu0
    %v2691 = vadd.f32 %v2230, %v2690
    %v2692 = vpop.f32.mrf.mxu0
    %v2693 = vadd.f32 %v2234, %v2692
    %2694 = vdwg.mxu0
    %v2695 = vsel %vm2208, %v2549, %v2622
    %v2696 = vsel %vm2208, %v2551, %v2691
    %v2697 = vsel %vm2208, %v2620, %v2693
    %s2698 = scalar_lea.vmem [#allocation2], 24
    %v2699 = vld [vmem:[%s2698] sm:$0xff]
    %v2700 = vld [vmem:[%s2698 + $0x8] sm:$0xff]
    %v2701 = vld [vmem:[%s2698 + $0x10] sm:$0xff]
    %v2702 = vadd.f32 %v2699, %v2695
    %v2703 = vxor.u32 %v2702, 2147483648
    %v2704 = vmul.f32 %v2703, 1.442695
    %v2705 = vpow.pop %v2704
    %v2706 = vadd.f32 %v2705, 1.0
    %v2707 = vrcp.pop %v2706
    %v2708 = vmul.f32 1.0, %v2707
    %v2709 = vadd.f32 %v2700, %v2696
    %v2710 = vxor.u32 %v2709, 2147483648
    %v2711 = vmul.f32 %v2710, 1.442695
    %v2712 = vpow.pop %v2711
    %v2713 = vadd.f32 %v2712, 1.0
    %v2714 = vrcp.pop %v2713
    %v2715 = vmul.f32 1.0, %v2714
    %v2716 = vmul.f32 %v2708, %v2697
    %v2717 = vadd.f32 %v2701, %v2716
    %v2718 = vtanh.pop %v2717
    %v2719 = vsub.f32 1.0, %v2715
    %v2720 = vmul.f32 %v2719, %v2718
    %v2721 = vmul.f32 %v2715, %v2480
    %v2722 = vadd.f32 %v2720, %v2721
    %s2723 = scalar_lea.vmem [#allocation12], 8
    %2724 = vst [vmem:[%s2723] sm:$0xff] %v2722
    %2725 = vmatprep.subr.mxu0 %v2200
    %2726 = vmatpush1.msra.mxu0 %v2199
    %2727 = vmatprep.subr.mxu0 %v2194
    %2728 = vmatpush1.msra.mxu0 %v2193
    %2729 = vmatprep.subr.mxu0 %v2188
    %2730 = vmatpush1.msra.mxu0 %v2187
    %2731 = vmatprep.subr.mxu0 %v2182
    %2732 = vmatpush1.msra.mxu0 %v2181
    %2733 = vmatprep.subr.mxu0 %v2176
    %2734 = vmatpush1.msra.mxu0 %v2175
    %2735 = vmatprep.subr.mxu0 %v2170
    %2736 = vmatpush1.msra.mxu0 %v2169
    %2737 = vmatprep.subr.mxu0 %v2164
    %2738 = vmatpush1.msra.mxu0 %v2163
    %2739 = vmatprep.subr.mxu0 %v2158
    %2740 = vmatpush1.msra.mxu0 %v2157
    %2741 = vmatprep.subr.mxu0 %v2152
    %2742 = vmatpush1.msra.mxu0 %v2151
    %2743 = vmatprep.subr.mxu0 %v2146
    %2744 = vmatpush1.msra.mxu0 %v2145
    %2745 = vmatprep.subr.mxu0 %v2140
    %2746 = vmatpush1.msra.mxu0 %v2139
    %2747 = vmatprep.subr.mxu0 %v2134
    %2748 = vmatpush1.msra.mxu0 %v2133
    %2749 = vmatprep.subr.mxu0 %v2128
    %2750 = vmatpush1.msra.mxu0 %v2127
    %2751 = vmatprep.subr.mxu0 %v2122
    %2752 = vmatpush1.msra.mxu0 %v2121
    %2753 = vmatprep.subr.mxu0 %v2116
    %2754 = vmatpush1.msra.mxu0 %v2115
    %2755 = vmatprep.subr.mxu0 %v2110
    %2756 = vmatpush1.msra.mxu0 %v2109
    %2757 = vmatprep.subr.mxu0 0.0
    %2758 = vmatpush2.msra.mxu0 0.0
    %2759 = vmatprep.subr.mxu0 0.0
    %2760 = vmatpush2.msra.mxu0 0.0
    %2761 = vmatprep.subr.mxu0 0.0
    %2762 = vmatpush2.msra.mxu0 0.0
    %2763 = vmatprep.subr.mxu0 0.0
    %2764 = vmatpush2.msra.mxu0 0.0
    %2765 = vmatprep.subr.mxu0 0.0
    %2766 = vmatpush2.msra.mxu0 0.0
    %2767 = vmatprep.subr.mxu0 0.0
    %2768 = vmatpush2.msra.mxu0 0.0
    %2769 = vmatprep.subr.mxu0 0.0
    %2770 = vmatpush2.msra.mxu0 0.0
    %2771 = vmatprep.subr.mxu0 0.0
    %2772 = vmatpush2.msra.mxu0 0.0
    %2773 = vmatprep.subr.mxu0 0.0
    %2774 = vmatpush2.msra.mxu0 0.0
    %2775 = vmatprep.subr.mxu0 0.0
    %2776 = vmatpush2.msra.mxu0 0.0
    %2777 = vmatprep.subr.mxu0 0.0
    %2778 = vmatpush2.msra.mxu0 0.0
    %2779 = vmatprep.subr.mxu0 0.0
    %2780 = vmatpush2.msra.mxu0 0.0
    %2781 = vmatprep.subr.mxu0 0.0
    %2782 = vmatpush2.msra.mxu0 0.0
    %2783 = vmatprep.subr.mxu0 0.0
    %2784 = vmatpush2.msra.mxu0 0.0
    %2785 = vmatprep.subr.mxu0 0.0
    %2786 = vmatpush2.msra.mxu0 0.0
    %2787 = vmatprep.subr.mxu0 0.0
    %2788 = vmatpush2.msra.mxu0 0.0
    %2789 = vmatprep.mubr.f32.mxu0 0.0
    %2790 = vmatmul.mubr.f32.gmra.mxu0 %v2722
    %v2791 = vpop.f32.mrf.mxu0
    %v2792 = vadd.f32 %v2214, %v2791
    %v2793 = vpop.f32.mrf.mxu0
    %v2794 = vadd.f32 %v2218, %v2793
    %2795 = vdwg.mxu0
    %2796 = vmatprep.subr.mxu0 %v2202
    %2797 = vmatpush1.msra.mxu0 %v2201
    %2798 = vmatprep.subr.mxu0 %v2196
    %2799 = vmatpush1.msra.mxu0 %v2195
    %2800 = vmatprep.subr.mxu0 %v2190
    %2801 = vmatpush1.msra.mxu0 %v2189
    %2802 = vmatprep.subr.mxu0 %v2184
    %2803 = vmatpush1.msra.mxu0 %v2183
    %2804 = vmatprep.subr.mxu0 %v2178
    %2805 = vmatpush1.msra.mxu0 %v2177
    %2806 = vmatprep.subr.mxu0 %v2172
    %2807 = vmatpush1.msra.mxu0 %v2171
    %2808 = vmatprep.subr.mxu0 %v2166
    %2809 = vmatpush1.msra.mxu0 %v2165
    %2810 = vmatprep.subr.mxu0 %v2160
    %2811 = vmatpush1.msra.mxu0 %v2159
    %2812 = vmatprep.subr.mxu0 %v2154
    %2813 = vmatpush1.msra.mxu0 %v2153
    %2814 = vmatprep.subr.mxu0 %v2148
    %2815 = vmatpush1.msra.mxu0 %v2147
    %2816 = vmatprep.subr.mxu0 %v2142
    %2817 = vmatpush1.msra.mxu0 %v2141
    %2818 = vmatprep.subr.mxu0 %v2136
    %2819 = vmatpush1.msra.mxu0 %v2135
    %2820 = vmatprep.subr.mxu0 %v2130
    %2821 = vmatpush1.msra.mxu0 %v2129
    %2822 = vmatprep.subr.mxu0 %v2124
    %2823 = vmatpush1.msra.mxu0 %v2123
    %2824 = vmatprep.subr.mxu0 %v2118
    %2825 = vmatpush1.msra.mxu0 %v2117
    %2826 = vmatprep.subr.mxu0 %v2112
    %2827 = vmatpush1.msra.mxu0 %v2111
    %2828 = vmatprep.subr.mxu0 0.0
    %2829 = vmatpush2.msra.mxu0 0.0
    %2830 = vmatprep.subr.mxu0 0.0
    %2831 = vmatpush2.msra.mxu0 0.0
    %2832 = vmatprep.subr.mxu0 0.0
    %2833 = vmatpush2.msra.mxu0 0.0
    %2834 = vmatprep.subr.mxu0 0.0
    %2835 = vmatpush2.msra.mxu0 0.0
    %2836 = vmatprep.subr.mxu0 0.0
    %2837 = vmatpush2.msra.mxu0 0.0
    %2838 = vmatprep.subr.mxu0 0.0
    %2839 = vmatpush2.msra.mxu0 0.0
    %2840 = vmatprep.subr.mxu0 0.0
    %2841 = vmatpush2.msra.mxu0 0.0
    %2842 = vmatprep.subr.mxu0 0.0
    %2843 = vmatpush2.msra.mxu0 0.0
    %2844 = vmatprep.subr.mxu0 0.0
    %2845 = vmatpush2.msra.mxu0 0.0
    %2846 = vmatprep.subr.mxu0 0.0
    %2847 = vmatpush2.msra.mxu0 0.0
    %2848 = vmatprep.subr.mxu0 0.0
    %2849 = vmatpush2.msra.mxu0 0.0
    %2850 = vmatprep.subr.mxu0 0.0
    %2851 = vmatpush2.msra.mxu0 0.0
    %2852 = vmatprep.subr.mxu0 0.0
    %2853 = vmatpush2.msra.mxu0 0.0
    %2854 = vmatprep.subr.mxu0 0.0
    %2855 = vmatpush2.msra.mxu0 0.0
    %2856 = vmatprep.subr.mxu0 0.0
    %2857 = vmatpush2.msra.mxu0 0.0
    %2858 = vmatprep.subr.mxu0 0.0
    %2859 = vmatpush2.msra.mxu0 0.0
    %2860 = vmatprep.mubr.f32.mxu0 0.0
    %2861 = vmatmul.mubr.f32.gmra.mxu0 %v2722
    %v2862 = vpop.f32.mrf.mxu0
    %v2863 = vadd.f32 %v2222, %v2862
    %v2864 = vpop.f32.mrf.mxu0
    %v2865 = vadd.f32 %v2226, %v2864
    %2866 = vdwg.mxu0
    %2867 = vmatprep.subr.mxu0 %v2204
    %2868 = vmatpush1.msra.mxu0 %v2203
    %2869 = vmatprep.subr.mxu0 %v2198
    %2870 = vmatpush1.msra.mxu0 %v2197
    %2871 = vmatprep.subr.mxu0 %v2192
    %2872 = vmatpush1.msra.mxu0 %v2191
    %2873 = vmatprep.subr.mxu0 %v2186
    %2874 = vmatpush1.msra.mxu0 %v2185
    %2875 = vmatprep.subr.mxu0 %v2180
    %2876 = vmatpush1.msra.mxu0 %v2179
    %2877 = vmatprep.subr.mxu0 %v2174
    %2878 = vmatpush1.msra.mxu0 %v2173
    %2879 = vmatprep.subr.mxu0 %v2168
    %2880 = vmatpush1.msra.mxu0 %v2167
    %2881 = vmatprep.subr.mxu0 %v2162
    %2882 = vmatpush1.msra.mxu0 %v2161
    %2883 = vmatprep.subr.mxu0 %v2156
    %2884 = vmatpush1.msra.mxu0 %v2155
    %2885 = vmatprep.subr.mxu0 %v2150
    %2886 = vmatpush1.msra.mxu0 %v2149
    %2887 = vmatprep.subr.mxu0 %v2144
    %2888 = vmatpush1.msra.mxu0 %v2143
    %2889 = vmatprep.subr.mxu0 %v2138
    %2890 = vmatpush1.msra.mxu0 %v2137
    %2891 = vmatprep.subr.mxu0 %v2132
    %2892 = vmatpush1.msra.mxu0 %v2131
    %2893 = vmatprep.subr.mxu0 %v2126
    %2894 = vmatpush1.msra.mxu0 %v2125
    %2895 = vmatprep.subr.mxu0 %v2120
    %2896 = vmatpush1.msra.mxu0 %v2119
    %2897 = vmatprep.subr.mxu0 %v2114
    %2898 = vmatpush1.msra.mxu0 %v2113
    %2899 = vmatprep.subr.mxu0 0.0
    %2900 = vmatpush2.msra.mxu0 0.0
    %2901 = vmatprep.subr.mxu0 0.0
    %2902 = vmatpush2.msra.mxu0 0.0
    %2903 = vmatprep.subr.mxu0 0.0
    %2904 = vmatpush2.msra.mxu0 0.0
    %2905 = vmatprep.subr.mxu0 0.0
    %2906 = vmatpush2.msra.mxu0 0.0
    %2907 = vmatprep.subr.mxu0 0.0
    %2908 = vmatpush2.msra.mxu0 0.0
    %2909 = vmatprep.subr.mxu0 0.0
    %2910 = vmatpush2.msra.mxu0 0.0
    %2911 = vmatprep.subr.mxu0 0.0
    %2912 = vmatpush2.msra.mxu0 0.0
    %2913 = vmatprep.subr.mxu0 0.0
    %2914 = vmatpush2.msra.mxu0 0.0
    %2915 = vmatprep.subr.mxu0 0.0
    %2916 = vmatpush2.msra.mxu0 0.0
    %2917 = vmatprep.subr.mxu0 0.0
    %2918 = vmatpush2.msra.mxu0 0.0
    %2919 = vmatprep.subr.mxu0 0.0
    %2920 = vmatpush2.msra.mxu0 0.0
    %2921 = vmatprep.subr.mxu0 0.0
    %2922 = vmatpush2.msra.mxu0 0.0
    %2923 = vmatprep.subr.mxu0 0.0
    %2924 = vmatpush2.msra.mxu0 0.0
    %2925 = vmatprep.subr.mxu0 0.0
    %2926 = vmatpush2.msra.mxu0 0.0
    %2927 = vmatprep.subr.mxu0 0.0
    %2928 = vmatpush2.msra.mxu0 0.0
    %2929 = vmatprep.subr.mxu0 0.0
    %2930 = vmatpush2.msra.mxu0 0.0
    %2931 = vmatprep.mubr.f32.mxu0 0.0
    %2932 = vmatmul.mubr.f32.gmra.mxu0 %v2722
    %v2933 = vpop.f32.mrf.mxu0
    %v2934 = vadd.f32 %v2230, %v2933
    %v2935 = vpop.f32.mrf.mxu0
    %v2936 = vadd.f32 %v2234, %v2935
    %2937 = vdwg.mxu0
    %v2938 = vsel %vm2208, %v2792, %v2865
    %v2939 = vsel %vm2208, %v2794, %v2934
    %v2940 = vsel %vm2208, %v2863, %v2936
    %s2941 = scalar_lea.vmem [#allocation2], 48
    %v2942 = vld [vmem:[%s2941] sm:$0xff]
    %v2943 = vld [vmem:[%s2941 + $0x8] sm:$0xff]
    %v2944 = vld [vmem:[%s2941 + $0x10] sm:$0xff]
    %v2945 = vadd.f32 %v2942, %v2938
    %v2946 = vxor.u32 %v2945, 2147483648
    %v2947 = vmul.f32 %v2946, 1.442695
    %v2948 = vpow.pop %v2947
    %v2949 = vadd.f32 %v2948, 1.0
    %v2950 = vrcp.pop %v2949
    %v2951 = vmul.f32 1.0, %v2950
    %v2952 = vadd.f32 %v2943, %v2939
    %v2953 = vxor.u32 %v2952, 2147483648
    %v2954 = vmul.f32 %v2953, 1.442695
    %v2955 = vpow.pop %v2954
    %v2956 = vadd.f32 %v2955, 1.0
    %v2957 = vrcp.pop %v2956
    %v2958 = vmul.f32 1.0, %v2957
    %v2959 = vmul.f32 %v2951, %v2940
    %v2960 = vadd.f32 %v2944, %v2959
    %v2961 = vtanh.pop %v2960
    %v2962 = vsub.f32 1.0, %v2958
    %v2963 = vmul.f32 %v2962, %v2961
    %v2964 = vmul.f32 %v2958, %v2722
    %v2965 = vadd.f32 %v2963, %v2964
    %s2966 = scalar_lea.vmem [#allocation12], 16
    %2967 = vst [vmem:[%s2966] sm:$0xff] %v2965
    %2968 = vmatprep.subr.mxu0 %v2200
    %2969 = vmatpush1.msra.mxu0 %v2199
    %2970 = vmatprep.subr.mxu0 %v2194
    %2971 = vmatpush1.msra.mxu0 %v2193
    %2972 = vmatprep.subr.mxu0 %v2188
    %2973 = vmatpush1.msra.mxu0 %v2187
    %2974 = vmatprep.subr.mxu0 %v2182
    %2975 = vmatpush1.msra.mxu0 %v2181
    %2976 = vmatprep.subr.mxu0 %v2176
    %2977 = vmatpush1.msra.mxu0 %v2175
    %2978 = vmatprep.subr.mxu0 %v2170
    %2979 = vmatpush1.msra.mxu0 %v2169
    %2980 = vmatprep.subr.mxu0 %v2164
    %2981 = vmatpush1.msra.mxu0 %v2163
    %2982 = vmatprep.subr.mxu0 %v2158
    %2983 = vmatpush1.msra.mxu0 %v2157
    %2984 = vmatprep.subr.mxu0 %v2152
    %2985 = vmatpush1.msra.mxu0 %v2151
    %2986 = vmatprep.subr.mxu0 %v2146
    %2987 = vmatpush1.msra.mxu0 %v2145
    %2988 = vmatprep.subr.mxu0 %v2140
    %2989 = vmatpush1.msra.mxu0 %v2139
    %2990 = vmatprep.subr.mxu0 %v2134
    %2991 = vmatpush1.msra.mxu0 %v2133
    %2992 = vmatprep.subr.mxu0 %v2128
    %2993 = vmatpush1.msra.mxu0 %v2127
    %2994 = vmatprep.subr.mxu0 %v2122
    %2995 = vmatpush1.msra.mxu0 %v2121
    %2996 = vmatprep.subr.mxu0 %v2116
    %2997 = vmatpush1.msra.mxu0 %v2115
    %2998 = vmatprep.subr.mxu0 %v2110
    %2999 = vmatpush1.msra.mxu0 %v2109
    %3000 = vmatprep.subr.mxu0 0.0
    %3001 = vmatpush2.msra.mxu0 0.0
    %3002 = vmatprep.subr.mxu0 0.0
    %3003 = vmatpush2.msra.mxu0 0.0
    %3004 = vmatprep.subr.mxu0 0.0
    %3005 = vmatpush2.msra.mxu0 0.0
    %3006 = vmatprep.subr.mxu0 0.0
    %3007 = vmatpush2.msra.mxu0 0.0
    %3008 = vmatprep.subr.mxu0 0.0
    %3009 = vmatpush2.msra.mxu0 0.0
    %3010 = vmatprep.subr.mxu0 0.0
    %3011 = vmatpush2.msra.mxu0 0.0
    %3012 = vmatprep.subr.mxu0 0.0
    %3013 = vmatpush2.msra.mxu0 0.0
    %3014 = vmatprep.subr.mxu0 0.0
    %3015 = vmatpush2.msra.mxu0 0.0
    %3016 = vmatprep.subr.mxu0 0.0
    %3017 = vmatpush2.msra.mxu0 0.0
    %3018 = vmatprep.subr.mxu0 0.0
    %3019 = vmatpush2.msra.mxu0 0.0
    %3020 = vmatprep.subr.mxu0 0.0
    %3021 = vmatpush2.msra.mxu0 0.0
    %3022 = vmatprep.subr.mxu0 0.0
    %3023 = vmatpush2.msra.mxu0 0.0
    %3024 = vmatprep.subr.mxu0 0.0
    %3025 = vmatpush2.msra.mxu0 0.0
    %3026 = vmatprep.subr.mxu0 0.0
    %3027 = vmatpush2.msra.mxu0 0.0
    %3028 = vmatprep.subr.mxu0 0.0
    %3029 = vmatpush2.msra.mxu0 0.0
    %3030 = vmatprep.subr.mxu0 0.0
    %3031 = vmatpush2.msra.mxu0 0.0
    %3032 = vmatprep.mubr.f32.mxu0 0.0
    %3033 = vmatmul.mubr.f32.gmra.mxu0 %v2965
    %v3034 = vpop.f32.mrf.mxu0
    %v3035 = vadd.f32 %v2214, %v3034
    %v3036 = vpop.f32.mrf.mxu0
    %v3037 = vadd.f32 %v2218, %v3036
    %3038 = vdwg.mxu0
    %3039 = vmatprep.subr.mxu0 %v2202
    %3040 = vmatpush1.msra.mxu0 %v2201
    %3041 = vmatprep.subr.mxu0 %v2196
    %3042 = vmatpush1.msra.mxu0 %v2195
    %3043 = vmatprep.subr.mxu0 %v2190
    %3044 = vmatpush1.msra.mxu0 %v2189
    %3045 = vmatprep.subr.mxu0 %v2184
    %3046 = vmatpush1.msra.mxu0 %v2183
    %3047 = vmatprep.subr.mxu0 %v2178
    %3048 = vmatpush1.msra.mxu0 %v2177
    %3049 = vmatprep.subr.mxu0 %v2172
    %3050 = vmatpush1.msra.mxu0 %v2171
    %3051 = vmatprep.subr.mxu0 %v2166
    %3052 = vmatpush1.msra.mxu0 %v2165
    %3053 = vmatprep.subr.mxu0 %v2160
    %3054 = vmatpush1.msra.mxu0 %v2159
    %3055 = vmatprep.subr.mxu0 %v2154
    %3056 = vmatpush1.msra.mxu0 %v2153
    %3057 = vmatprep.subr.mxu0 %v2148
    %3058 = vmatpush1.msra.mxu0 %v2147
    %3059 = vmatprep.subr.mxu0 %v2142
    %3060 = vmatpush1.msra.mxu0 %v2141
    %3061 = vmatprep.subr.mxu0 %v2136
    %3062 = vmatpush1.msra.mxu0 %v2135
    %3063 = vmatprep.subr.mxu0 %v2130
    %3064 = vmatpush1.msra.mxu0 %v2129
    %3065 = vmatprep.subr.mxu0 %v2124
    %3066 = vmatpush1.msra.mxu0 %v2123
    %3067 = vmatprep.subr.mxu0 %v2118
    %3068 = vmatpush1.msra.mxu0 %v2117
    %3069 = vmatprep.subr.mxu0 %v2112
    %3070 = vmatpush1.msra.mxu0 %v2111
    %3071 = vmatprep.subr.mxu0 0.0
    %3072 = vmatpush2.msra.mxu0 0.0
    %3073 = vmatprep.subr.mxu0 0.0
    %3074 = vmatpush2.msra.mxu0 0.0
    %3075 = vmatprep.subr.mxu0 0.0
    %3076 = vmatpush2.msra.mxu0 0.0
    %3077 = vmatprep.subr.mxu0 0.0
    %3078 = vmatpush2.msra.mxu0 0.0
    %3079 = vmatprep.subr.mxu0 0.0
    %3080 = vmatpush2.msra.mxu0 0.0
    %3081 = vmatprep.subr.mxu0 0.0
    %3082 = vmatpush2.msra.mxu0 0.0
    %3083 = vmatprep.subr.mxu0 0.0
    %3084 = vmatpush2.msra.mxu0 0.0
    %3085 = vmatprep.subr.mxu0 0.0
    %3086 = vmatpush2.msra.mxu0 0.0
    %3087 = vmatprep.subr.mxu0 0.0
    %3088 = vmatpush2.msra.mxu0 0.0
    %3089 = vmatprep.subr.mxu0 0.0
    %3090 = vmatpush2.msra.mxu0 0.0
    %3091 = vmatprep.subr.mxu0 0.0
    %3092 = vmatpush2.msra.mxu0 0.0
    %3093 = vmatprep.subr.mxu0 0.0
    %3094 = vmatpush2.msra.mxu0 0.0
    %3095 = vmatprep.subr.mxu0 0.0
    %3096 = vmatpush2.msra.mxu0 0.0
    %3097 = vmatprep.subr.mxu0 0.0
    %3098 = vmatpush2.msra.mxu0 0.0
    %3099 = vmatprep.subr.mxu0 0.0
    %3100 = vmatpush2.msra.mxu0 0.0
    %3101 = vmatprep.subr.mxu0 0.0
    %3102 = vmatpush2.msra.mxu0 0.0
    %3103 = vmatprep.mubr.f32.mxu0 0.0
    %3104 = vmatmul.mubr.f32.gmra.mxu0 %v2965
    %v3105 = vpop.f32.mrf.mxu0
    %v3106 = vadd.f32 %v2222, %v3105
    %v3107 = vpop.f32.mrf.mxu0
    %v3108 = vadd.f32 %v2226, %v3107
    %3109 = vdwg.mxu0
    %3110 = vmatprep.subr.mxu0 %v2204
    %3111 = vmatpush1.msra.mxu0 %v2203
    %3112 = vmatprep.subr.mxu0 %v2198
    %3113 = vmatpush1.msra.mxu0 %v2197
    %3114 = vmatprep.subr.mxu0 %v2192
    %3115 = vmatpush1.msra.mxu0 %v2191
    %3116 = vmatprep.subr.mxu0 %v2186
    %3117 = vmatpush1.msra.mxu0 %v2185
    %3118 = vmatprep.subr.mxu0 %v2180
    %3119 = vmatpush1.msra.mxu0 %v2179
    %3120 = vmatprep.subr.mxu0 %v2174
    %3121 = vmatpush1.msra.mxu0 %v2173
    %3122 = vmatprep.subr.mxu0 %v2168
    %3123 = vmatpush1.msra.mxu0 %v2167
    %3124 = vmatprep.subr.mxu0 %v2162
    %3125 = vmatpush1.msra.mxu0 %v2161
    %3126 = vmatprep.subr.mxu0 %v2156
    %3127 = vmatpush1.msra.mxu0 %v2155
    %3128 = vmatprep.subr.mxu0 %v2150
    %3129 = vmatpush1.msra.mxu0 %v2149
    %3130 = vmatprep.subr.mxu0 %v2144
    %3131 = vmatpush1.msra.mxu0 %v2143
    %3132 = vmatprep.subr.mxu0 %v2138
    %3133 = vmatpush1.msra.mxu0 %v2137
    %3134 = vmatprep.subr.mxu0 %v2132
    %3135 = vmatpush1.msra.mxu0 %v2131
    %3136 = vmatprep.subr.mxu0 %v2126
    %3137 = vmatpush1.msra.mxu0 %v2125
    %3138 = vmatprep.subr.mxu0 %v2120
    %3139 = vmatpush1.msra.mxu0 %v2119
    %3140 = vmatprep.subr.mxu0 %v2114
    %3141 = vmatpush1.msra.mxu0 %v2113
    %3142 = vmatprep.subr.mxu0 0.0
    %3143 = vmatpush2.msra.mxu0 0.0
    %3144 = vmatprep.subr.mxu0 0.0
    %3145 = vmatpush2.msra.mxu0 0.0
    %3146 = vmatprep.subr.mxu0 0.0
    %3147 = vmatpush2.msra.mxu0 0.0
    %3148 = vmatprep.subr.mxu0 0.0
    %3149 = vmatpush2.msra.mxu0 0.0
    %3150 = vmatprep.subr.mxu0 0.0
    %3151 = vmatpush2.msra.mxu0 0.0
    %3152 = vmatprep.subr.mxu0 0.0
    %3153 = vmatpush2.msra.mxu0 0.0
    %3154 = vmatprep.subr.mxu0 0.0
    %3155 = vmatpush2.msra.mxu0 0.0
    %3156 = vmatprep.subr.mxu0 0.0
    %3157 = vmatpush2.msra.mxu0 0.0
    %3158 = vmatprep.subr.mxu0 0.0
    %3159 = vmatpush2.msra.mxu0 0.0
    %3160 = vmatprep.subr.mxu0 0.0
    %3161 = vmatpush2.msra.mxu0 0.0
    %3162 = vmatprep.subr.mxu0 0.0
    %3163 = vmatpush2.msra.mxu0 0.0
    %3164 = vmatprep.subr.mxu0 0.0
    %3165 = vmatpush2.msra.mxu0 0.0
    %3166 = vmatprep.subr.mxu0 0.0
    %3167 = vmatpush2.msra.mxu0 0.0
    %3168 = vmatprep.subr.mxu0 0.0
    %3169 = vmatpush2.msra.mxu0 0.0
    %3170 = vmatprep.subr.mxu0 0.0
    %3171 = vmatpush2.msra.mxu0 0.0
    %3172 = vmatprep.subr.mxu0 0.0
    %3173 = vmatpush2.msra.mxu0 0.0
    %3174 = vmatprep.mubr.f32.mxu0 0.0
    %3175 = vmatmul.mubr.f32.gmra.mxu0 %v2965
    %v3176 = vpop.f32.mrf.mxu0
    %v3177 = vadd.f32 %v2230, %v3176
    %v3178 = vpop.f32.mrf.mxu0
    %v3179 = vadd.f32 %v2234, %v3178
    %3180 = vdwg.mxu0
    %v3181 = vsel %vm2208, %v3035, %v3108
    %v3182 = vsel %vm2208, %v3037, %v3177
    %v3183 = vsel %vm2208, %v3106, %v3179
    %s3184 = scalar_lea.vmem [#allocation2], 72
    %v3185 = vld [vmem:[%s3184] sm:$0xff]
    %v3186 = vld [vmem:[%s3184 + $0x8] sm:$0xff]
    %v3187 = vld [vmem:[%s3184 + $0x10] sm:$0xff]
    %v3188 = vadd.f32 %v3185, %v3181
    %v3189 = vxor.u32 %v3188, 2147483648
    %v3190 = vmul.f32 %v3189, 1.442695
    %v3191 = vpow.pop %v3190
    %v3192 = vadd.f32 %v3191, 1.0
    %v3193 = vrcp.pop %v3192
    %v3194 = vmul.f32 1.0, %v3193
    %v3195 = vadd.f32 %v3186, %v3182
    %v3196 = vxor.u32 %v3195, 2147483648
    %v3197 = vmul.f32 %v3196, 1.442695
    %v3198 = vpow.pop %v3197
    %v3199 = vadd.f32 %v3198, 1.0
    %v3200 = vrcp.pop %v3199
    %v3201 = vmul.f32 1.0, %v3200
    %v3202 = vmul.f32 %v3194, %v3183
    %v3203 = vadd.f32 %v3187, %v3202
    %v3204 = vtanh.pop %v3203
    %v3205 = vsub.f32 1.0, %v3201
    %v3206 = vmul.f32 %v3205, %v3204
    %v3207 = vmul.f32 %v3201, %v2965
    %v3208 = vadd.f32 %v3206, %v3207
    %s3209 = scalar_lea.vmem [#allocation12], 24
    %3210 = vst [vmem:[%s3209] sm:$0xff] %v3208
    %3211 = vmatprep.subr.mxu0 %v2200
    %3212 = vmatpush1.msra.mxu0 %v2199
    %3213 = vmatprep.subr.mxu0 %v2194
    %3214 = vmatpush1.msra.mxu0 %v2193
    %3215 = vmatprep.subr.mxu0 %v2188
    %3216 = vmatpush1.msra.mxu0 %v2187
    %3217 = vmatprep.subr.mxu0 %v2182
    %3218 = vmatpush1.msra.mxu0 %v2181
    %3219 = vmatprep.subr.mxu0 %v2176
    %3220 = vmatpush1.msra.mxu0 %v2175
    %3221 = vmatprep.subr.mxu0 %v2170
    %3222 = vmatpush1.msra.mxu0 %v2169
    %3223 = vmatprep.subr.mxu0 %v2164
    %3224 = vmatpush1.msra.mxu0 %v2163
    %3225 = vmatprep.subr.mxu0 %v2158
    %3226 = vmatpush1.msra.mxu0 %v2157
    %3227 = vmatprep.subr.mxu0 %v2152
    %3228 = vmatpush1.msra.mxu0 %v2151
    %3229 = vmatprep.subr.mxu0 %v2146
    %3230 = vmatpush1.msra.mxu0 %v2145
    %3231 = vmatprep.subr.mxu0 %v2140
    %3232 = vmatpush1.msra.mxu0 %v2139
    %3233 = vmatprep.subr.mxu0 %v2134
    %3234 = vmatpush1.msra.mxu0 %v2133
    %3235 = vmatprep.subr.mxu0 %v2128
    %3236 = vmatpush1.msra.mxu0 %v2127
    %3237 = vmatprep.subr.mxu0 %v2122
    %3238 = vmatpush1.msra.mxu0 %v2121
    %3239 = vmatprep.subr.mxu0 %v2116
    %3240 = vmatpush1.msra.mxu0 %v2115
    %3241 = vmatprep.subr.mxu0 %v2110
    %3242 = vmatpush1.msra.mxu0 %v2109
    %3243 = vmatprep.subr.mxu0 0.0
    %3244 = vmatpush2.msra.mxu0 0.0
    %3245 = vmatprep.subr.mxu0 0.0
    %3246 = vmatpush2.msra.mxu0 0.0
    %3247 = vmatprep.subr.mxu0 0.0
    %3248 = vmatpush2.msra.mxu0 0.0
    %3249 = vmatprep.subr.mxu0 0.0
    %3250 = vmatpush2.msra.mxu0 0.0
    %3251 = vmatprep.subr.mxu0 0.0
    %3252 = vmatpush2.msra.mxu0 0.0
    %3253 = vmatprep.subr.mxu0 0.0
    %3254 = vmatpush2.msra.mxu0 0.0
    %3255 = vmatprep.subr.mxu0 0.0
    %3256 = vmatpush2.msra.mxu0 0.0
    %3257 = vmatprep.subr.mxu0 0.0
    %3258 = vmatpush2.msra.mxu0 0.0
    %3259 = vmatprep.subr.mxu0 0.0
    %3260 = vmatpush2.msra.mxu0 0.0
    %3261 = vmatprep.subr.mxu0 0.0
    %3262 = vmatpush2.msra.mxu0 0.0
    %3263 = vmatprep.subr.mxu0 0.0
    %3264 = vmatpush2.msra.mxu0 0.0
    %3265 = vmatprep.subr.mxu0 0.0
    %3266 = vmatpush2.msra.mxu0 0.0
    %3267 = vmatprep.subr.mxu0 0.0
    %3268 = vmatpush2.msra.mxu0 0.0
    %3269 = vmatprep.subr.mxu0 0.0
    %3270 = vmatpush2.msra.mxu0 0.0
    %3271 = vmatprep.subr.mxu0 0.0
    %3272 = vmatpush2.msra.mxu0 0.0
    %3273 = vmatprep.subr.mxu0 0.0
    %3274 = vmatpush2.msra.mxu0 0.0
    %3275 = vmatprep.mubr.f32.mxu0 0.0
    %3276 = vmatmul.mubr.f32.gmra.mxu0 %v3208
    %v3277 = vpop.f32.mrf.mxu0
    %v3278 = vadd.f32 %v2214, %v3277
    %v3279 = vpop.f32.mrf.mxu0
    %v3280 = vadd.f32 %v2218, %v3279
    %3281 = vdwg.mxu0
    %3282 = vmatprep.subr.mxu0 %v2202
    %3283 = vmatpush1.msra.mxu0 %v2201
    %3284 = vmatprep.subr.mxu0 %v2196
    %3285 = vmatpush1.msra.mxu0 %v2195
    %3286 = vmatprep.subr.mxu0 %v2190
    %3287 = vmatpush1.msra.mxu0 %v2189
    %3288 = vmatprep.subr.mxu0 %v2184
    %3289 = vmatpush1.msra.mxu0 %v2183
    %3290 = vmatprep.subr.mxu0 %v2178
    %3291 = vmatpush1.msra.mxu0 %v2177
    %3292 = vmatprep.subr.mxu0 %v2172
    %3293 = vmatpush1.msra.mxu0 %v2171
    %3294 = vmatprep.subr.mxu0 %v2166
    %3295 = vmatpush1.msra.mxu0 %v2165
    %3296 = vmatprep.subr.mxu0 %v2160
    %3297 = vmatpush1.msra.mxu0 %v2159
    %3298 = vmatprep.subr.mxu0 %v2154
    %3299 = vmatpush1.msra.mxu0 %v2153
    %3300 = vmatprep.subr.mxu0 %v2148
    %3301 = vmatpush1.msra.mxu0 %v2147
    %3302 = vmatprep.subr.mxu0 %v2142
    %3303 = vmatpush1.msra.mxu0 %v2141
    %3304 = vmatprep.subr.mxu0 %v2136
    %3305 = vmatpush1.msra.mxu0 %v2135
    %3306 = vmatprep.subr.mxu0 %v2130
    %3307 = vmatpush1.msra.mxu0 %v2129
    %3308 = vmatprep.subr.mxu0 %v2124
    %3309 = vmatpush1.msra.mxu0 %v2123
    %3310 = vmatprep.subr.mxu0 %v2118
    %3311 = vmatpush1.msra.mxu0 %v2117
    %3312 = vmatprep.subr.mxu0 %v2112
    %3313 = vmatpush1.msra.mxu0 %v2111
    %3314 = vmatprep.subr.mxu0 0.0
    %3315 = vmatpush2.msra.mxu0 0.0
    %3316 = vmatprep.subr.mxu0 0.0
    %3317 = vmatpush2.msra.mxu0 0.0
    %3318 = vmatprep.subr.mxu0 0.0
    %3319 = vmatpush2.msra.mxu0 0.0
    %3320 = vmatprep.subr.mxu0 0.0
    %3321 = vmatpush2.msra.mxu0 0.0
    %3322 = vmatprep.subr.mxu0 0.0
    %3323 = vmatpush2.msra.mxu0 0.0
    %3324 = vmatprep.subr.mxu0 0.0
    %3325 = vmatpush2.msra.mxu0 0.0
    %3326 = vmatprep.subr.mxu0 0.0
    %3327 = vmatpush2.msra.mxu0 0.0
    %3328 = vmatprep.subr.mxu0 0.0
    %3329 = vmatpush2.msra.mxu0 0.0
    %3330 = vmatprep.subr.mxu0 0.0
    %3331 = vmatpush2.msra.mxu0 0.0
    %3332 = vmatprep.subr.mxu0 0.0
    %3333 = vmatpush2.msra.mxu0 0.0
    %3334 = vmatprep.subr.mxu0 0.0
    %3335 = vmatpush2.msra.mxu0 0.0
    %3336 = vmatprep.subr.mxu0 0.0
    %3337 = vmatpush2.msra.mxu0 0.0
    %3338 = vmatprep.subr.mxu0 0.0
    %3339 = vmatpush2.msra.mxu0 0.0
    %3340 = vmatprep.subr.mxu0 0.0
    %3341 = vmatpush2.msra.mxu0 0.0
    %3342 = vmatprep.subr.mxu0 0.0
    %3343 = vmatpush2.msra.mxu0 0.0
    %3344 = vmatprep.subr.mxu0 0.0
    %3345 = vmatpush2.msra.mxu0 0.0
    %3346 = vmatprep.mubr.f32.mxu0 0.0
    %3347 = vmatmul.mubr.f32.gmra.mxu0 %v3208
    %v3348 = vpop.f32.mrf.mxu0
    %v3349 = vadd.f32 %v2222, %v3348
    %v3350 = vpop.f32.mrf.mxu0
    %v3351 = vadd.f32 %v2226, %v3350
    %3352 = vdwg.mxu0
    %3353 = vmatprep.subr.mxu0 %v2204
    %3354 = vmatpush1.msra.mxu0 %v2203
    %3355 = vmatprep.subr.mxu0 %v2198
    %3356 = vmatpush1.msra.mxu0 %v2197
    %3357 = vmatprep.subr.mxu0 %v2192
    %3358 = vmatpush1.msra.mxu0 %v2191
    %3359 = vmatprep.subr.mxu0 %v2186
    %3360 = vmatpush1.msra.mxu0 %v2185
    %3361 = vmatprep.subr.mxu0 %v2180
    %3362 = vmatpush1.msra.mxu0 %v2179
    %3363 = vmatprep.subr.mxu0 %v2174
    %3364 = vmatpush1.msra.mxu0 %v2173
    %3365 = vmatprep.subr.mxu0 %v2168
    %3366 = vmatpush1.msra.mxu0 %v2167
    %3367 = vmatprep.subr.mxu0 %v2162
    %3368 = vmatpush1.msra.mxu0 %v2161
    %3369 = vmatprep.subr.mxu0 %v2156
    %3370 = vmatpush1.msra.mxu0 %v2155
    %3371 = vmatprep.subr.mxu0 %v2150
    %3372 = vmatpush1.msra.mxu0 %v2149
    %3373 = vmatprep.subr.mxu0 %v2144
    %3374 = vmatpush1.msra.mxu0 %v2143
    %3375 = vmatprep.subr.mxu0 %v2138
    %3376 = vmatpush1.msra.mxu0 %v2137
    %3377 = vmatprep.subr.mxu0 %v2132
    %3378 = vmatpush1.msra.mxu0 %v2131
    %3379 = vmatprep.subr.mxu0 %v2126
    %3380 = vmatpush1.msra.mxu0 %v2125
    %3381 = vmatprep.subr.mxu0 %v2120
    %3382 = vmatpush1.msra.mxu0 %v2119
    %3383 = vmatprep.subr.mxu0 %v2114
    %3384 = vmatpush1.msra.mxu0 %v2113
    %3385 = vmatprep.subr.mxu0 0.0
    %3386 = vmatpush2.msra.mxu0 0.0
    %3387 = vmatprep.subr.mxu0 0.0
    %3388 = vmatpush2.msra.mxu0 0.0
    %3389 = vmatprep.subr.mxu0 0.0
    %3390 = vmatpush2.msra.mxu0 0.0
    %3391 = vmatprep.subr.mxu0 0.0
    %3392 = vmatpush2.msra.mxu0 0.0
    %3393 = vmatprep.subr.mxu0 0.0
    %3394 = vmatpush2.msra.mxu0 0.0
    %3395 = vmatprep.subr.mxu0 0.0
    %3396 = vmatpush2.msra.mxu0 0.0
    %3397 = vmatprep.subr.mxu0 0.0
    %3398 = vmatpush2.msra.mxu0 0.0
    %3399 = vmatprep.subr.mxu0 0.0
    %3400 = vmatpush2.msra.mxu0 0.0
    %3401 = vmatprep.subr.mxu0 0.0
    %3402 = vmatpush2.msra.mxu0 0.0
    %3403 = vmatprep.subr.mxu0 0.0
    %3404 = vmatpush2.msra.mxu0 0.0
    %3405 = vmatprep.subr.mxu0 0.0
    %3406 = vmatpush2.msra.mxu0 0.0
    %3407 = vmatprep.subr.mxu0 0.0
    %3408 = vmatpush2.msra.mxu0 0.0
    %3409 = vmatprep.subr.mxu0 0.0
    %3410 = vmatpush2.msra.mxu0 0.0
    %3411 = vmatprep.subr.mxu0 0.0
    %3412 = vmatpush2.msra.mxu0 0.0
    %3413 = vmatprep.subr.mxu0 0.0
    %3414 = vmatpush2.msra.mxu0 0.0
    %3415 = vmatprep.subr.mxu0 0.0
    %3416 = vmatpush2.msra.mxu0 0.0
    %3417 = vmatprep.mubr.f32.mxu0 0.0
    %3418 = vmatmul.mubr.f32.gmra.mxu0 %v3208
    %v3419 = vpop.f32.mrf.mxu0
    %v3420 = vadd.f32 %v2230, %v3419
    %v3421 = vpop.f32.mrf.mxu0
    %v3422 = vadd.f32 %v2234, %v3421
    %3423 = vdwg.mxu0
    %v3424 = vsel %vm2208, %v3278, %v3351
    %v3425 = vsel %vm2208, %v3280, %v3420
    %v3426 = vsel %vm2208, %v3349, %v3422
    %s3427 = scalar_lea.vmem [#allocation2], 96
    %v3428 = vld [vmem:[%s3427] sm:$0xff]
    %v3429 = vld [vmem:[%s3427 + $0x8] sm:$0xff]
    %v3430 = vld [vmem:[%s3427 + $0x10] sm:$0xff]
    %v3431 = vadd.f32 %v3428, %v3424
    %v3432 = vxor.u32 %v3431, 2147483648
    %v3433 = vmul.f32 %v3432, 1.442695
    %v3434 = vpow.pop %v3433
    %v3435 = vadd.f32 %v3434, 1.0
    %v3436 = vrcp.pop %v3435
    %v3437 = vmul.f32 1.0, %v3436
    %v3438 = vadd.f32 %v3429, %v3425
    %v3439 = vxor.u32 %v3438, 2147483648
    %v3440 = vmul.f32 %v3439, 1.442695
    %v3441 = vpow.pop %v3440
    %v3442 = vadd.f32 %v3441, 1.0
    %v3443 = vrcp.pop %v3442
    %v3444 = vmul.f32 1.0, %v3443
    %v3445 = vmul.f32 %v3437, %v3426
    %v3446 = vadd.f32 %v3430, %v3445
    %v3447 = vtanh.pop %v3446
    %v3448 = vsub.f32 1.0, %v3444
    %v3449 = vmul.f32 %v3448, %v3447
    %v3450 = vmul.f32 %v3444, %v3208
    %v3451 = vadd.f32 %v3449, %v3450
    %s3452 = scalar_lea.vmem [#allocation12], 32
    %3453 = vst [vmem:[%s3452] sm:$0xff] %v3451
    %3454 = vmatprep.subr.mxu0 %v2200
    %3455 = vmatpush1.msra.mxu0 %v2199
    %3456 = vmatprep.subr.mxu0 %v2194
    %3457 = vmatpush1.msra.mxu0 %v2193
    %3458 = vmatprep.subr.mxu0 %v2188
    %3459 = vmatpush1.msra.mxu0 %v2187
    %3460 = vmatprep.subr.mxu0 %v2182
    %3461 = vmatpush1.msra.mxu0 %v2181
    %3462 = vmatprep.subr.mxu0 %v2176
    %3463 = vmatpush1.msra.mxu0 %v2175
    %3464 = vmatprep.subr.mxu0 %v2170
    %3465 = vmatpush1.msra.mxu0 %v2169
    %3466 = vmatprep.subr.mxu0 %v2164
    %3467 = vmatpush1.msra.mxu0 %v2163
    %3468 = vmatprep.subr.mxu0 %v2158
    %3469 = vmatpush1.msra.mxu0 %v2157
    %3470 = vmatprep.subr.mxu0 %v2152
    %3471 = vmatpush1.msra.mxu0 %v2151
    %3472 = vmatprep.subr.mxu0 %v2146
    %3473 = vmatpush1.msra.mxu0 %v2145
    %3474 = vmatprep.subr.mxu0 %v2140
    %3475 = vmatpush1.msra.mxu0 %v2139
    %3476 = vmatprep.subr.mxu0 %v2134
    %3477 = vmatpush1.msra.mxu0 %v2133
    %3478 = vmatprep.subr.mxu0 %v2128
    %3479 = vmatpush1.msra.mxu0 %v2127
    %3480 = vmatprep.subr.mxu0 %v2122
    %3481 = vmatpush1.msra.mxu0 %v2121
    %3482 = vmatprep.subr.mxu0 %v2116
    %3483 = vmatpush1.msra.mxu0 %v2115
    %3484 = vmatprep.subr.mxu0 %v2110
    %3485 = vmatpush1.msra.mxu0 %v2109
    %3486 = vmatprep.subr.mxu0 0.0
    %3487 = vmatpush2.msra.mxu0 0.0
    %3488 = vmatprep.subr.mxu0 0.0
    %3489 = vmatpush2.msra.mxu0 0.0
    %3490 = vmatprep.subr.mxu0 0.0
    %3491 = vmatpush2.msra.mxu0 0.0
    %3492 = vmatprep.subr.mxu0 0.0
    %3493 = vmatpush2.msra.mxu0 0.0
    %3494 = vmatprep.subr.mxu0 0.0
    %3495 = vmatpush2.msra.mxu0 0.0
    %3496 = vmatprep.subr.mxu0 0.0
    %3497 = vmatpush2.msra.mxu0 0.0
    %3498 = vmatprep.subr.mxu0 0.0
    %3499 = vmatpush2.msra.mxu0 0.0
    %3500 = vmatprep.subr.mxu0 0.0
    %3501 = vmatpush2.msra.mxu0 0.0
    %3502 = vmatprep.subr.mxu0 0.0
    %3503 = vmatpush2.msra.mxu0 0.0
    %3504 = vmatprep.subr.mxu0 0.0
    %3505 = vmatpush2.msra.mxu0 0.0
    %3506 = vmatprep.subr.mxu0 0.0
    %3507 = vmatpush2.msra.mxu0 0.0
    %3508 = vmatprep.subr.mxu0 0.0
    %3509 = vmatpush2.msra.mxu0 0.0
    %3510 = vmatprep.subr.mxu0 0.0
    %3511 = vmatpush2.msra.mxu0 0.0
    %3512 = vmatprep.subr.mxu0 0.0
    %3513 = vmatpush2.msra.mxu0 0.0
    %3514 = vmatprep.subr.mxu0 0.0
    %3515 = vmatpush2.msra.mxu0 0.0
    %3516 = vmatprep.subr.mxu0 0.0
    %3517 = vmatpush2.msra.mxu0 0.0
    %3518 = vmatprep.mubr.f32.mxu0 0.0
    %3519 = vmatmul.mubr.f32.gmra.mxu0 %v3451
    %v3520 = vpop.f32.mrf.mxu0
    %v3521 = vadd.f32 %v2214, %v3520
    %v3522 = vpop.f32.mrf.mxu0
    %v3523 = vadd.f32 %v2218, %v3522
    %3524 = vdwg.mxu0
    %3525 = vmatprep.subr.mxu0 %v2202
    %3526 = vmatpush1.msra.mxu0 %v2201
    %3527 = vmatprep.subr.mxu0 %v2196
    %3528 = vmatpush1.msra.mxu0 %v2195
    %3529 = vmatprep.subr.mxu0 %v2190
    %3530 = vmatpush1.msra.mxu0 %v2189
    %3531 = vmatprep.subr.mxu0 %v2184
    %3532 = vmatpush1.msra.mxu0 %v2183
    %3533 = vmatprep.subr.mxu0 %v2178
    %3534 = vmatpush1.msra.mxu0 %v2177
    %3535 = vmatprep.subr.mxu0 %v2172
    %3536 = vmatpush1.msra.mxu0 %v2171
    %3537 = vmatprep.subr.mxu0 %v2166
    %3538 = vmatpush1.msra.mxu0 %v2165
    %3539 = vmatprep.subr.mxu0 %v2160
    %3540 = vmatpush1.msra.mxu0 %v2159
    %3541 = vmatprep.subr.mxu0 %v2154
    %3542 = vmatpush1.msra.mxu0 %v2153
    %3543 = vmatprep.subr.mxu0 %v2148
    %3544 = vmatpush1.msra.mxu0 %v2147
    %3545 = vmatprep.subr.mxu0 %v2142
    %3546 = vmatpush1.msra.mxu0 %v2141
    %3547 = vmatprep.subr.mxu0 %v2136
    %3548 = vmatpush1.msra.mxu0 %v2135
    %3549 = vmatprep.subr.mxu0 %v2130
    %3550 = vmatpush1.msra.mxu0 %v2129
    %3551 = vmatprep.subr.mxu0 %v2124
    %3552 = vmatpush1.msra.mxu0 %v2123
    %3553 = vmatprep.subr.mxu0 %v2118
    %3554 = vmatpush1.msra.mxu0 %v2117
    %3555 = vmatprep.subr.mxu0 %v2112
    %3556 = vmatpush1.msra.mxu0 %v2111
    %3557 = vmatprep.subr.mxu0 0.0
    %3558 = vmatpush2.msra.mxu0 0.0
    %3559 = vmatprep.subr.mxu0 0.0
    %3560 = vmatpush2.msra.mxu0 0.0
    %3561 = vmatprep.subr.mxu0 0.0
    %3562 = vmatpush2.msra.mxu0 0.0
    %3563 = vmatprep.subr.mxu0 0.0
    %3564 = vmatpush2.msra.mxu0 0.0
    %3565 = vmatprep.subr.mxu0 0.0
    %3566 = vmatpush2.msra.mxu0 0.0
    %3567 = vmatprep.subr.mxu0 0.0
    %3568 = vmatpush2.msra.mxu0 0.0
    %3569 = vmatprep.subr.mxu0 0.0
    %3570 = vmatpush2.msra.mxu0 0.0
    %3571 = vmatprep.subr.mxu0 0.0
    %3572 = vmatpush2.msra.mxu0 0.0
    %3573 = vmatprep.subr.mxu0 0.0
    %3574 = vmatpush2.msra.mxu0 0.0
    %3575 = vmatprep.subr.mxu0 0.0
    %3576 = vmatpush2.msra.mxu0 0.0
    %3577 = vmatprep.subr.mxu0 0.0
    %3578 = vmatpush2.msra.mxu0 0.0
    %3579 = vmatprep.subr.mxu0 0.0
    %3580 = vmatpush2.msra.mxu0 0.0
    %3581 = vmatprep.subr.mxu0 0.0
    %3582 = vmatpush2.msra.mxu0 0.0
    %3583 = vmatprep.subr.mxu0 0.0
    %3584 = vmatpush2.msra.mxu0 0.0
    %3585 = vmatprep.subr.mxu0 0.0
    %3586 = vmatpush2.msra.mxu0 0.0
    %3587 = vmatprep.subr.mxu0 0.0
    %3588 = vmatpush2.msra.mxu0 0.0
    %3589 = vmatprep.mubr.f32.mxu0 0.0
    %3590 = vmatmul.mubr.f32.gmra.mxu0 %v3451
    %v3591 = vpop.f32.mrf.mxu0
    %v3592 = vadd.f32 %v2222, %v3591
    %v3593 = vpop.f32.mrf.mxu0
    %v3594 = vadd.f32 %v2226, %v3593
    %3595 = vdwg.mxu0
    %3596 = vmatprep.subr.mxu0 %v2204
    %3597 = vmatpush1.msra.mxu0 %v2203
    %3598 = vmatprep.subr.mxu0 %v2198
    %3599 = vmatpush1.msra.mxu0 %v2197
    %3600 = vmatprep.subr.mxu0 %v2192
    %3601 = vmatpush1.msra.mxu0 %v2191
    %3602 = vmatprep.subr.mxu0 %v2186
    %3603 = vmatpush1.msra.mxu0 %v2185
    %3604 = vmatprep.subr.mxu0 %v2180
    %3605 = vmatpush1.msra.mxu0 %v2179
    %3606 = vmatprep.subr.mxu0 %v2174
    %3607 = vmatpush1.msra.mxu0 %v2173
    %3608 = vmatprep.subr.mxu0 %v2168
    %3609 = vmatpush1.msra.mxu0 %v2167
    %3610 = vmatprep.subr.mxu0 %v2162
    %3611 = vmatpush1.msra.mxu0 %v2161
    %3612 = vmatprep.subr.mxu0 %v2156
    %3613 = vmatpush1.msra.mxu0 %v2155
    %3614 = vmatprep.subr.mxu0 %v2150
    %3615 = vmatpush1.msra.mxu0 %v2149
    %3616 = vmatprep.subr.mxu0 %v2144
    %3617 = vmatpush1.msra.mxu0 %v2143
    %3618 = vmatprep.subr.mxu0 %v2138
    %3619 = vmatpush1.msra.mxu0 %v2137
    %3620 = vmatprep.subr.mxu0 %v2132
    %3621 = vmatpush1.msra.mxu0 %v2131
    %3622 = vmatprep.subr.mxu0 %v2126
    %3623 = vmatpush1.msra.mxu0 %v2125
    %3624 = vmatprep.subr.mxu0 %v2120
    %3625 = vmatpush1.msra.mxu0 %v2119
    %3626 = vmatprep.subr.mxu0 %v2114
    %3627 = vmatpush1.msra.mxu0 %v2113
    %3628 = vmatprep.subr.mxu0 0.0
    %3629 = vmatpush2.msra.mxu0 0.0
    %3630 = vmatprep.subr.mxu0 0.0
    %3631 = vmatpush2.msra.mxu0 0.0
    %3632 = vmatprep.subr.mxu0 0.0
    %3633 = vmatpush2.msra.mxu0 0.0
    %3634 = vmatprep.subr.mxu0 0.0
    %3635 = vmatpush2.msra.mxu0 0.0
    %3636 = vmatprep.subr.mxu0 0.0
    %3637 = vmatpush2.msra.mxu0 0.0
    %3638 = vmatprep.subr.mxu0 0.0
    %3639 = vmatpush2.msra.mxu0 0.0
    %3640 = vmatprep.subr.mxu0 0.0
    %3641 = vmatpush2.msra.mxu0 0.0
    %3642 = vmatprep.subr.mxu0 0.0
    %3643 = vmatpush2.msra.mxu0 0.0
    %3644 = vmatprep.subr.mxu0 0.0
    %3645 = vmatpush2.msra.mxu0 0.0
    %3646 = vmatprep.subr.mxu0 0.0
    %3647 = vmatpush2.msra.mxu0 0.0
    %3648 = vmatprep.subr.mxu0 0.0
    %3649 = vmatpush2.msra.mxu0 0.0
    %3650 = vmatprep.subr.mxu0 0.0
    %3651 = vmatpush2.msra.mxu0 0.0
    %3652 = vmatprep.subr.mxu0 0.0
    %3653 = vmatpush2.msra.mxu0 0.0
    %3654 = vmatprep.subr.mxu0 0.0
    %3655 = vmatpush2.msra.mxu0 0.0
    %3656 = vmatprep.subr.mxu0 0.0
    %3657 = vmatpush2.msra.mxu0 0.0
    %3658 = vmatprep.subr.mxu0 0.0
    %3659 = vmatpush2.msra.mxu0 0.0
    %3660 = vmatprep.mubr.f32.mxu0 0.0
    %3661 = vmatmul.mubr.f32.gmra.mxu0 %v3451
    %v3662 = vpop.f32.mrf.mxu0
    %v3663 = vadd.f32 %v2230, %v3662
    %v3664 = vpop.f32.mrf.mxu0
    %v3665 = vadd.f32 %v2234, %v3664
    %3666 = vdwg.mxu0
    %v3667 = vsel %vm2208, %v3521, %v3594
    %v3668 = vsel %vm2208, %v3523, %v3663
    %v3669 = vsel %vm2208, %v3592, %v3665
    %s3670 = scalar_lea.vmem [#allocation2], 120
    %v3671 = vld [vmem:[%s3670] sm:$0xff]
    %v3672 = vld [vmem:[%s3670 + $0x8] sm:$0xff]
    %v3673 = vld [vmem:[%s3670 + $0x10] sm:$0xff]
    %v3674 = vadd.f32 %v3671, %v3667
    %v3675 = vxor.u32 %v3674, 2147483648
    %v3676 = vmul.f32 %v3675, 1.442695
    %v3677 = vpow.pop %v3676
    %v3678 = vadd.f32 %v3677, 1.0
    %v3679 = vrcp.pop %v3678
    %v3680 = vmul.f32 1.0, %v3679
    %v3681 = vadd.f32 %v3672, %v3668
    %v3682 = vxor.u32 %v3681, 2147483648
    %v3683 = vmul.f32 %v3682, 1.442695
    %v3684 = vpow.pop %v3683
    %v3685 = vadd.f32 %v3684, 1.0
    %v3686 = vrcp.pop %v3685
    %v3687 = vmul.f32 1.0, %v3686
    %v3688 = vmul.f32 %v3680, %v3669
    %v3689 = vadd.f32 %v3673, %v3688
    %v3690 = vtanh.pop %v3689
    %v3691 = vsub.f32 1.0, %v3687
    %v3692 = vmul.f32 %v3691, %v3690
    %v3693 = vmul.f32 %v3687, %v3451
    %v3694 = vadd.f32 %v3692, %v3693
    %s3695 = scalar_lea.vmem [#allocation12], 40
    %3696 = vst [vmem:[%s3695] sm:$0xff] %v3694
    %3697 = vmatprep.subr.mxu0 %v2200
    %3698 = vmatpush1.msra.mxu0 %v2199
    %3699 = vmatprep.subr.mxu0 %v2194
    %3700 = vmatpush1.msra.mxu0 %v2193
    %3701 = vmatprep.subr.mxu0 %v2188
    %3702 = vmatpush1.msra.mxu0 %v2187
    %3703 = vmatprep.subr.mxu0 %v2182
    %3704 = vmatpush1.msra.mxu0 %v2181
    %3705 = vmatprep.subr.mxu0 %v2176
    %3706 = vmatpush1.msra.mxu0 %v2175
    %3707 = vmatprep.subr.mxu0 %v2170
    %3708 = vmatpush1.msra.mxu0 %v2169
    %3709 = vmatprep.subr.mxu0 %v2164
    %3710 = vmatpush1.msra.mxu0 %v2163
    %3711 = vmatprep.subr.mxu0 %v2158
    %3712 = vmatpush1.msra.mxu0 %v2157
    %3713 = vmatprep.subr.mxu0 %v2152
    %3714 = vmatpush1.msra.mxu0 %v2151
    %3715 = vmatprep.subr.mxu0 %v2146
    %3716 = vmatpush1.msra.mxu0 %v2145
    %3717 = vmatprep.subr.mxu0 %v2140
    %3718 = vmatpush1.msra.mxu0 %v2139
    %3719 = vmatprep.subr.mxu0 %v2134
    %3720 = vmatpush1.msra.mxu0 %v2133
    %3721 = vmatprep.subr.mxu0 %v2128
    %3722 = vmatpush1.msra.mxu0 %v2127
    %3723 = vmatprep.subr.mxu0 %v2122
    %3724 = vmatpush1.msra.mxu0 %v2121
    %3725 = vmatprep.subr.mxu0 %v2116
    %3726 = vmatpush1.msra.mxu0 %v2115
    %3727 = vmatprep.subr.mxu0 %v2110
    %3728 = vmatpush1.msra.mxu0 %v2109
    %3729 = vmatprep.subr.mxu0 0.0
    %3730 = vmatpush2.msra.mxu0 0.0
    %3731 = vmatprep.subr.mxu0 0.0
    %3732 = vmatpush2.msra.mxu0 0.0
    %3733 = vmatprep.subr.mxu0 0.0
    %3734 = vmatpush2.msra.mxu0 0.0
    %3735 = vmatprep.subr.mxu0 0.0
    %3736 = vmatpush2.msra.mxu0 0.0
    %3737 = vmatprep.subr.mxu0 0.0
    %3738 = vmatpush2.msra.mxu0 0.0
    %3739 = vmatprep.subr.mxu0 0.0
    %3740 = vmatpush2.msra.mxu0 0.0
    %3741 = vmatprep.subr.mxu0 0.0
    %3742 = vmatpush2.msra.mxu0 0.0
    %3743 = vmatprep.subr.mxu0 0.0
    %3744 = vmatpush2.msra.mxu0 0.0
    %3745 = vmatprep.subr.mxu0 0.0
    %3746 = vmatpush2.msra.mxu0 0.0
    %3747 = vmatprep.subr.mxu0 0.0
    %3748 = vmatpush2.msra.mxu0 0.0
    %3749 = vmatprep.subr.mxu0 0.0
    %3750 = vmatpush2.msra.mxu0 0.0
    %3751 = vmatprep.subr.mxu0 0.0
    %3752 = vmatpush2.msra.mxu0 0.0
    %3753 = vmatprep.subr.mxu0 0.0
    %3754 = vmatpush2.msra.mxu0 0.0
    %3755 = vmatprep.subr.mxu0 0.0
    %3756 = vmatpush2.msra.mxu0 0.0
    %3757 = vmatprep.subr.mxu0 0.0
    %3758 = vmatpush2.msra.mxu0 0.0
    %3759 = vmatprep.subr.mxu0 0.0
    %3760 = vmatpush2.msra.mxu0 0.0
    %3761 = vmatprep.mubr.f32.mxu0 0.0
    %3762 = vmatmul.mubr.f32.gmra.mxu0 %v3694
    %v3763 = vpop.f32.mrf.mxu0
    %v3764 = vadd.f32 %v2214, %v3763
    %v3765 = vpop.f32.mrf.mxu0
    %v3766 = vadd.f32 %v2218, %v3765
    %3767 = vdwg.mxu0
    %3768 = vmatprep.subr.mxu0 %v2202
    %3769 = vmatpush1.msra.mxu0 %v2201
    %3770 = vmatprep.subr.mxu0 %v2196
    %3771 = vmatpush1.msra.mxu0 %v2195
    %3772 = vmatprep.subr.mxu0 %v2190
    %3773 = vmatpush1.msra.mxu0 %v2189
    %3774 = vmatprep.subr.mxu0 %v2184
    %3775 = vmatpush1.msra.mxu0 %v2183
    %3776 = vmatprep.subr.mxu0 %v2178
    %3777 = vmatpush1.msra.mxu0 %v2177
    %3778 = vmatprep.subr.mxu0 %v2172
    %3779 = vmatpush1.msra.mxu0 %v2171
    %3780 = vmatprep.subr.mxu0 %v2166
    %3781 = vmatpush1.msra.mxu0 %v2165
    %3782 = vmatprep.subr.mxu0 %v2160
    %3783 = vmatpush1.msra.mxu0 %v2159
    %3784 = vmatprep.subr.mxu0 %v2154
    %3785 = vmatpush1.msra.mxu0 %v2153
    %3786 = vmatprep.subr.mxu0 %v2148
    %3787 = vmatpush1.msra.mxu0 %v2147
    %3788 = vmatprep.subr.mxu0 %v2142
    %3789 = vmatpush1.msra.mxu0 %v2141
    %3790 = vmatprep.subr.mxu0 %v2136
    %3791 = vmatpush1.msra.mxu0 %v2135
    %3792 = vmatprep.subr.mxu0 %v2130
    %3793 = vmatpush1.msra.mxu0 %v2129
    %3794 = vmatprep.subr.mxu0 %v2124
    %3795 = vmatpush1.msra.mxu0 %v2123
    %3796 = vmatprep.subr.mxu0 %v2118
    %3797 = vmatpush1.msra.mxu0 %v2117
    %3798 = vmatprep.subr.mxu0 %v2112
    %3799 = vmatpush1.msra.mxu0 %v2111
    %3800 = vmatprep.subr.mxu0 0.0
    %3801 = vmatpush2.msra.mxu0 0.0
    %3802 = vmatprep.subr.mxu0 0.0
    %3803 = vmatpush2.msra.mxu0 0.0
    %3804 = vmatprep.subr.mxu0 0.0
    %3805 = vmatpush2.msra.mxu0 0.0
    %3806 = vmatprep.subr.mxu0 0.0
    %3807 = vmatpush2.msra.mxu0 0.0
    %3808 = vmatprep.subr.mxu0 0.0
    %3809 = vmatpush2.msra.mxu0 0.0
    %3810 = vmatprep.subr.mxu0 0.0
    %3811 = vmatpush2.msra.mxu0 0.0
    %3812 = vmatprep.subr.mxu0 0.0
    %3813 = vmatpush2.msra.mxu0 0.0
    %3814 = vmatprep.subr.mxu0 0.0
    %3815 = vmatpush2.msra.mxu0 0.0
    %3816 = vmatprep.subr.mxu0 0.0
    %3817 = vmatpush2.msra.mxu0 0.0
    %3818 = vmatprep.subr.mxu0 0.0
    %3819 = vmatpush2.msra.mxu0 0.0
    %3820 = vmatprep.subr.mxu0 0.0
    %3821 = vmatpush2.msra.mxu0 0.0
    %3822 = vmatprep.subr.mxu0 0.0
    %3823 = vmatpush2.msra.mxu0 0.0
    %3824 = vmatprep.subr.mxu0 0.0
    %3825 = vmatpush2.msra.mxu0 0.0
    %3826 = vmatprep.subr.mxu0 0.0
    %3827 = vmatpush2.msra.mxu0 0.0
    %3828 = vmatprep.subr.mxu0 0.0
    %3829 = vmatpush2.msra.mxu0 0.0
    %3830 = vmatprep.subr.mxu0 0.0
    %3831 = vmatpush2.msra.mxu0 0.0
    %3832 = vmatprep.mubr.f32.mxu0 0.0
    %3833 = vmatmul.mubr.f32.gmra.mxu0 %v3694
    %v3834 = vpop.f32.mrf.mxu0
    %v3835 = vadd.f32 %v2222, %v3834
    %v3836 = vpop.f32.mrf.mxu0
    %v3837 = vadd.f32 %v2226, %v3836
    %3838 = vdwg.mxu0
    %3839 = vmatprep.subr.mxu0 %v2204
    %3840 = vmatpush1.msra.mxu0 %v2203
    %3841 = vmatprep.subr.mxu0 %v2198
    %3842 = vmatpush1.msra.mxu0 %v2197
    %3843 = vmatprep.subr.mxu0 %v2192
    %3844 = vmatpush1.msra.mxu0 %v2191
    %3845 = vmatprep.subr.mxu0 %v2186
    %3846 = vmatpush1.msra.mxu0 %v2185
    %3847 = vmatprep.subr.mxu0 %v2180
    %3848 = vmatpush1.msra.mxu0 %v2179
    %3849 = vmatprep.subr.mxu0 %v2174
    %3850 = vmatpush1.msra.mxu0 %v2173
    %3851 = vmatprep.subr.mxu0 %v2168
    %3852 = vmatpush1.msra.mxu0 %v2167
    %3853 = vmatprep.subr.mxu0 %v2162
    %3854 = vmatpush1.msra.mxu0 %v2161
    %3855 = vmatprep.subr.mxu0 %v2156
    %3856 = vmatpush1.msra.mxu0 %v2155
    %3857 = vmatprep.subr.mxu0 %v2150
    %3858 = vmatpush1.msra.mxu0 %v2149
    %3859 = vmatprep.subr.mxu0 %v2144
    %3860 = vmatpush1.msra.mxu0 %v2143
    %3861 = vmatprep.subr.mxu0 %v2138
    %3862 = vmatpush1.msra.mxu0 %v2137
    %3863 = vmatprep.subr.mxu0 %v2132
    %3864 = vmatpush1.msra.mxu0 %v2131
    %3865 = vmatprep.subr.mxu0 %v2126
    %3866 = vmatpush1.msra.mxu0 %v2125
    %3867 = vmatprep.subr.mxu0 %v2120
    %3868 = vmatpush1.msra.mxu0 %v2119
    %3869 = vmatprep.subr.mxu0 %v2114
    %3870 = vmatpush1.msra.mxu0 %v2113
    %3871 = vmatprep.subr.mxu0 0.0
    %3872 = vmatpush2.msra.mxu0 0.0
    %3873 = vmatprep.subr.mxu0 0.0
    %3874 = vmatpush2.msra.mxu0 0.0
    %3875 = vmatprep.subr.mxu0 0.0
    %3876 = vmatpush2.msra.mxu0 0.0
    %3877 = vmatprep.subr.mxu0 0.0
    %3878 = vmatpush2.msra.mxu0 0.0
    %3879 = vmatprep.subr.mxu0 0.0
    %3880 = vmatpush2.msra.mxu0 0.0
    %3881 = vmatprep.subr.mxu0 0.0
    %3882 = vmatpush2.msra.mxu0 0.0
    %3883 = vmatprep.subr.mxu0 0.0
    %3884 = vmatpush2.msra.mxu0 0.0
    %3885 = vmatprep.subr.mxu0 0.0
    %3886 = vmatpush2.msra.mxu0 0.0
    %3887 = vmatprep.subr.mxu0 0.0
    %3888 = vmatpush2.msra.mxu0 0.0
    %3889 = vmatprep.subr.mxu0 0.0
    %3890 = vmatpush2.msra.mxu0 0.0
    %3891 = vmatprep.subr.mxu0 0.0
    %3892 = vmatpush2.msra.mxu0 0.0
    %3893 = vmatprep.subr.mxu0 0.0
    %3894 = vmatpush2.msra.mxu0 0.0
    %3895 = vmatprep.subr.mxu0 0.0
    %3896 = vmatpush2.msra.mxu0 0.0
    %3897 = vmatprep.subr.mxu0 0.0
    %3898 = vmatpush2.msra.mxu0 0.0
    %3899 = vmatprep.subr.mxu0 0.0
    %3900 = vmatpush2.msra.mxu0 0.0
    %3901 = vmatprep.subr.mxu0 0.0
    %3902 = vmatpush2.msra.mxu0 0.0
    %3903 = vmatprep.mubr.f32.mxu0 0.0
    %3904 = vmatmul.mubr.f32.gmra.mxu0 %v3694
    %v3905 = vpop.f32.mrf.mxu0
    %v3906 = vadd.f32 %v2230, %v3905
    %v3907 = vpop.f32.mrf.mxu0
    %v3908 = vadd.f32 %v2234, %v3907
    %3909 = vdwg.mxu0
    %v3910 = vsel %vm2208, %v3764, %v3837
    %v3911 = vsel %vm2208, %v3766, %v3906
    %v3912 = vsel %vm2208, %v3835, %v3908
    %s3913 = scalar_lea.vmem [#allocation2], 144
    %v3914 = vld [vmem:[%s3913] sm:$0xff]
    %v3915 = vld [vmem:[%s3913 + $0x8] sm:$0xff]
    %v3916 = vld [vmem:[%s3913 + $0x10] sm:$0xff]
    %v3917 = vadd.f32 %v3914, %v3910
    %v3918 = vxor.u32 %v3917, 2147483648
    %v3919 = vmul.f32 %v3918, 1.442695
    %v3920 = vpow.pop %v3919
    %v3921 = vadd.f32 %v3920, 1.0
    %v3922 = vrcp.pop %v3921
    %v3923 = vmul.f32 1.0, %v3922
    %v3924 = vadd.f32 %v3915, %v3911
    %v3925 = vxor.u32 %v3924, 2147483648
    %v3926 = vmul.f32 %v3925, 1.442695
    %v3927 = vpow.pop %v3926
    %v3928 = vadd.f32 %v3927, 1.0
    %v3929 = vrcp.pop %v3928
    %v3930 = vmul.f32 1.0, %v3929
    %v3931 = vmul.f32 %v3923, %v3912
    %v3932 = vadd.f32 %v3916, %v3931
    %v3933 = vtanh.pop %v3932
    %v3934 = vsub.f32 1.0, %v3930
    %v3935 = vmul.f32 %v3934, %v3933
    %v3936 = vmul.f32 %v3930, %v3694
    %v3937 = vadd.f32 %v3935, %v3936
    %s3938 = scalar_lea.vmem [#allocation12], 48
    %3939 = vst [vmem:[%s3938] sm:$0xff] %v3937
    %3940 = vmatprep.subr.mxu0 %v2200
    %3941 = vmatpush1.msra.mxu0 %v2199
    %3942 = vmatprep.subr.mxu0 %v2194
    %3943 = vmatpush1.msra.mxu0 %v2193
    %3944 = vmatprep.subr.mxu0 %v2188
    %3945 = vmatpush1.msra.mxu0 %v2187
    %3946 = vmatprep.subr.mxu0 %v2182
    %3947 = vmatpush1.msra.mxu0 %v2181
    %3948 = vmatprep.subr.mxu0 %v2176
    %3949 = vmatpush1.msra.mxu0 %v2175
    %3950 = vmatprep.subr.mxu0 %v2170
    %3951 = vmatpush1.msra.mxu0 %v2169
    %3952 = vmatprep.subr.mxu0 %v2164
    %3953 = vmatpush1.msra.mxu0 %v2163
    %3954 = vmatprep.subr.mxu0 %v2158
    %3955 = vmatpush1.msra.mxu0 %v2157
    %3956 = vmatprep.subr.mxu0 %v2152
    %3957 = vmatpush1.msra.mxu0 %v2151
    %3958 = vmatprep.subr.mxu0 %v2146
    %3959 = vmatpush1.msra.mxu0 %v2145
    %3960 = vmatprep.subr.mxu0 %v2140
    %3961 = vmatpush1.msra.mxu0 %v2139
    %3962 = vmatprep.subr.mxu0 %v2134
    %3963 = vmatpush1.msra.mxu0 %v2133
    %3964 = vmatprep.subr.mxu0 %v2128
    %3965 = vmatpush1.msra.mxu0 %v2127
    %3966 = vmatprep.subr.mxu0 %v2122
    %3967 = vmatpush1.msra.mxu0 %v2121
    %3968 = vmatprep.subr.mxu0 %v2116
    %3969 = vmatpush1.msra.mxu0 %v2115
    %3970 = vmatprep.subr.mxu0 %v2110
    %3971 = vmatpush1.msra.mxu0 %v2109
    %3972 = vmatprep.subr.mxu0 0.0
    %3973 = vmatpush2.msra.mxu0 0.0
    %3974 = vmatprep.subr.mxu0 0.0
    %3975 = vmatpush2.msra.mxu0 0.0
    %3976 = vmatprep.subr.mxu0 0.0
    %3977 = vmatpush2.msra.mxu0 0.0
    %3978 = vmatprep.subr.mxu0 0.0
    %3979 = vmatpush2.msra.mxu0 0.0
    %3980 = vmatprep.subr.mxu0 0.0
    %3981 = vmatpush2.msra.mxu0 0.0
    %3982 = vmatprep.subr.mxu0 0.0
    %3983 = vmatpush2.msra.mxu0 0.0
    %3984 = vmatprep.subr.mxu0 0.0
    %3985 = vmatpush2.msra.mxu0 0.0
    %3986 = vmatprep.subr.mxu0 0.0
    %3987 = vmatpush2.msra.mxu0 0.0
    %3988 = vmatprep.subr.mxu0 0.0
    %3989 = vmatpush2.msra.mxu0 0.0
    %3990 = vmatprep.subr.mxu0 0.0
    %3991 = vmatpush2.msra.mxu0 0.0
    %3992 = vmatprep.subr.mxu0 0.0
    %3993 = vmatpush2.msra.mxu0 0.0
    %3994 = vmatprep.subr.mxu0 0.0
    %3995 = vmatpush2.msra.mxu0 0.0
    %3996 = vmatprep.subr.mxu0 0.0
    %3997 = vmatpush2.msra.mxu0 0.0
    %3998 = vmatprep.subr.mxu0 0.0
    %3999 = vmatpush2.msra.mxu0 0.0
    %4000 = vmatprep.subr.mxu0 0.0
    %4001 = vmatpush2.msra.mxu0 0.0
    %4002 = vmatprep.subr.mxu0 0.0
    %4003 = vmatpush2.msra.mxu0 0.0
    %4004 = vmatprep.mubr.f32.mxu0 0.0
    %4005 = vmatmul.mubr.f32.gmra.mxu0 %v3937
    %v4006 = vpop.f32.mrf.mxu0
    %v4007 = vadd.f32 %v2214, %v4006
    %v4008 = vpop.f32.mrf.mxu0
    %v4009 = vadd.f32 %v2218, %v4008
    %4010 = vdwg.mxu0
    %4011 = vmatprep.subr.mxu0 %v2202
    %4012 = vmatpush1.msra.mxu0 %v2201
    %4013 = vmatprep.subr.mxu0 %v2196
    %4014 = vmatpush1.msra.mxu0 %v2195
    %4015 = vmatprep.subr.mxu0 %v2190
    %4016 = vmatpush1.msra.mxu0 %v2189
    %4017 = vmatprep.subr.mxu0 %v2184
    %4018 = vmatpush1.msra.mxu0 %v2183
    %4019 = vmatprep.subr.mxu0 %v2178
    %4020 = vmatpush1.msra.mxu0 %v2177
    %4021 = vmatprep.subr.mxu0 %v2172
    %4022 = vmatpush1.msra.mxu0 %v2171
    %4023 = vmatprep.subr.mxu0 %v2166
    %4024 = vmatpush1.msra.mxu0 %v2165
    %4025 = vmatprep.subr.mxu0 %v2160
    %4026 = vmatpush1.msra.mxu0 %v2159
    %4027 = vmatprep.subr.mxu0 %v2154
    %4028 = vmatpush1.msra.mxu0 %v2153
    %4029 = vmatprep.subr.mxu0 %v2148
    %4030 = vmatpush1.msra.mxu0 %v2147
    %4031 = vmatprep.subr.mxu0 %v2142
    %4032 = vmatpush1.msra.mxu0 %v2141
    %4033 = vmatprep.subr.mxu0 %v2136
    %4034 = vmatpush1.msra.mxu0 %v2135
    %4035 = vmatprep.subr.mxu0 %v2130
    %4036 = vmatpush1.msra.mxu0 %v2129
    %4037 = vmatprep.subr.mxu0 %v2124
    %4038 = vmatpush1.msra.mxu0 %v2123
    %4039 = vmatprep.subr.mxu0 %v2118
    %4040 = vmatpush1.msra.mxu0 %v2117
    %4041 = vmatprep.subr.mxu0 %v2112
    %4042 = vmatpush1.msra.mxu0 %v2111
    %4043 = vmatprep.subr.mxu0 0.0
    %4044 = vmatpush2.msra.mxu0 0.0
    %4045 = vmatprep.subr.mxu0 0.0
    %4046 = vmatpush2.msra.mxu0 0.0
    %4047 = vmatprep.subr.mxu0 0.0
    %4048 = vmatpush2.msra.mxu0 0.0
    %4049 = vmatprep.subr.mxu0 0.0
    %4050 = vmatpush2.msra.mxu0 0.0
    %4051 = vmatprep.subr.mxu0 0.0
    %4052 = vmatpush2.msra.mxu0 0.0
    %4053 = vmatprep.subr.mxu0 0.0
    %4054 = vmatpush2.msra.mxu0 0.0
    %4055 = vmatprep.subr.mxu0 0.0
    %4056 = vmatpush2.msra.mxu0 0.0
    %4057 = vmatprep.subr.mxu0 0.0
    %4058 = vmatpush2.msra.mxu0 0.0
    %4059 = vmatprep.subr.mxu0 0.0
    %4060 = vmatpush2.msra.mxu0 0.0
    %4061 = vmatprep.subr.mxu0 0.0
    %4062 = vmatpush2.msra.mxu0 0.0
    %4063 = vmatprep.subr.mxu0 0.0
    %4064 = vmatpush2.msra.mxu0 0.0
    %4065 = vmatprep.subr.mxu0 0.0
    %4066 = vmatpush2.msra.mxu0 0.0
    %4067 = vmatprep.subr.mxu0 0.0
    %4068 = vmatpush2.msra.mxu0 0.0
    %4069 = vmatprep.subr.mxu0 0.0
    %4070 = vmatpush2.msra.mxu0 0.0
    %4071 = vmatprep.subr.mxu0 0.0
    %4072 = vmatpush2.msra.mxu0 0.0
    %4073 = vmatprep.subr.mxu0 0.0
    %4074 = vmatpush2.msra.mxu0 0.0
    %4075 = vmatprep.mubr.f32.mxu0 0.0
    %4076 = vmatmul.mubr.f32.gmra.mxu0 %v3937
    %v4077 = vpop.f32.mrf.mxu0
    %v4078 = vadd.f32 %v2222, %v4077
    %v4079 = vpop.f32.mrf.mxu0
    %v4080 = vadd.f32 %v2226, %v4079
    %4081 = vdwg.mxu0
    %4082 = vmatprep.subr.mxu0 %v2204
    %4083 = vmatpush1.msra.mxu0 %v2203
    %4084 = vmatprep.subr.mxu0 %v2198
    %4085 = vmatpush1.msra.mxu0 %v2197
    %4086 = vmatprep.subr.mxu0 %v2192
    %4087 = vmatpush1.msra.mxu0 %v2191
    %4088 = vmatprep.subr.mxu0 %v2186
    %4089 = vmatpush1.msra.mxu0 %v2185
    %4090 = vmatprep.subr.mxu0 %v2180
    %4091 = vmatpush1.msra.mxu0 %v2179
    %4092 = vmatprep.subr.mxu0 %v2174
    %4093 = vmatpush1.msra.mxu0 %v2173
    %4094 = vmatprep.subr.mxu0 %v2168
    %4095 = vmatpush1.msra.mxu0 %v2167
    %4096 = vmatprep.subr.mxu0 %v2162
    %4097 = vmatpush1.msra.mxu0 %v2161
    %4098 = vmatprep.subr.mxu0 %v2156
    %4099 = vmatpush1.msra.mxu0 %v2155
    %4100 = vmatprep.subr.mxu0 %v2150
    %4101 = vmatpush1.msra.mxu0 %v2149
    %4102 = vmatprep.subr.mxu0 %v2144
    %4103 = vmatpush1.msra.mxu0 %v2143
    %4104 = vmatprep.subr.mxu0 %v2138
    %4105 = vmatpush1.msra.mxu0 %v2137
    %4106 = vmatprep.subr.mxu0 %v2132
    %4107 = vmatpush1.msra.mxu0 %v2131
    %4108 = vmatprep.subr.mxu0 %v2126
    %4109 = vmatpush1.msra.mxu0 %v2125
    %4110 = vmatprep.subr.mxu0 %v2120
    %4111 = vmatpush1.msra.mxu0 %v2119
    %4112 = vmatprep.subr.mxu0 %v2114
    %4113 = vmatpush1.msra.mxu0 %v2113
    %4114 = vmatprep.subr.mxu0 0.0
    %4115 = vmatpush2.msra.mxu0 0.0
    %4116 = vmatprep.subr.mxu0 0.0
    %4117 = vmatpush2.msra.mxu0 0.0
    %4118 = vmatprep.subr.mxu0 0.0
    %4119 = vmatpush2.msra.mxu0 0.0
    %4120 = vmatprep.subr.mxu0 0.0
    %4121 = vmatpush2.msra.mxu0 0.0
    %4122 = vmatprep.subr.mxu0 0.0
    %4123 = vmatpush2.msra.mxu0 0.0
    %4124 = vmatprep.subr.mxu0 0.0
    %4125 = vmatpush2.msra.mxu0 0.0
    %4126 = vmatprep.subr.mxu0 0.0
    %4127 = vmatpush2.msra.mxu0 0.0
    %4128 = vmatprep.subr.mxu0 0.0
    %4129 = vmatpush2.msra.mxu0 0.0
    %4130 = vmatprep.subr.mxu0 0.0
    %4131 = vmatpush2.msra.mxu0 0.0
    %4132 = vmatprep.subr.mxu0 0.0
    %4133 = vmatpush2.msra.mxu0 0.0
    %4134 = vmatprep.subr.mxu0 0.0
    %4135 = vmatpush2.msra.mxu0 0.0
    %4136 = vmatprep.subr.mxu0 0.0
    %4137 = vmatpush2.msra.mxu0 0.0
    %4138 = vmatprep.subr.mxu0 0.0
    %4139 = vmatpush2.msra.mxu0 0.0
    %4140 = vmatprep.subr.mxu0 0.0
    %4141 = vmatpush2.msra.mxu0 0.0
    %4142 = vmatprep.subr.mxu0 0.0
    %4143 = vmatpush2.msra.mxu0 0.0
    %4144 = vmatprep.subr.mxu0 0.0
    %4145 = vmatpush2.msra.mxu0 0.0
    %4146 = vmatprep.mubr.f32.mxu0 0.0
    %4147 = vmatmul.mubr.f32.gmra.mxu0 %v3937
    %v4148 = vpop.f32.mrf.mxu0
    %v4149 = vadd.f32 %v2230, %v4148
    %v4150 = vpop.f32.mrf.mxu0
    %v4151 = vadd.f32 %v2234, %v4150
    %4152 = vdwg.mxu0
    %v4153 = vsel %vm2208, %v4007, %v4080
    %v4154 = vsel %vm2208, %v4009, %v4149
    %v4155 = vsel %vm2208, %v4078, %v4151
    %s4156 = scalar_lea.vmem [#allocation2], 168
    %v4157 = vld [vmem:[%s4156] sm:$0xff]
    %v4158 = vld [vmem:[%s4156 + $0x8] sm:$0xff]
    %v4159 = vld [vmem:[%s4156 + $0x10] sm:$0xff]
    %v4160 = vadd.f32 %v4157, %v4153
    %v4161 = vxor.u32 %v4160, 2147483648
    %v4162 = vmul.f32 %v4161, 1.442695
    %v4163 = vpow.pop %v4162
    %v4164 = vadd.f32 %v4163, 1.0
    %v4165 = vrcp.pop %v4164
    %v4166 = vmul.f32 1.0, %v4165
    %v4167 = vadd.f32 %v4158, %v4154
    %v4168 = vxor.u32 %v4167, 2147483648
    %v4169 = vmul.f32 %v4168, 1.442695
    %v4170 = vpow.pop %v4169
    %v4171 = vadd.f32 %v4170, 1.0
    %v4172 = vrcp.pop %v4171
    %v4173 = vmul.f32 1.0, %v4172
    %v4174 = vmul.f32 %v4166, %v4155
    %v4175 = vadd.f32 %v4159, %v4174
    %v4176 = vtanh.pop %v4175
    %v4177 = vsub.f32 1.0, %v4173
    %v4178 = vmul.f32 %v4177, %v4176
    %v4179 = vmul.f32 %v4173, %v3937
    %v4180 = vadd.f32 %v4178, %v4179
    %s4181 = scalar_lea.vmem [#allocation12], 56
    %4182 = vst [vmem:[%s4181] sm:$0xff] %v4180
    %4183 = vst [vmem:[#allocation13] sm:$0xff] %v4180
    // Predicated region
    $region46: #{tpu_custom_call.1} parent=1 // pred_check
      _
    $region47: #{tpu_custom_call.1} parent=1 // pred_check_branch
      %4185 = sbr.rel (0) target = $region49
    $region48: #{tpu_custom_call.1} parent=1 // pred_region
      %s4187 = ssub.s32 1024, 1024
      %4188 = vsyncadd [#allocation5], %s4187
      %s4189 = sshll.u32 [#allocation12], 4
      %s4190 = int_to_ptr.vmem [resolvable:$true] %s4189
      %4195 = dma.vmem_to_hbm [thread:$0]  %s4190, 1024, %s6, [#allocation5], 128, 128, 8
    $region49: #{tpu_custom_call.1} parent=1 // pred_fallthru
      _
    // Predicated region
    $region50: #{tpu_custom_call.1} parent=1 // pred_check
      _
    $region51: #{tpu_custom_call.1} parent=1 // pred_check_branch
      %4197 = sbr.rel (0) target = $region53
    $region52: #{tpu_custom_call.1} parent=1 // pred_region
      %s4199 = ssub.s32 128, 128
      %4200 = vsyncadd [#allocation14], %s4199
      %s4202 = sshll.u32 [#allocation13], 4
      %s4203 = int_to_ptr.vmem [resolvable:$true] %s4202
      %4205 = dma.vmem_to_hbm [thread:$0]  %s4203, 128, %s7, [#allocation14]
    $region53: #{tpu_custom_call.1} parent=1 // pred_fallthru
      _
    // Predicated region
    $region54: #{tpu_custom_call.1} parent=1 // pred_check
      _
    $region55: #{tpu_custom_call.1} parent=1 // pred_check_branch
      %4207 = sbr.rel (0) target = $region57
    $region56: #{tpu_custom_call.1} parent=1 // pred_region
      %4208 = dma.done [#allocation5], 1024
    $region57: #{tpu_custom_call.1} parent=1 // pred_fallthru
      _
    // Predicated region
    $region58: #{tpu_custom_call.1} parent=1 // pred_check
      _
    $region59: #{tpu_custom_call.1} parent=1 // pred_check_branch
      %4210 = sbr.rel (0) target = $region61
    $region60: #{tpu_custom_call.1} parent=1 // pred_region
      %4211 = dma.done [#allocation14], 128
    $region61: #{tpu_custom_call.1} parent=1 // pred_fallthru
      _
    %4212 = vsyncpa [#allocation4], 1
    %4213 = vsyncpa [#allocation7], 1
    %4214 = vsyncpa [#allocation10], 1
    %4215 = vsyncpa [#allocation5], 1
    %4216 = vsyncpa [#allocation14], 1

</llo_original>
